<compile_context>
chip_gen: v7x
topology: tpu7x:2x2x1
jax: 0.10.0
libtpu: 0.0.40
codegen_flags: <defaults>
</compile_context>

<pallas_src>
import functools

import jax
import jax.numpy as jnp
from jax import lax
from jax.experimental import pallas as pl
from jax.experimental.pallas import tpu as pltpu


def _deform_kernel(xr_ref, p_ref, wf_ref, fold_ref, out_ref, m_ref,
                   *, Hp, Wp, C, Cpad, ks):
    """One (batch, HW-tile) grid step.

    xr_ref  : (1, C*Wp, Hp)     bf16  padded input, xr[c*Wp + w, r] = x_pad[c, r, w]
    p_ref   : (1, 2N, THW)      f32   sampling coords (row coords first N, col coords last N)
    wf_ref  : (OUTC, N*Cpad)    bf16  conv weight at natural size, col = n*Cpad + c
    fold_ref: (Cpad, C*Wp)      f32   block-ones fold matrix, fold[c, c*Wp + w] = 1 (c < C)
    out_ref : (1, OUTC, THW)
    m_ref   : (N*Cpad, THW)     bf16  scratch: per-tap, per-channel sampled values
    """
    N = ks * ks
    THW = out_ref.shape[-1]

    xr = xr_ref[0]                                   # (C*Wp, Hp)  bf16
    fold = fold_ref[...]                             # (Cpad, C*Wp) f32

    # tap-independent index maps, hoisted out of the tap loop
    riota = lax.broadcasted_iota(jnp.int32, (Hp, THW), 0)   # row index per sublane
    wiota = lax.broadcasted_iota(jnp.int32, (Wp, THW), 0)   # col index per sublane

    # NOTE: static unroll keeps every slice offset static (unmasked, aligned stores).
    # Each tap's large temporaries are consumed by the fold matmul + scratch store at
    # the end of the tap, so live ranges stay bounded at the tile sizes chosen by the
    # wrapper; a rolled fori_loop is the fallback if bundle dumps show spills at
    # thw >= 1024.
    for n in range(N):
        px = p_ref[0, n:n + 1, :]                    # (1, THW) row coordinate, f32
        py = p_ref[0, N + n:N + n + 1, :]            # (1, THW) col coordinate, f32
        fx = jnp.floor(px)
        fy = jnp.floor(py)

        q_lt_x = jnp.clip(fx, 0.0, Hp - 1.0)
        q_rb_x = jnp.clip(fx + 1.0, 0.0, Hp - 1.0)
        q_lt_y = jnp.clip(fy, 0.0, Wp - 1.0)
        q_rb_y = jnp.clip(fy + 1.0, 0.0, Wp - 1.0)
        pcx = jnp.clip(px, 0.0, Hp - 1.0)
        pcy = jnp.clip(py, 0.0, Wp - 1.0)

        # separable bilinear weights (identical to the PyTorch forward, including the
        # clip-coincidence behavior at the borders)
        wx_lt = 1.0 + (q_lt_x - pcx)
        wx_rb = 1.0 - (q_rb_x - pcx)
        wy_lt = 1.0 + (q_lt_y - pcy)
        wy_rb = 1.0 - (q_rb_y - pcy)

        i_lt_x = q_lt_x.astype(jnp.int32)
        i_rb_x = q_rb_x.astype(jnp.int32)
        i_lt_y = q_lt_y.astype(jnp.int32)
        i_rb_y = q_rb_y.astype(jnp.int32)

        # stage 1: row gather via a small weighted one-hot, contracted on the MXU
        rowsel = (jnp.where(riota == i_lt_x, wx_lt, 0.0)
                  + jnp.where(riota == i_rb_x, wx_rb, 0.0))          # (Hp, THW) f32
        rs = jnp.dot(xr, rowsel.astype(jnp.bfloat16),
                     preferred_element_type=jnp.float32)             # (C*Wp, THW) f32

        # stage 2: column weights built once at (Wp, THW), replicated across channels
        colsel = (jnp.where(wiota == i_lt_y, wy_lt, 0.0)
                  + jnp.where(wiota == i_rb_y, wy_rb, 0.0))          # (Wp, THW) f32
        colsel_full = jnp.concatenate([colsel] * C, axis=0)          # (C*Wp, THW) f32
        prod = rs * colsel_full                                      # (C*Wp, THW) f32

        # stage 3: Wp-fold on the MXU -> (Cpad, THW); rows >= C are exact zeros
        folded = jnp.dot(fold, prod, preferred_element_type=jnp.float32)
        m_ref[n * Cpad:(n + 1) * Cpad, :] = folded.astype(jnp.bfloat16)

    # final conv contraction at natural K = N*Cpad (no Wp inflation)
    out = jnp.dot(wf_ref[...], m_ref[...], preferred_element_type=jnp.float32)
    out_ref[0] = out.astype(out_ref.dtype)                           # lane-dense store


def deform_conv2d_pallas(x, p_conv_w, p_conv_b, conv_w, *, ks=3, padding=1, stride=1):
    """x: (B, C, H, W) NCHW float32.  Returns (B, OUTC, H_out, W_out) NCHW."""
    B, C, H, W = x.shape
    N = ks * ks
    OUTC = conv_w.shape[0]
    Cpad = ((C + 7) // 8) * 8          # 8-sublane-aligned per-tap scratch blocks

    # ---- glue: offset conv (p_conv: 3x3, pad 1, stride=stride), stays in XLA ----
    offset = lax.conv_general_dilated(
        x, p_conv_w, (stride, stride), ((1, 1), (1, 1)),
        dimension_numbers=('NCHW', 'OIHW', 'NCHW')) + p_conv_b[None, :, None, None]
    h, w = offset.shape[2], offset.shape[3]
    HW = h * w
    HW_pad = ((HW + 127) // 128) * 128   # lane-dense output even for odd image sizes

    # ---- glue: zero padding + sampling coordinates p = p_0 + p_n + offset ----
    xp = jnp.pad(x, ((0, 0), (0, 0), (padding, padding), (padding, padding)))
    Hp, Wp = xp.shape[2], xp.shape[3]

    a = jnp.arange(-(ks - 1) // 2, (ks - 1) // 2 + 1, dtype=x.dtype)
    p_n_x = jnp.repeat(a, ks)          # row offsets, n = i*ks + j -> a[i]
    p_n_y = jnp.tile(a, ks)            #                         -> a[j]
    p0x = jnp.arange(1, h * stride + 1, stride, dtype=x.dtype)
    p0y = jnp.arange(1, w * stride + 1, stride, dtype=x.dtype)
    px = p0x[None, None, :, None] + p_n_x[None, :, None, None] + offset[:, :N]
    py = p0y[None, None, None, :] + p_n_y[None, :, None, None] + offset[:, N:]
    p = jnp.concatenate([px, py], axis=1).reshape(B, 2 * N, HW)      # (B, 2N, HW)
    if HW_pad != HW:
        # dummy coordinates (0, 0) are valid samples; padded lanes are sliced off below
        p = jnp.pad(p, ((0, 0), (0, 0), (0, HW_pad - HW)))

    # padded input laid out (C*Wp, Hp) per batch (row k = c*Wp + w)
    xr = jnp.transpose(xp, (0, 1, 3, 2)).reshape(B, C * Wp, Hp).astype(jnp.bfloat16)

    # conv weight at its natural size: (OUTC, N*Cpad), column index n*Cpad + c
    wf = jnp.transpose(conv_w.reshape(OUTC, C, N), (0, 2, 1))        # (OUTC, N, C)
    if Cpad != C:
        wf = jnp.pad(wf, ((0, 0), (0, 0), (0, Cpad - C)))
    wf = wf.reshape(OUTC, N * Cpad).astype(jnp.bfloat16)

    # block-ones Wp-fold matrix: fold[c, c*Wp + w] = 1 for c < C, zero rows for padding
    fold = jnp.repeat(jnp.eye(C, dtype=jnp.float32), Wp, axis=1)     # (C, C*Wp)
    if Cpad != C:
        fold = jnp.pad(fold, ((0, Cpad - C), (0, 0)))

    # HW tile: prefer the largest 128-multiple tile that still leaves >= 2 grid steps
    # (keeps both v7x TensorCores busy); per-step working set stays a few MiB at 2048.
    thw = None
    for cand in (2048, 1024, 512, 256, 128):
        if HW_pad % cand == 0 and B * (HW_pad // cand) >= 2:
            thw = cand
            break
    if thw is None:
        thw = HW_pad

    kernel = functools.partial(_deform_kernel, Hp=Hp, Wp=Wp, C=C, Cpad=Cpad, ks=ks)
    out = pl.pallas_call(
        kernel,
        out_shape=jax.ShapeDtypeStruct((B, OUTC, HW_pad), x.dtype),
        grid_spec=pltpu.PrefetchScalarGridSpec(
            num_scalar_prefetch=0,
            grid=(B, HW_pad // thw),
            in_specs=[
                pl.BlockSpec((1, C * Wp, Hp), lambda b, t: (b, 0, 0)),     # resident/batch
                pl.BlockSpec((1, 2 * N, thw), lambda b, t: (b, 0, t)),
                pl.BlockSpec((OUTC, N * Cpad), lambda b, t: (0, 0)),       # resident
                pl.BlockSpec((Cpad, C * Wp), lambda b, t: (0, 0)),         # resident
            ],
            out_specs=pl.BlockSpec((1, OUTC, thw), lambda b, t: (b, 0, t)),
            scratch_shapes=[pltpu.VMEM((N * Cpad, thw), jnp.bfloat16)],
        ),
        compiler_params=pltpu.CompilerParams(
            dimension_semantics=("parallel", "parallel"),
            vmem_limit_bytes=32 * 1024 * 1024),
    )(xr, p, wf, fold)

    return out[:, :, :HW].reshape(B, OUTC, h, w)


def deform_conv2d_ref(x, p_conv_w, p_conv_b, conv_w, *, ks=3, padding=1, stride=1):
    """Pure-JAX f32 reference mirroring the PyTorch forward (for in-script validation)."""
    B, C, H, W = x.shape
    N = ks * ks
    OUTC = conv_w.shape[0]
    offset = lax.conv_general_dilated(
        x, p_conv_w, (stride, stride), ((1, 1), (1, 1)),
        dimension_numbers=('NCHW', 'OIHW', 'NCHW')) + p_conv_b[None, :, None, None]
    h, w = offset.shape[2], offset.shape[3]
    xp = jnp.pad(x, ((0, 0), (0, 0), (padding, padding), (padding, padding)))
    Hp, Wp = xp.shape[2], xp.shape[3]
    a = jnp.arange(-(ks - 1) // 2, (ks - 1) // 2 + 1, dtype=x.dtype)
    p_n_x, p_n_y = jnp.repeat(a, ks), jnp.tile(a, ks)
    p0x = jnp.arange(1, h * stride + 1, stride, dtype=x.dtype)
    p0y = jnp.arange(1, w * stride + 1, stride, dtype=x.dtype)
    px = p0x[None, None, :, None] + p_n_x[None, :, None, None] + offset[:, :N]
    py = p0y[None, None, None, :] + p_n_y[None, :, None, None] + offset[:, N:]
    px = jnp.transpose(px, (0, 2, 3, 1))
    py = jnp.transpose(py, (0, 2, 3, 1))                          # (B, h, w, N)
    q_lt_x = jnp.clip(jnp.floor(px), 0, Hp - 1)
    q_lt_y = jnp.clip(jnp.floor(py), 0, Wp - 1)
    q_rb_x = jnp.clip(jnp.floor(px) + 1, 0, Hp - 1)
    q_rb_y = jnp.clip(jnp.floor(py) + 1, 0, Wp - 1)
    pcx = jnp.clip(px, 0, Hp - 1)
    pcy = jnp.clip(py, 0, Wp - 1)
    g_lt = (1 + (q_lt_x - pcx)) * (1 + (q_lt_y - pcy))
    g_rb = (1 - (q_rb_x - pcx)) * (1 - (q_rb_y - pcy))
    g_lb = (1 + (q_lt_x - pcx)) * (1 - (q_rb_y - pcy))
    g_rt = (1 - (q_rb_x - pcx)) * (1 + (q_lt_y - pcy))
    xflat = xp.reshape(B, C, Hp * Wp)

    def gather(qx, qy):
        idx = (qx * Wp + qy).astype(jnp.int32).reshape(B, 1, -1)
        g = jnp.take_along_axis(xflat, jnp.broadcast_to(idx, (B, C, idx.shape[-1])), axis=-1)
        return g.reshape(B, C, h, w, N)

    x_off = (g_lt[:, None] * gather(q_lt_x, q_lt_y)
             + g_rb[:, None] * gather(q_rb_x, q_rb_y)
             + g_lb[:, None] * gather(q_lt_x, q_rb_y)
             + g_rt[:, None] * gather(q_rb_x, q_lt_y))
    # equivalent of _reshape_x_offset + Conv2d(kernel=ks, stride=ks, bias=None)
    return jnp.einsum('bchwn,ocn->bohw', x_off, conv_w.reshape(OUTC, C, N),
                      precision=lax.Precision.HIGHEST)


if __name__ == "__main__":
    key = jax.random.PRNGKey(0)
    k1, k2, k3 = jax.random.split(key, 3)

    B, C, H, W = 2, 4, 16, 16
    OUTC, ks, padding, stride = 8, 3, 1, 1
    N = ks * ks

    x = jax.random.normal(k1, (B, C, H, W), jnp.float32)
    # p_conv: weight zeroed as in the module __init__; bias deterministic & nonzero
    p_conv_w = jnp.zeros((2 * N, C, 3, 3), jnp.float32)
    p_conv_b = jax.random.uniform(k2, (2 * N,), jnp.float32, -0.5, 0.5)
    # main conv: Conv2d(inc, outc, kernel=ks, stride=ks, bias=None)
    conv_w = jax.random.normal(k3, (OUTC, C, ks, ks), jnp.float32) * 0.1

    out = deform_conv2d_pallas(x, p_conv_w, p_conv_b, conv_w,
                               ks=ks, padding=padding, stride=stride)
    out = jax.block_until_ready(out)
    assert out.shape == (B, OUTC, H, W), out.shape

    ref = deform_conv2d_ref(x, p_conv_w, p_conv_b, conv_w,
                            ks=ks, padding=padding, stride=stride)
    max_err = float(jnp.max(jnp.abs(out - ref)))
    # bf16 MXU inputs with f32 accumulation: loosened tolerance vs. the f32 reference
    assert max_err < 3e-2, f"mismatch vs reference: {max_err}"

    print("KERNEL_OK")
</pallas_src>

<mosaic_0001>
module attributes {stable_mosaic.version = 11 : i64} {
  func.func @_deform_kernel(%arg0: i32, %arg1: i32, %arg2: memref<1x72x18xbf16, #tpu.memory_space<vmem>>, %arg3: memref<1x18x256xf32, #tpu.memory_space<vmem>>, %arg4: memref<8x72xbf16, #tpu.memory_space<vmem>>, %arg5: memref<8x72xf32, #tpu.memory_space<vmem>>, %arg6: memref<1x8x256xf32, #tpu.memory_space<vmem>>, %arg7: memref<72x256xbf16, #tpu.memory_space<vmem>>) attributes {dimension_semantics = [#tpu.dimension_semantics<parallel>, #tpu.dimension_semantics<parallel>], iteration_bounds = array<i64: 2, 1>, scalar_prefetch = 0 : i64, scratch_operands = 1 : i64, tpu.core_type = #tpu.core_type<tc>, window_params = [{transform_indices = @transform_0, window_bounds = array<i64: 1, 72, 18>}, {transform_indices = @transform_1, window_bounds = array<i64: 1, 18, 256>}, {pipeline_mode = #tpu.pipeline_mode<synchronous>, transform_indices = @transform_2, window_bounds = array<i64: 8, 72>}, {pipeline_mode = #tpu.pipeline_mode<synchronous>, transform_indices = @transform_3, window_bounds = array<i64: 8, 72>}, {transform_indices = @transform_4, window_bounds = array<i64: 1, 8, 256>}]} {
    %c0 = arith.constant 0 : index
    %c0_0 = arith.constant 0 : index
    %c0_1 = arith.constant 0 : index
    %0 = vector.load %arg2[%c0, %c0_0, %c0_1] : memref<1x72x18xbf16, #tpu.memory_space<vmem>>, vector<1x72x18xbf16>
    %1 = vector.shape_cast %0 : vector<1x72x18xbf16> to vector<72x18xbf16>
    %c0_2 = arith.constant 0 : index
    %c0_3 = arith.constant 0 : index
    %2 = vector.load %arg5[%c0_2, %c0_3] : memref<8x72xf32, #tpu.memory_space<vmem>>, vector<8x72xf32>
    %3 = tpu.iota {dimensions = array<i32: 0>} : vector<18x256xi32>
    %4 = tpu.iota {dimensions = array<i32: 0>} : vector<18x256xi32>
    %c0_4 = arith.constant 0 : index
    %c0_5 = arith.constant 0 : index
    %c0_6 = arith.constant 0 : index
    %5 = vector.load %arg3[%c0_4, %c0_5, %c0_6] : memref<1x18x256xf32, #tpu.memory_space<vmem>>, vector<1x1x256xf32>
    %6 = vector.shape_cast %5 : vector<1x1x256xf32> to vector<1x256xf32>
    %c0_7 = arith.constant 0 : index
    %c9 = arith.constant 9 : index
    %c0_8 = arith.constant 0 : index
    %7 = vector.load %arg3[%c0_7, %c9, %c0_8] : memref<1x18x256xf32, #tpu.memory_space<vmem>>, vector<1x1x256xf32>
    %8 = vector.shape_cast %7 : vector<1x1x256xf32> to vector<1x256xf32>
    %9 = math.floor %6 : vector<1x256xf32>
    %10 = math.floor %8 : vector<1x256xf32>
    %cst = arith.constant 0.000000e+00 : f32
    %cst_9 = arith.constant 1.700000e+01 : f32
    %11 = vector.broadcast %cst : f32 to vector<1x256xf32>
    %12 = arith.maximumf %11, %9 : vector<1x256xf32>
    %13 = vector.broadcast %cst_9 : f32 to vector<1x256xf32>
    %14 = arith.minimumf %13, %12 : vector<1x256xf32>
    %cst_10 = arith.constant 1.000000e+00 : f32
    %15 = vector.broadcast %cst_10 : f32 to vector<1x256xf32>
    %16 = arith.addf %9, %15 : vector<1x256xf32>
    %cst_11 = arith.constant 0.000000e+00 : f32
    %cst_12 = arith.constant 1.700000e+01 : f32
    %17 = vector.broadcast %cst_11 : f32 to vector<1x256xf32>
    %18 = arith.maximumf %17, %16 : vector<1x256xf32>
    %19 = vector.broadcast %cst_12 : f32 to vector<1x256xf32>
    %20 = arith.minimumf %19, %18 : vector<1x256xf32>
    %cst_13 = arith.constant 0.000000e+00 : f32
    %cst_14 = arith.constant 1.700000e+01 : f32
    %21 = vector.broadcast %cst_13 : f32 to vector<1x256xf32>
    %22 = arith.maximumf %21, %10 : vector<1x256xf32>
    %23 = vector.broadcast %cst_14 : f32 to vector<1x256xf32>
    %24 = arith.minimumf %23, %22 : vector<1x256xf32>
    %cst_15 = arith.constant 1.000000e+00 : f32
    %25 = vector.broadcast %cst_15 : f32 to vector<1x256xf32>
    %26 = arith.addf %10, %25 : vector<1x256xf32>
    %cst_16 = arith.constant 0.000000e+00 : f32
    %cst_17 = arith.constant 1.700000e+01 : f32
    %27 = vector.broadcast %cst_16 : f32 to vector<1x256xf32>
    %28 = arith.maximumf %27, %26 : vector<1x256xf32>
    %29 = vector.broadcast %cst_17 : f32 to vector<1x256xf32>
    %30 = arith.minimumf %29, %28 : vector<1x256xf32>
    %cst_18 = arith.constant 0.000000e+00 : f32
    %cst_19 = arith.constant 1.700000e+01 : f32
    %31 = vector.broadcast %cst_18 : f32 to vector<1x256xf32>
    %32 = arith.maximumf %31, %6 : vector<1x256xf32>
    %33 = vector.broadcast %cst_19 : f32 to vector<1x256xf32>
    %34 = arith.minimumf %33, %32 : vector<1x256xf32>
    %cst_20 = arith.constant 0.000000e+00 : f32
    %cst_21 = arith.constant 1.700000e+01 : f32
    %35 = vector.broadcast %cst_20 : f32 to vector<1x256xf32>
    %36 = arith.maximumf %35, %8 : vector<1x256xf32>
    %37 = vector.broadcast %cst_21 : f32 to vector<1x256xf32>
    %38 = arith.minimumf %37, %36 : vector<1x256xf32>
    %39 = arith.subf %14, %34 : vector<1x256xf32>
    %cst_22 = arith.constant 1.000000e+00 : f32
    %40 = vector.broadcast %cst_22 : f32 to vector<1x256xf32>
    %41 = arith.addf %40, %39 : vector<1x256xf32>
    %42 = arith.subf %20, %34 : vector<1x256xf32>
    %cst_23 = arith.constant 1.000000e+00 : f32
    %43 = vector.broadcast %cst_23 : f32 to vector<1x256xf32>
    %44 = arith.subf %43, %42 : vector<1x256xf32>
    %45 = arith.subf %24, %38 : vector<1x256xf32>
    %cst_24 = arith.constant 1.000000e+00 : f32
    %46 = vector.broadcast %cst_24 : f32 to vector<1x256xf32>
    %47 = arith.addf %46, %45 : vector<1x256xf32>
    %48 = arith.subf %30, %38 : vector<1x256xf32>
    %cst_25 = arith.constant 1.000000e+00 : f32
    %49 = vector.broadcast %cst_25 : f32 to vector<1x256xf32>
    %50 = arith.subf %49, %48 : vector<1x256xf32>
    %51 = arith.fptosi %14 : vector<1x256xf32> to vector<1x256xi32>
    %52 = arith.fptosi %20 : vector<1x256xf32> to vector<1x256xi32>
    %53 = arith.fptosi %24 : vector<1x256xf32> to vector<1x256xi32>
    %54 = arith.fptosi %30 : vector<1x256xf32> to vector<1x256xi32>
    %55 = vector.broadcast %51 : vector<1x256xi32> to vector<18x256xi32>
    %56 = arith.cmpi eq, %3, %55 : vector<18x256xi32>
    %cst_26 = arith.constant 0.000000e+00 : f32
    %57 = vector.shape_cast %41 : vector<1x256xf32> to vector<1x256xf32>
    %58 = vector.broadcast %57 : vector<1x256xf32> to vector<18x256xf32>
    %59 = vector.broadcast %cst_26 : f32 to vector<18x256xf32>
    %60 = arith.select %56, %58, %59 : vector<18x256xi1>, vector<18x256xf32>
    %61 = vector.broadcast %52 : vector<1x256xi32> to vector<18x256xi32>
    %62 = arith.cmpi eq, %3, %61 : vector<18x256xi32>
    %cst_27 = arith.constant 0.000000e+00 : f32
    %63 = vector.shape_cast %44 : vector<1x256xf32> to vector<1x256xf32>
    %64 = vector.broadcast %63 : vector<1x256xf32> to vector<18x256xf32>
    %65 = vector.broadcast %cst_27 : f32 to vector<18x256xf32>
    %66 = arith.select %62, %64, %65 : vector<18x256xi1>, vector<18x256xf32>
    %67 = arith.addf %60, %66 : vector<18x256xf32>
    %68 = arith.truncf %67 : vector<18x256xf32> to vector<18x256xbf16>
    %cst_28 = arith.constant dense<0.000000e+00> : vector<72x256xf32>
    %69 = tpu.matmul %1, %68, %cst_28 {dimension_numbers = #tpu.dot_dimension_numbers<[1], [0], [0], [1], [0, 0, 1, 1], [], []>} : vector<72x18xbf16>, vector<18x256xbf16>, vector<72x256xf32> -> vector<72x256xf32>
    %70 = vector.broadcast %53 : vector<1x256xi32> to vector<18x256xi32>
    %71 = arith.cmpi eq, %4, %70 : vector<18x256xi32>
    %cst_29 = arith.constant 0.000000e+00 : f32
    %72 = vector.shape_cast %47 : vector<1x256xf32> to vector<1x256xf32>
    %73 = vector.broadcast %72 : vector<1x256xf32> to vector<18x256xf32>
    %74 = vector.broadcast %cst_29 : f32 to vector<18x256xf32>
    %75 = arith.select %71, %73, %74 : vector<18x256xi1>, vector<18x256xf32>
    %76 = vector.broadcast %54 : vector<1x256xi32> to vector<18x256xi32>
    %77 = arith.cmpi eq, %4, %76 : vector<18x256xi32>
    %cst_30 = arith.constant 0.000000e+00 : f32
    %78 = vector.shape_cast %50 : vector<1x256xf32> to vector<1x256xf32>
    %79 = vector.broadcast %78 : vector<1x256xf32> to vector<18x256xf32>
    %80 = vector.broadcast %cst_30 : f32 to vector<18x256xf32>
    %81 = arith.select %77, %79, %80 : vector<18x256xi1>, vector<18x256xf32>
    %82 = arith.addf %75, %81 : vector<18x256xf32>
    %83 = tpu.concatenate %82, %82, %82, %82 in 0 : vector<18x256xf32>, vector<18x256xf32>, vector<18x256xf32>, vector<18x256xf32> -> vector<72x256xf32>
    %84 = arith.mulf %69, %83 : vector<72x256xf32>
    %cst_31 = arith.constant dense<0.000000e+00> : vector<8x256xf32>
    %85 = tpu.matmul %2, %84, %cst_31 {dimension_numbers = #tpu.dot_dimension_numbers<[1], [0], [0], [1], [0, 0, 1, 1], [], []>} : vector<8x72xf32>, vector<72x256xf32>, vector<8x256xf32> -> vector<8x256xf32>
    %86 = arith.truncf %85 : vector<8x256xf32> to vector<8x256xbf16>
    %c0_32 = arith.constant 0 : index
    %c0_33 = arith.constant 0 : index
    %87 = vector.load %arg7[%c0_32, %c0_33] : memref<72x256xbf16, #tpu.memory_space<vmem>>, vector<8x256xbf16>
    tpu.vector_store %arg7[%c0_32, %c0_33], %86 {strides = array<i32>} : memref<72x256xbf16, #tpu.memory_space<vmem>>, vector<8x256xbf16>,
    %c0_34 = arith.constant 0 : index
    %c1 = arith.constant 1 : index
    %c0_35 = arith.constant 0 : index
    %88 = vector.load %arg3[%c0_34, %c1, %c0_35] : memref<1x18x256xf32, #tpu.memory_space<vmem>>, vector<1x1x256xf32>
    %89 = vector.shape_cast %88 : vector<1x1x256xf32> to vector<1x256xf32>
    %c0_36 = arith.constant 0 : index
    %c10 = arith.constant 10 : index
    %c0_37 = arith.constant 0 : index
    %90 = vector.load %arg3[%c0_36, %c10, %c0_37] : memref<1x18x256xf32, #tpu.memory_space<vmem>>, vector<1x1x256xf32>
    %91 = vector.shape_cast %90 : vector<1x1x256xf32> to vector<1x256xf32>
    %92 = math.floor %89 : vector<1x256xf32>
    %93 = math.floor %91 : vector<1x256xf32>
    %cst_38 = arith.constant 0.000000e+00 : f32
    %cst_39 = arith.constant 1.700000e+01 : f32
    %94 = vector.broadcast %cst_38 : f32 to vector<1x256xf32>
    %95 = arith.maximumf %94, %92 : vector<1x256xf32>
    %96 = vector.broadcast %cst_39 : f32 to vector<1x256xf32>
    %97 = arith.minimumf %96, %95 : vector<1x256xf32>
    %cst_40 = arith.constant 1.000000e+00 : f32
    %98 = vector.broadcast %cst_40 : f32 to vector<1x256xf32>
    %99 = arith.addf %92, %98 : vector<1x256xf32>
    %cst_41 = arith.constant 0.000000e+00 : f32
    %cst_42 = arith.constant 1.700000e+01 : f32
    %100 = vector.broadcast %cst_41 : f32 to vector<1x256xf32>
    %101 = arith.maximumf %100, %99 : vector<1x256xf32>
    %102 = vector.broadcast %cst_42 : f32 to vector<1x256xf32>
    %103 = arith.minimumf %102, %101 : vector<1x256xf32>
    %cst_43 = arith.constant 0.000000e+00 : f32
    %cst_44 = arith.constant 1.700000e+01 : f32
    %104 = vector.broadcast %cst_43 : f32 to vector<1x256xf32>
    %105 = arith.maximumf %104, %93 : vector<1x256xf32>
    %106 = vector.broadcast %cst_44 : f32 to vector<1x256xf32>
    %107 = arith.minimumf %106, %105 : vector<1x256xf32>
    %cst_45 = arith.constant 1.000000e+00 : f32
    %108 = vector.broadcast %cst_45 : f32 to vector<1x256xf32>
    %109 = arith.addf %93, %108 : vector<1x256xf32>
    %cst_46 = arith.constant 0.000000e+00 : f32
    %cst_47 = arith.constant 1.700000e+01 : f32
    %110 = vector.broadcast %cst_46 : f32 to vector<1x256xf32>
    %111 = arith.maximumf %110, %109 : vector<1x256xf32>
    %112 = vector.broadcast %cst_47 : f32 to vector<1x256xf32>
    %113 = arith.minimumf %112, %111 : vector<1x256xf32>
    %cst_48 = arith.constant 0.000000e+00 : f32
    %cst_49 = arith.constant 1.700000e+01 : f32
    %114 = vector.broadcast %cst_48 : f32 to vector<1x256xf32>
    %115 = arith.maximumf %114, %89 : vector<1x256xf32>
    %116 = vector.broadcast %cst_49 : f32 to vector<1x256xf32>
    %117 = arith.minimumf %116, %115 : vector<1x256xf32>
    %cst_50 = arith.constant 0.000000e+00 : f32
    %cst_51 = arith.constant 1.700000e+01 : f32
    %118 = vector.broadcast %cst_50 : f32 to vector<1x256xf32>
    %119 = arith.maximumf %118, %91 : vector<1x256xf32>
    %120 = vector.broadcast %cst_51 : f32 to vector<1x256xf32>
    %121 = arith.minimumf %120, %119 : vector<1x256xf32>
    %122 = arith.subf %97, %117 : vector<1x256xf32>
    %cst_52 = arith.constant 1.000000e+00 : f32
    %123 = vector.broadcast %cst_52 : f32 to vector<1x256xf32>
    %124 = arith.addf %123, %122 : vector<1x256xf32>
    %125 = arith.subf %103, %117 : vector<1x256xf32>
    %cst_53 = arith.constant 1.000000e+00 : f32
    %126 = vector.broadcast %cst_53 : f32 to vector<1x256xf32>
    %127 = arith.subf %126, %125 : vector<1x256xf32>
    %128 = arith.subf %107, %121 : vector<1x256xf32>
    %cst_54 = arith.constant 1.000000e+00 : f32
    %129 = vector.broadcast %cst_54 : f32 to vector<1x256xf32>
    %130 = arith.addf %129, %128 : vector<1x256xf32>
    %131 = arith.subf %113, %121 : vector<1x256xf32>
    %cst_55 = arith.constant 1.000000e+00 : f32
    %132 = vector.broadcast %cst_55 : f32 to vector<1x256xf32>
    %133 = arith.subf %132, %131 : vector<1x256xf32>
    %134 = arith.fptosi %97 : vector<1x256xf32> to vector<1x256xi32>
    %135 = arith.fptosi %103 : vector<1x256xf32> to vector<1x256xi32>
    %136 = arith.fptosi %107 : vector<1x256xf32> to vector<1x256xi32>
    %137 = arith.fptosi %113 : vector<1x256xf32> to vector<1x256xi32>
    %138 = vector.broadcast %134 : vector<1x256xi32> to vector<18x256xi32>
    %139 = arith.cmpi eq, %3, %138 : vector<18x256xi32>
    %cst_56 = arith.constant 0.000000e+00 : f32
    %140 = vector.shape_cast %124 : vector<1x256xf32> to vector<1x256xf32>
    %141 = vector.broadcast %140 : vector<1x256xf32> to vector<18x256xf32>
    %142 = vector.broadcast %cst_56 : f32 to vector<18x256xf32>
    %143 = arith.select %139, %141, %142 : vector<18x256xi1>, vector<18x256xf32>
    %144 = vector.broadcast %135 : vector<1x256xi32> to vector<18x256xi32>
    %145 = arith.cmpi eq, %3, %144 : vector<18x256xi32>
    %cst_57 = arith.constant 0.000000e+00 : f32
    %146 = vector.shape_cast %127 : vector<1x256xf32> to vector<1x256xf32>
    %147 = vector.broadcast %146 : vector<1x256xf32> to vector<18x256xf32>
    %148 = vector.broadcast %cst_57 : f32 to vector<18x256xf32>
    %149 = arith.select %145, %147, %148 : vector<18x256xi1>, vector<18x256xf32>
    %150 = arith.addf %143, %149 : vector<18x256xf32>
    %151 = arith.truncf %150 : vector<18x256xf32> to vector<18x256xbf16>
    %cst_58 = arith.constant dense<0.000000e+00> : vector<72x256xf32>
    %152 = tpu.matmul %1, %151, %cst_58 {dimension_numbers = #tpu.dot_dimension_numbers<[1], [0], [0], [1], [0, 0, 1, 1], [], []>} : vector<72x18xbf16>, vector<18x256xbf16>, vector<72x256xf32> -> vector<72x256xf32>
    %153 = vector.broadcast %136 : vector<1x256xi32> to vector<18x256xi32>
    %154 = arith.cmpi eq, %4, %153 : vector<18x256xi32>
    %cst_59 = arith.constant 0.000000e+00 : f32
    %155 = vector.shape_cast %130 : vector<1x256xf32> to vector<1x256xf32>
    %156 = vector.broadcast %155 : vector<1x256xf32> to vector<18x256xf32>
    %157 = vector.broadcast %cst_59 : f32 to vector<18x256xf32>
    %158 = arith.select %154, %156, %157 : vector<18x256xi1>, vector<18x256xf32>
    %159 = vector.broadcast %137 : vector<1x256xi32> to vector<18x256xi32>
    %160 = arith.cmpi eq, %4, %159 : vector<18x256xi32>
    %cst_60 = arith.constant 0.000000e+00 : f32
    %161 = vector.shape_cast %133 : vector<1x256xf32> to vector<1x256xf32>
    %162 = vector.broadcast %161 : vector<1x256xf32> to vector<18x256xf32>
    %163 = vector.broadcast %cst_60 : f32 to vector<18x256xf32>
    %164 = arith.select %160, %162, %163 : vector<18x256xi1>, vector<18x256xf32>
    %165 = arith.addf %158, %164 : vector<18x256xf32>
    %166 = tpu.concatenate %165, %165, %165, %165 in 0 : vector<18x256xf32>, vector<18x256xf32>, vector<18x256xf32>, vector<18x256xf32> -> vector<72x256xf32>
    %167 = arith.mulf %152, %166 : vector<72x256xf32>
    %cst_61 = arith.constant dense<0.000000e+00> : vector<8x256xf32>
    %168 = tpu.matmul %2, %167, %cst_61 {dimension_numbers = #tpu.dot_dimension_numbers<[1], [0], [0], [1], [0, 0, 1, 1], [], []>} : vector<8x72xf32>, vector<72x256xf32>, vector<8x256xf32> -> vector<8x256xf32>
    %169 = arith.truncf %168 : vector<8x256xf32> to vector<8x256xbf16>
    %c8 = arith.constant 8 : index
    %c0_62 = arith.constant 0 : index
    %170 = vector.load %arg7[%c8, %c0_62] : memref<72x256xbf16, #tpu.memory_space<vmem>>, vector<8x256xbf16>
    tpu.vector_store %arg7[%c8, %c0_62], %169 {strides = array<i32>} : memref<72x256xbf16, #tpu.memory_space<vmem>>, vector<8x256xbf16>,
    %c0_63 = arith.constant 0 : index
    %c2 = arith.constant 2 : index
    %c0_64 = arith.constant 0 : index
    %171 = vector.load %arg3[%c0_63, %c2, %c0_64] : memref<1x18x256xf32, #tpu.memory_space<vmem>>, vector<1x1x256xf32>
    %172 = vector.shape_cast %171 : vector<1x1x256xf32> to vector<1x256xf32>
    %c0_65 = arith.constant 0 : index
    %c11 = arith.constant 11 : index
    %c0_66 = arith.constant 0 : index
    %173 = vector.load %arg3[%c0_65, %c11, %c0_66] : memref<1x18x256xf32, #tpu.memory_space<vmem>>, vector<1x1x256xf32>
    %174 = vector.shape_cast %173 : vector<1x1x256xf32> to vector<1x256xf32>
    %175 = math.floor %172 : vector<1x256xf32>
    %176 = math.floor %174 : vector<1x256xf32>
    %cst_67 = arith.constant 0.000000e+00 : f32
    %cst_68 = arith.constant 1.700000e+01 : f32
    %177 = vector.broadcast %cst_67 : f32 to vector<1x256xf32>
    %178 = arith.maximumf %177, %175 : vector<1x256xf32>
    %179 = vector.broadcast %cst_68 : f32 to vector<1x256xf32>
    %180 = arith.minimumf %179, %178 : vector<1x256xf32>
    %cst_69 = arith.constant 1.000000e+00 : f32
    %181 = vector.broadcast %cst_69 : f32 to vector<1x256xf32>
    %182 = arith.addf %175, %181 : vector<1x256xf32>
    %cst_70 = arith.constant 0.000000e+00 : f32
    %cst_71 = arith.constant 1.700000e+01 : f32
    %183 = vector.broadcast %cst_70 : f32 to vector<1x256xf32>
    %184 = arith.maximumf %183, %182 : vector<1x256xf32>
    %185 = vector.broadcast %cst_71 : f32 to vector<1x256xf32>
    %186 = arith.minimumf %185, %184 : vector<1x256xf32>
    %cst_72 = arith.constant 0.000000e+00 : f32
    %cst_73 = arith.constant 1.700000e+01 : f32
    %187 = vector.broadcast %cst_72 : f32 to vector<1x256xf32>
    %188 = arith.maximumf %187, %176 : vector<1x256xf32>
    %189 = vector.broadcast %cst_73 : f32 to vector<1x256xf32>
    %190 = arith.minimumf %189, %188 : vector<1x256xf32>
    %cst_74 = arith.constant 1.000000e+00 : f32
    %191 = vector.broadcast %cst_74 : f32 to vector<1x256xf32>
    %192 = arith.addf %176, %191 : vector<1x256xf32>
    %cst_75 = arith.constant 0.000000e+00 : f32
    %cst_76 = arith.constant 1.700000e+01 : f32
    %193 = vector.broadcast %cst_75 : f32 to vector<1x256xf32>
    %194 = arith.maximumf %193, %192 : vector<1x256xf32>
    %195 = vector.broadcast %cst_76 : f32 to vector<1x256xf32>
    %196 = arith.minimumf %195, %194 : vector<1x256xf32>
    %cst_77 = arith.constant 0.000000e+00 : f32
    %cst_78 = arith.constant 1.700000e+01 : f32
    %197 = vector.broadcast %cst_77 : f32 to vector<1x256xf32>
    %198 = arith.maximumf %197, %172 : vector<1x256xf32>
    %199 = vector.broadcast %cst_78 : f32 to vector<1x256xf32>
    %200 = arith.minimumf %199, %198 : vector<1x256xf32>
    %cst_79 = arith.constant 0.000000e+00 : f32
    %cst_80 = arith.constant 1.700000e+01 : f32
    %201 = vector.broadcast %cst_79 : f32 to vector<1x256xf32>
    %202 = arith.maximumf %201, %174 : vector<1x256xf32>
    %203 = vector.broadcast %cst_80 : f32 to vector<1x256xf32>
    %204 = arith.minimumf %203, %202 : vector<1x256xf32>
    %205 = arith.subf %180, %200 : vector<1x256xf32>
    %cst_81 = arith.constant 1.000000e+00 : f32
    %206 = vector.broadcast %cst_81 : f32 to vector<1x256xf32>
    %207 = arith.addf %206, %205 : vector<1x256xf32>
    %208 = arith.subf %186, %200 : vector<1x256xf32>
    %cst_82 = arith.constant 1.000000e+00 : f32
    %209 = vector.broadcast %cst_82 : f32 to vector<1x256xf32>
    %210 = arith.subf %209, %208 : vector<1x256xf32>
    %211 = arith.subf %190, %204 : vector<1x256xf32>
    %cst_83 = arith.constant 1.000000e+00 : f32
    %212 = vector.broadcast %cst_83 : f32 to vector<1x256xf32>
    %213 = arith.addf %212, %211 : vector<1x256xf32>
    %214 = arith.subf %196, %204 : vector<1x256xf32>
    %cst_84 = arith.constant 1.000000e+00 : f32
    %215 = vector.broadcast %cst_84 : f32 to vector<1x256xf32>
    %216 = arith.subf %215, %214 : vector<1x256xf32>
    %217 = arith.fptosi %180 : vector<1x256xf32> to vector<1x256xi32>
    %218 = arith.fptosi %186 : vector<1x256xf32> to vector<1x256xi32>
    %219 = arith.fptosi %190 : vector<1x256xf32> to vector<1x256xi32>
    %220 = arith.fptosi %196 : vector<1x256xf32> to vector<1x256xi32>
    %221 = vector.broadcast %217 : vector<1x256xi32> to vector<18x256xi32>
    %222 = arith.cmpi eq, %3, %221 : vector<18x256xi32>
    %cst_85 = arith.constant 0.000000e+00 : f32
    %223 = vector.shape_cast %207 : vector<1x256xf32> to vector<1x256xf32>
    %224 = vector.broadcast %223 : vector<1x256xf32> to vector<18x256xf32>
    %225 = vector.broadcast %cst_85 : f32 to vector<18x256xf32>
    %226 = arith.select %222, %224, %225 : vector<18x256xi1>, vector<18x256xf32>
    %227 = vector.broadcast %218 : vector<1x256xi32> to vector<18x256xi32>
    %228 = arith.cmpi eq, %3, %227 : vector<18x256xi32>
    %cst_86 = arith.constant 0.000000e+00 : f32
    %229 = vector.shape_cast %210 : vector<1x256xf32> to vector<1x256xf32>
    %230 = vector.broadcast %229 : vector<1x256xf32> to vector<18x256xf32>
    %231 = vector.broadcast %cst_86 : f32 to vector<18x256xf32>
    %232 = arith.select %228, %230, %231 : vector<18x256xi1>, vector<18x256xf32>
    %233 = arith.addf %226, %232 : vector<18x256xf32>
    %234 = arith.truncf %233 : vector<18x256xf32> to vector<18x256xbf16>
    %cst_87 = arith.constant dense<0.000000e+00> : vector<72x256xf32>
    %235 = tpu.matmul %1, %234, %cst_87 {dimension_numbers = #tpu.dot_dimension_numbers<[1], [0], [0], [1], [0, 0, 1, 1], [], []>} : vector<72x18xbf16>, vector<18x256xbf16>, vector<72x256xf32> -> vector<72x256xf32>
    %236 = vector.broadcast %219 : vector<1x256xi32> to vector<18x256xi32>
    %237 = arith.cmpi eq, %4, %236 : vector<18x256xi32>
    %cst_88 = arith.constant 0.000000e+00 : f32
    %238 = vector.shape_cast %213 : vector<1x256xf32> to vector<1x256xf32>
    %239 = vector.broadcast %238 : vector<1x256xf32> to vector<18x256xf32>
    %240 = vector.broadcast %cst_88 : f32 to vector<18x256xf32>
    %241 = arith.select %237, %239, %240 : vector<18x256xi1>, vector<18x256xf32>
    %242 = vector.broadcast %220 : vector<1x256xi32> to vector<18x256xi32>
    %243 = arith.cmpi eq, %4, %242 : vector<18x256xi32>
    %cst_89 = arith.constant 0.000000e+00 : f32
    %244 = vector.shape_cast %216 : vector<1x256xf32> to vector<1x256xf32>
    %245 = vector.broadcast %244 : vector<1x256xf32> to vector<18x256xf32>
    %246 = vector.broadcast %cst_89 : f32 to vector<18x256xf32>
    %247 = arith.select %243, %245, %246 : vector<18x256xi1>, vector<18x256xf32>
    %248 = arith.addf %241, %247 : vector<18x256xf32>
    %249 = tpu.concatenate %248, %248, %248, %248 in 0 : vector<18x256xf32>, vector<18x256xf32>, vector<18x256xf32>, vector<18x256xf32> -> vector<72x256xf32>
    %250 = arith.mulf %235, %249 : vector<72x256xf32>
    %cst_90 = arith.constant dense<0.000000e+00> : vector<8x256xf32>
    %251 = tpu.matmul %2, %250, %cst_90 {dimension_numbers = #tpu.dot_dimension_numbers<[1], [0], [0], [1], [0, 0, 1, 1], [], []>} : vector<8x72xf32>, vector<72x256xf32>, vector<8x256xf32> -> vector<8x256xf32>
    %252 = arith.truncf %251 : vector<8x256xf32> to vector<8x256xbf16>
    %c16 = arith.constant 16 : index
    %c0_91 = arith.constant 0 : index
    %253 = vector.load %arg7[%c16, %c0_91] : memref<72x256xbf16, #tpu.memory_space<vmem>>, vector<8x256xbf16>
    tpu.vector_store %arg7[%c16, %c0_91], %252 {strides = array<i32>} : memref<72x256xbf16, #tpu.memory_space<vmem>>, vector<8x256xbf16>,
    %c0_92 = arith.constant 0 : index
    %c3 = arith.constant 3 : index
    %c0_93 = arith.constant 0 : index
    %254 = vector.load %arg3[%c0_92, %c3, %c0_93] : memref<1x18x256xf32, #tpu.memory_space<vmem>>, vector<1x1x256xf32>
    %255 = vector.shape_cast %254 : vector<1x1x256xf32> to vector<1x256xf32>
    %c0_94 = arith.constant 0 : index
    %c12 = arith.constant 12 : index
    %c0_95 = arith.constant 0 : index
    %256 = vector.load %arg3[%c0_94, %c12, %c0_95] : memref<1x18x256xf32, #tpu.memory_space<vmem>>, vector<1x1x256xf32>
    %257 = vector.shape_cast %256 : vector<1x1x256xf32> to vector<1x256xf32>
    %258 = math.floor %255 : vector<1x256xf32>
    %259 = math.floor %257 : vector<1x256xf32>
    %cst_96 = arith.constant 0.000000e+00 : f32
    %cst_97 = arith.constant 1.700000e+01 : f32
    %260 = vector.broadcast %cst_96 : f32 to vector<1x256xf32>
    %261 = arith.maximumf %260, %258 : vector<1x256xf32>
    %262 = vector.broadcast %cst_97 : f32 to vector<1x256xf32>
    %263 = arith.minimumf %262, %261 : vector<1x256xf32>
    %cst_98 = arith.constant 1.000000e+00 : f32
    %264 = vector.broadcast %cst_98 : f32 to vector<1x256xf32>
    %265 = arith.addf %258, %264 : vector<1x256xf32>
    %cst_99 = arith.constant 0.000000e+00 : f32
    %cst_100 = arith.constant 1.700000e+01 : f32
    %266 = vector.broadcast %cst_99 : f32 to vector<1x256xf32>
    %267 = arith.maximumf %266, %265 : vector<1x256xf32>
    %268 = vector.broadcast %cst_100 : f32 to vector<1x256xf32>
    %269 = arith.minimumf %268, %267 : vector<1x256xf32>
    %cst_101 = arith.constant 0.000000e+00 : f32
    %cst_102 = arith.constant 1.700000e+01 : f32
    %270 = vector.broadcast %cst_101 : f32 to vector<1x256xf32>
    %271 = arith.maximumf %270, %259 : vector<1x256xf32>
    %272 = vector.broadcast %cst_102 : f32 to vector<1x256xf32>
    %273 = arith.minimumf %272, %271 : vector<1x256xf32>
    %cst_103 = arith.constant 1.000000e+00 : f32
    %274 = vector.broadcast %cst_103 : f32 to vector<1x256xf32>
    %275 = arith.addf %259, %274 : vector<1x256xf32>
    %cst_104 = arith.constant 0.000000e+00 : f32
    %cst_105 = arith.constant 1.700000e+01 : f32
    %276 = vector.broadcast %cst_104 : f32 to vector<1x256xf32>
    %277 = arith.maximumf %276, %275 : vector<1x256xf32>
    %278 = vector.broadcast %cst_105 : f32 to vector<1x256xf32>
    %279 = arith.minimumf %278, %277 : vector<1x256xf32>
    %cst_106 = arith.constant 0.000000e+00 : f32
    %cst_107 = arith.constant 1.700000e+01 : f32
    %280 = vector.broadcast %cst_106 : f32 to vector<1x256xf32>
    %281 = arith.maximumf %280, %255 : vector<1x256xf32>
    %282 = vector.broadcast %cst_107 : f32 to vector<1x256xf32>
    %283 = arith.minimumf %282, %281 : vector<1x256xf32>
    %cst_108 = arith.constant 0.000000e+00 : f32
    %cst_109 = arith.constant 1.700000e+01 : f32
    %284 = vector.broadcast %cst_108 : f32 to vector<1x256xf32>
    %285 = arith.maximumf %284, %257 : vector<1x256xf32>
    %286 = vector.broadcast %cst_109 : f32 to vector<1x256xf32>
    %287 = arith.minimumf %286, %285 : vector<1x256xf32>
    %288 = arith.subf %263, %283 : vector<1x256xf32>
    %cst_110 = arith.constant 1.000000e+00 : f32
    %289 = vector.broadcast %cst_110 : f32 to vector<1x256xf32>
    %290 = arith.addf %289, %288 : vector<1x256xf32>
    %291 = arith.subf %269, %283 : vector<1x256xf32>
    %cst_111 = arith.constant 1.000000e+00 : f32
    %292 = vector.broadcast %cst_111 : f32 to vector<1x256xf32>
    %293 = arith.subf %292, %291 : vector<1x256xf32>
    %294 = arith.subf %273, %287 : vector<1x256xf32>
    %cst_112 = arith.constant 1.000000e+00 : f32
    %295 = vector.broadcast %cst_112 : f32 to vector<1x256xf32>
    %296 = arith.addf %295, %294 : vector<1x256xf32>
    %297 = arith.subf %279, %287 : vector<1x256xf32>
    %cst_113 = arith.constant 1.000000e+00 : f32
    %298 = vector.broadcast %cst_113 : f32 to vector<1x256xf32>
    %299 = arith.subf %298, %297 : vector<1x256xf32>
    %300 = arith.fptosi %263 : vector<1x256xf32> to vector<1x256xi32>
    %301 = arith.fptosi %269 : vector<1x256xf32> to vector<1x256xi32>
    %302 = arith.fptosi %273 : vector<1x256xf32> to vector<1x256xi32>
    %303 = arith.fptosi %279 : vector<1x256xf32> to vector<1x256xi32>
    %304 = vector.broadcast %300 : vector<1x256xi32> to vector<18x256xi32>
    %305 = arith.cmpi eq, %3, %304 : vector<18x256xi32>
    %cst_114 = arith.constant 0.000000e+00 : f32
    %306 = vector.shape_cast %290 : vector<1x256xf32> to vector<1x256xf32>
    %307 = vector.broadcast %306 : vector<1x256xf32> to vector<18x256xf32>
    %308 = vector.broadcast %cst_114 : f32 to vector<18x256xf32>
    %309 = arith.select %305, %307, %308 : vector<18x256xi1>, vector<18x256xf32>
    %310 = vector.broadcast %301 : vector<1x256xi32> to vector<18x256xi32>
    %311 = arith.cmpi eq, %3, %310 : vector<18x256xi32>
    %cst_115 = arith.constant 0.000000e+00 : f32
    %312 = vector.shape_cast %293 : vector<1x256xf32> to vector<1x256xf32>
    %313 = vector.broadcast %312 : vector<1x256xf32> to vector<18x256xf32>
    %314 = vector.broadcast %cst_115 : f32 to vector<18x256xf32>
    %315 = arith.select %311, %313, %314 : vector<18x256xi1>, vector<18x256xf32>
    %316 = arith.addf %309, %315 : vector<18x256xf32>
    %317 = arith.truncf %316 : vector<18x256xf32> to vector<18x256xbf16>
    %cst_116 = arith.constant dense<0.000000e+00> : vector<72x256xf32>
    %318 = tpu.matmul %1, %317, %cst_116 {dimension_numbers = #tpu.dot_dimension_numbers<[1], [0], [0], [1], [0, 0, 1, 1], [], []>} : vector<72x18xbf16>, vector<18x256xbf16>, vector<72x256xf32> -> vector<72x256xf32>
    %319 = vector.broadcast %302 : vector<1x256xi32> to vector<18x256xi32>
    %320 = arith.cmpi eq, %4, %319 : vector<18x256xi32>
    %cst_117 = arith.constant 0.000000e+00 : f32
    %321 = vector.shape_cast %296 : vector<1x256xf32> to vector<1x256xf32>
    %322 = vector.broadcast %321 : vector<1x256xf32> to vector<18x256xf32>
    %323 = vector.broadcast %cst_117 : f32 to vector<18x256xf32>
    %324 = arith.select %320, %322, %323 : vector<18x256xi1>, vector<18x256xf32>
    %325 = vector.broadcast %303 : vector<1x256xi32> to vector<18x256xi32>
    %326 = arith.cmpi eq, %4, %325 : vector<18x256xi32>
    %cst_118 = arith.constant 0.000000e+00 : f32
    %327 = vector.shape_cast %299 : vector<1x256xf32> to vector<1x256xf32>
    %328 = vector.broadcast %327 : vector<1x256xf32> to vector<18x256xf32>
    %329 = vector.broadcast %cst_118 : f32 to vector<18x256xf32>
    %330 = arith.select %326, %328, %329 : vector<18x256xi1>, vector<18x256xf32>
    %331 = arith.addf %324, %330 : vector<18x256xf32>
    %332 = tpu.concatenate %331, %331, %331, %331 in 0 : vector<18x256xf32>, vector<18x256xf32>, vector<18x256xf32>, vector<18x256xf32> -> vector<72x256xf32>
    %333 = arith.mulf %318, %332 : vector<72x256xf32>
    %cst_119 = arith.constant dense<0.000000e+00> : vector<8x256xf32>
    %334 = tpu.matmul %2, %333, %cst_119 {dimension_numbers = #tpu.dot_dimension_numbers<[1], [0], [0], [1], [0, 0, 1, 1], [], []>} : vector<8x72xf32>, vector<72x256xf32>, vector<8x256xf32> -> vector<8x256xf32>
    %335 = arith.truncf %334 : vector<8x256xf32> to vector<8x256xbf16>
    %c24 = arith.constant 24 : index
    %c0_120 = arith.constant 0 : index
    %336 = vector.load %arg7[%c24, %c0_120] : memref<72x256xbf16, #tpu.memory_space<vmem>>, vector<8x256xbf16>
    tpu.vector_store %arg7[%c24, %c0_120], %335 {strides = array<i32>} : memref<72x256xbf16, #tpu.memory_space<vmem>>, vector<8x256xbf16>,
    %c0_121 = arith.constant 0 : index
    %c4 = arith.constant 4 : index
    %c0_122 = arith.constant 0 : index
    %337 = vector.load %arg3[%c0_121, %c4, %c0_122] : memref<1x18x256xf32, #tpu.memory_space<vmem>>, vector<1x1x256xf32>
    %338 = vector.shape_cast %337 : vector<1x1x256xf32> to vector<1x256xf32>
    %c0_123 = arith.constant 0 : index
    %c13 = arith.constant 13 : index
    %c0_124 = arith.constant 0 : index
    %339 = vector.load %arg3[%c0_123, %c13, %c0_124] : memref<1x18x256xf32, #tpu.memory_space<vmem>>, vector<1x1x256xf32>
    %340 = vector.shape_cast %339 : vector<1x1x256xf32> to vector<1x256xf32>
    %341 = math.floor %338 : vector<1x256xf32>
    %342 = math.floor %340 : vector<1x256xf32>
    %cst_125 = arith.constant 0.000000e+00 : f32
    %cst_126 = arith.constant 1.700000e+01 : f32
    %343 = vector.broadcast %cst_125 : f32 to vector<1x256xf32>
    %344 = arith.maximumf %343, %341 : vector<1x256xf32>
    %345 = vector.broadcast %cst_126 : f32 to vector<1x256xf32>
    %346 = arith.minimumf %345, %344 : vector<1x256xf32>
    %cst_127 = arith.constant 1.000000e+00 : f32
    %347 = vector.broadcast %cst_127 : f32 to vector<1x256xf32>
    %348 = arith.addf %341, %347 : vector<1x256xf32>
    %cst_128 = arith.constant 0.000000e+00 : f32
    %cst_129 = arith.constant 1.700000e+01 : f32
    %349 = vector.broadcast %cst_128 : f32 to vector<1x256xf32>
    %350 = arith.maximumf %349, %348 : vector<1x256xf32>
    %351 = vector.broadcast %cst_129 : f32 to vector<1x256xf32>
    %352 = arith.minimumf %351, %350 : vector<1x256xf32>
    %cst_130 = arith.constant 0.000000e+00 : f32
    %cst_131 = arith.constant 1.700000e+01 : f32
    %353 = vector.broadcast %cst_130 : f32 to vector<1x256xf32>
    %354 = arith.maximumf %353, %342 : vector<1x256xf32>
    %355 = vector.broadcast %cst_131 : f32 to vector<1x256xf32>
    %356 = arith.minimumf %355, %354 : vector<1x256xf32>
    %cst_132 = arith.constant 1.000000e+00 : f32
    %357 = vector.broadcast %cst_132 : f32 to vector<1x256xf32>
    %358 = arith.addf %342, %357 : vector<1x256xf32>
    %cst_133 = arith.constant 0.000000e+00 : f32
    %cst_134 = arith.constant 1.700000e+01 : f32
    %359 = vector.broadcast %cst_133 : f32 to vector<1x256xf32>
    %360 = arith.maximumf %359, %358 : vector<1x256xf32>
    %361 = vector.broadcast %cst_134 : f32 to vector<1x256xf32>
    %362 = arith.minimumf %361, %360 : vector<1x256xf32>
    %cst_135 = arith.constant 0.000000e+00 : f32
    %cst_136 = arith.constant 1.700000e+01 : f32
    %363 = vector.broadcast %cst_135 : f32 to vector<1x256xf32>
    %364 = arith.maximumf %363, %338 : vector<1x256xf32>
    %365 = vector.broadcast %cst_136 : f32 to vector<1x256xf32>
    %366 = arith.minimumf %365, %364 : vector<1x256xf32>
    %cst_137 = arith.constant 0.000000e+00 : f32
    %cst_138 = arith.constant 1.700000e+01 : f32
    %367 = vector.broadcast %cst_137 : f32 to vector<1x256xf32>
    %368 = arith.maximumf %367, %340 : vector<1x256xf32>
    %369 = vector.broadcast %cst_138 : f32 to vector<1x256xf32>
    %370 = arith.minimumf %369, %368 : vector<1x256xf32>
    %371 = arith.subf %346, %366 : vector<1x256xf32>
    %cst_139 = arith.constant 1.000000e+00 : f32
    %372 = vector.broadcast %cst_139 : f32 to vector<1x256xf32>
    %373 = arith.addf %372, %371 : vector<1x256xf32>
    %374 = arith.subf %352, %366 : vector<1x256xf32>
    %cst_140 = arith.constant 1.000000e+00 : f32
    %375 = vector.broadcast %cst_140 : f32 to vector<1x256xf32>
    %376 = arith.subf %375, %374 : vector<1x256xf32>
    %377 = arith.subf %356, %370 : vector<1x256xf32>
    %cst_141 = arith.constant 1.000000e+00 : f32
    %378 = vector.broadcast %cst_141 : f32 to vector<1x256xf32>
    %379 = arith.addf %378, %377 : vector<1x256xf32>
    %380 = arith.subf %362, %370 : vector<1x256xf32>
    %cst_142 = arith.constant 1.000000e+00 : f32
    %381 = vector.broadcast %cst_142 : f32 to vector<1x256xf32>
    %382 = arith.subf %381, %380 : vector<1x256xf32>
    %383 = arith.fptosi %346 : vector<1x256xf32> to vector<1x256xi32>
    %384 = arith.fptosi %352 : vector<1x256xf32> to vector<1x256xi32>
    %385 = arith.fptosi %356 : vector<1x256xf32> to vector<1x256xi32>
    %386 = arith.fptosi %362 : vector<1x256xf32> to vector<1x256xi32>
    %387 = vector.broadcast %383 : vector<1x256xi32> to vector<18x256xi32>
    %388 = arith.cmpi eq, %3, %387 : vector<18x256xi32>
    %cst_143 = arith.constant 0.000000e+00 : f32
    %389 = vector.shape_cast %373 : vector<1x256xf32> to vector<1x256xf32>
    %390 = vector.broadcast %389 : vector<1x256xf32> to vector<18x256xf32>
    %391 = vector.broadcast %cst_143 : f32 to vector<18x256xf32>
    %392 = arith.select %388, %390, %391 : vector<18x256xi1>, vector<18x256xf32>
    %393 = vector.broadcast %384 : vector<1x256xi32> to vector<18x256xi32>
    %394 = arith.cmpi eq, %3, %393 : vector<18x256xi32>
    %cst_144 = arith.constant 0.000000e+00 : f32
    %395 = vector.shape_cast %376 : vector<1x256xf32> to vector<1x256xf32>
    %396 = vector.broadcast %395 : vector<1x256xf32> to vector<18x256xf32>
    %397 = vector.broadcast %cst_144 : f32 to vector<18x256xf32>
    %398 = arith.select %394, %396, %397 : vector<18x256xi1>, vector<18x256xf32>
    %399 = arith.addf %392, %398 : vector<18x256xf32>
    %400 = arith.truncf %399 : vector<18x256xf32> to vector<18x256xbf16>
    %cst_145 = arith.constant dense<0.000000e+00> : vector<72x256xf32>
    %401 = tpu.matmul %1, %400, %cst_145 {dimension_numbers = #tpu.dot_dimension_numbers<[1], [0], [0], [1], [0, 0, 1, 1], [], []>} : vector<72x18xbf16>, vector<18x256xbf16>, vector<72x256xf32> -> vector<72x256xf32>
    %402 = vector.broadcast %385 : vector<1x256xi32> to vector<18x256xi32>
    %403 = arith.cmpi eq, %4, %402 : vector<18x256xi32>
    %cst_146 = arith.constant 0.000000e+00 : f32
    %404 = vector.shape_cast %379 : vector<1x256xf32> to vector<1x256xf32>
    %405 = vector.broadcast %404 : vector<1x256xf32> to vector<18x256xf32>
    %406 = vector.broadcast %cst_146 : f32 to vector<18x256xf32>
    %407 = arith.select %403, %405, %406 : vector<18x256xi1>, vector<18x256xf32>
    %408 = vector.broadcast %386 : vector<1x256xi32> to vector<18x256xi32>
    %409 = arith.cmpi eq, %4, %408 : vector<18x256xi32>
    %cst_147 = arith.constant 0.000000e+00 : f32
    %410 = vector.shape_cast %382 : vector<1x256xf32> to vector<1x256xf32>
    %411 = vector.broadcast %410 : vector<1x256xf32> to vector<18x256xf32>
    %412 = vector.broadcast %cst_147 : f32 to vector<18x256xf32>
    %413 = arith.select %409, %411, %412 : vector<18x256xi1>, vector<18x256xf32>
    %414 = arith.addf %407, %413 : vector<18x256xf32>
    %415 = tpu.concatenate %414, %414, %414, %414 in 0 : vector<18x256xf32>, vector<18x256xf32>, vector<18x256xf32>, vector<18x256xf32> -> vector<72x256xf32>
    %416 = arith.mulf %401, %415 : vector<72x256xf32>
    %cst_148 = arith.constant dense<0.000000e+00> : vector<8x256xf32>
    %417 = tpu.matmul %2, %416, %cst_148 {dimension_numbers = #tpu.dot_dimension_numbers<[1], [0], [0], [1], [0, 0, 1, 1], [], []>} : vector<8x72xf32>, vector<72x256xf32>, vector<8x256xf32> -> vector<8x256xf32>
    %418 = arith.truncf %417 : vector<8x256xf32> to vector<8x256xbf16>
    %c32 = arith.constant 32 : index
    %c0_149 = arith.constant 0 : index
    %419 = vector.load %arg7[%c32, %c0_149] : memref<72x256xbf16, #tpu.memory_space<vmem>>, vector<8x256xbf16>
    tpu.vector_store %arg7[%c32, %c0_149], %418 {strides = array<i32>} : memref<72x256xbf16, #tpu.memory_space<vmem>>, vector<8x256xbf16>,
    %c0_150 = arith.constant 0 : index
    %c5 = arith.constant 5 : index
    %c0_151 = arith.constant 0 : index
    %420 = vector.load %arg3[%c0_150, %c5, %c0_151] : memref<1x18x256xf32, #tpu.memory_space<vmem>>, vector<1x1x256xf32>
    %421 = vector.shape_cast %420 : vector<1x1x256xf32> to vector<1x256xf32>
    %c0_152 = arith.constant 0 : index
    %c14 = arith.constant 14 : index
    %c0_153 = arith.constant 0 : index
    %422 = vector.load %arg3[%c0_152, %c14, %c0_153] : memref<1x18x256xf32, #tpu.memory_space<vmem>>, vector<1x1x256xf32>
    %423 = vector.shape_cast %422 : vector<1x1x256xf32> to vector<1x256xf32>
    %424 = math.floor %421 : vector<1x256xf32>
    %425 = math.floor %423 : vector<1x256xf32>
    %cst_154 = arith.constant 0.000000e+00 : f32
    %cst_155 = arith.constant 1.700000e+01 : f32
    %426 = vector.broadcast %cst_154 : f32 to vector<1x256xf32>
    %427 = arith.maximumf %426, %424 : vector<1x256xf32>
    %428 = vector.broadcast %cst_155 : f32 to vector<1x256xf32>
    %429 = arith.minimumf %428, %427 : vector<1x256xf32>
    %cst_156 = arith.constant 1.000000e+00 : f32
    %430 = vector.broadcast %cst_156 : f32 to vector<1x256xf32>
    %431 = arith.addf %424, %430 : vector<1x256xf32>
    %cst_157 = arith.constant 0.000000e+00 : f32
    %cst_158 = arith.constant 1.700000e+01 : f32
    %432 = vector.broadcast %cst_157 : f32 to vector<1x256xf32>
    %433 = arith.maximumf %432, %431 : vector<1x256xf32>
    %434 = vector.broadcast %cst_158 : f32 to vector<1x256xf32>
    %435 = arith.minimumf %434, %433 : vector<1x256xf32>
    %cst_159 = arith.constant 0.000000e+00 : f32
    %cst_160 = arith.constant 1.700000e+01 : f32
    %436 = vector.broadcast %cst_159 : f32 to vector<1x256xf32>
    %437 = arith.maximumf %436, %425 : vector<1x256xf32>
    %438 = vector.broadcast %cst_160 : f32 to vector<1x256xf32>
    %439 = arith.minimumf %438, %437 : vector<1x256xf32>
    %cst_161 = arith.constant 1.000000e+00 : f32
    %440 = vector.broadcast %cst_161 : f32 to vector<1x256xf32>
    %441 = arith.addf %425, %440 : vector<1x256xf32>
    %cst_162 = arith.constant 0.000000e+00 : f32
    %cst_163 = arith.constant 1.700000e+01 : f32
    %442 = vector.broadcast %cst_162 : f32 to vector<1x256xf32>
    %443 = arith.maximumf %442, %441 : vector<1x256xf32>
    %444 = vector.broadcast %cst_163 : f32 to vector<1x256xf32>
    %445 = arith.minimumf %444, %443 : vector<1x256xf32>
    %cst_164 = arith.constant 0.000000e+00 : f32
    %cst_165 = arith.constant 1.700000e+01 : f32
    %446 = vector.broadcast %cst_164 : f32 to vector<1x256xf32>
    %447 = arith.maximumf %446, %421 : vector<1x256xf32>
    %448 = vector.broadcast %cst_165 : f32 to vector<1x256xf32>
    %449 = arith.minimumf %448, %447 : vector<1x256xf32>
    %cst_166 = arith.constant 0.000000e+00 : f32
    %cst_167 = arith.constant 1.700000e+01 : f32
    %450 = vector.broadcast %cst_166 : f32 to vector<1x256xf32>
    %451 = arith.maximumf %450, %423 : vector<1x256xf32>
    %452 = vector.broadcast %cst_167 : f32 to vector<1x256xf32>
    %453 = arith.minimumf %452, %451 : vector<1x256xf32>
    %454 = arith.subf %429, %449 : vector<1x256xf32>
    %cst_168 = arith.constant 1.000000e+00 : f32
    %455 = vector.broadcast %cst_168 : f32 to vector<1x256xf32>
    %456 = arith.addf %455, %454 : vector<1x256xf32>
    %457 = arith.subf %435, %449 : vector<1x256xf32>
    %cst_169 = arith.constant 1.000000e+00 : f32
    %458 = vector.broadcast %cst_169 : f32 to vector<1x256xf32>
    %459 = arith.subf %458, %457 : vector<1x256xf32>
    %460 = arith.subf %439, %453 : vector<1x256xf32>
    %cst_170 = arith.constant 1.000000e+00 : f32
    %461 = vector.broadcast %cst_170 : f32 to vector<1x256xf32>
    %462 = arith.addf %461, %460 : vector<1x256xf32>
    %463 = arith.subf %445, %453 : vector<1x256xf32>
    %cst_171 = arith.constant 1.000000e+00 : f32
    %464 = vector.broadcast %cst_171 : f32 to vector<1x256xf32>
    %465 = arith.subf %464, %463 : vector<1x256xf32>
    %466 = arith.fptosi %429 : vector<1x256xf32> to vector<1x256xi32>
    %467 = arith.fptosi %435 : vector<1x256xf32> to vector<1x256xi32>
    %468 = arith.fptosi %439 : vector<1x256xf32> to vector<1x256xi32>
    %469 = arith.fptosi %445 : vector<1x256xf32> to vector<1x256xi32>
    %470 = vector.broadcast %466 : vector<1x256xi32> to vector<18x256xi32>
    %471 = arith.cmpi eq, %3, %470 : vector<18x256xi32>
    %cst_172 = arith.constant 0.000000e+00 : f32
    %472 = vector.shape_cast %456 : vector<1x256xf32> to vector<1x256xf32>
    %473 = vector.broadcast %472 : vector<1x256xf32> to vector<18x256xf32>
    %474 = vector.broadcast %cst_172 : f32 to vector<18x256xf32>
    %475 = arith.select %471, %473, %474 : vector<18x256xi1>, vector<18x256xf32>
    %476 = vector.broadcast %467 : vector<1x256xi32> to vector<18x256xi32>
    %477 = arith.cmpi eq, %3, %476 : vector<18x256xi32>
    %cst_173 = arith.constant 0.000000e+00 : f32
    %478 = vector.shape_cast %459 : vector<1x256xf32> to vector<1x256xf32>
    %479 = vector.broadcast %478 : vector<1x256xf32> to vector<18x256xf32>
    %480 = vector.broadcast %cst_173 : f32 to vector<18x256xf32>
    %481 = arith.select %477, %479, %480 : vector<18x256xi1>, vector<18x256xf32>
    %482 = arith.addf %475, %481 : vector<18x256xf32>
    %483 = arith.truncf %482 : vector<18x256xf32> to vector<18x256xbf16>
    %cst_174 = arith.constant dense<0.000000e+00> : vector<72x256xf32>
    %484 = tpu.matmul %1, %483, %cst_174 {dimension_numbers = #tpu.dot_dimension_numbers<[1], [0], [0], [1], [0, 0, 1, 1], [], []>} : vector<72x18xbf16>, vector<18x256xbf16>, vector<72x256xf32> -> vector<72x256xf32>
    %485 = vector.broadcast %468 : vector<1x256xi32> to vector<18x256xi32>
    %486 = arith.cmpi eq, %4, %485 : vector<18x256xi32>
    %cst_175 = arith.constant 0.000000e+00 : f32
    %487 = vector.shape_cast %462 : vector<1x256xf32> to vector<1x256xf32>
    %488 = vector.broadcast %487 : vector<1x256xf32> to vector<18x256xf32>
    %489 = vector.broadcast %cst_175 : f32 to vector<18x256xf32>
    %490 = arith.select %486, %488, %489 : vector<18x256xi1>, vector<18x256xf32>
    %491 = vector.broadcast %469 : vector<1x256xi32> to vector<18x256xi32>
    %492 = arith.cmpi eq, %4, %491 : vector<18x256xi32>
    %cst_176 = arith.constant 0.000000e+00 : f32
    %493 = vector.shape_cast %465 : vector<1x256xf32> to vector<1x256xf32>
    %494 = vector.broadcast %493 : vector<1x256xf32> to vector<18x256xf32>
    %495 = vector.broadcast %cst_176 : f32 to vector<18x256xf32>
    %496 = arith.select %492, %494, %495 : vector<18x256xi1>, vector<18x256xf32>
    %497 = arith.addf %490, %496 : vector<18x256xf32>
    %498 = tpu.concatenate %497, %497, %497, %497 in 0 : vector<18x256xf32>, vector<18x256xf32>, vector<18x256xf32>, vector<18x256xf32> -> vector<72x256xf32>
    %499 = arith.mulf %484, %498 : vector<72x256xf32>
    %cst_177 = arith.constant dense<0.000000e+00> : vector<8x256xf32>
    %500 = tpu.matmul %2, %499, %cst_177 {dimension_numbers = #tpu.dot_dimension_numbers<[1], [0], [0], [1], [0, 0, 1, 1], [], []>} : vector<8x72xf32>, vector<72x256xf32>, vector<8x256xf32> -> vector<8x256xf32>
    %501 = arith.truncf %500 : vector<8x256xf32> to vector<8x256xbf16>
    %c40 = arith.constant 40 : index
    %c0_178 = arith.constant 0 : index
    %502 = vector.load %arg7[%c40, %c0_178] : memref<72x256xbf16, #tpu.memory_space<vmem>>, vector<8x256xbf16>
    tpu.vector_store %arg7[%c40, %c0_178], %501 {strides = array<i32>} : memref<72x256xbf16, #tpu.memory_space<vmem>>, vector<8x256xbf16>,
    %c0_179 = arith.constant 0 : index
    %c6 = arith.constant 6 : index
    %c0_180 = arith.constant 0 : index
    %503 = vector.load %arg3[%c0_179, %c6, %c0_180] : memref<1x18x256xf32, #tpu.memory_space<vmem>>, vector<1x1x256xf32>
    %504 = vector.shape_cast %503 : vector<1x1x256xf32> to vector<1x256xf32>
    %c0_181 = arith.constant 0 : index
    %c15 = arith.constant 15 : index
    %c0_182 = arith.constant 0 : index
    %505 = vector.load %arg3[%c0_181, %c15, %c0_182] : memref<1x18x256xf32, #tpu.memory_space<vmem>>, vector<1x1x256xf32>
    %506 = vector.shape_cast %505 : vector<1x1x256xf32> to vector<1x256xf32>
    %507 = math.floor %504 : vector<1x256xf32>
    %508 = math.floor %506 : vector<1x256xf32>
    %cst_183 = arith.constant 0.000000e+00 : f32
    %cst_184 = arith.constant 1.700000e+01 : f32
    %509 = vector.broadcast %cst_183 : f32 to vector<1x256xf32>
    %510 = arith.maximumf %509, %507 : vector<1x256xf32>
    %511 = vector.broadcast %cst_184 : f32 to vector<1x256xf32>
    %512 = arith.minimumf %511, %510 : vector<1x256xf32>
    %cst_185 = arith.constant 1.000000e+00 : f32
    %513 = vector.broadcast %cst_185 : f32 to vector<1x256xf32>
    %514 = arith.addf %507, %513 : vector<1x256xf32>
    %cst_186 = arith.constant 0.000000e+00 : f32
    %cst_187 = arith.constant 1.700000e+01 : f32
    %515 = vector.broadcast %cst_186 : f32 to vector<1x256xf32>
    %516 = arith.maximumf %515, %514 : vector<1x256xf32>
    %517 = vector.broadcast %cst_187 : f32 to vector<1x256xf32>
    %518 = arith.minimumf %517, %516 : vector<1x256xf32>
    %cst_188 = arith.constant 0.000000e+00 : f32
    %cst_189 = arith.constant 1.700000e+01 : f32
    %519 = vector.broadcast %cst_188 : f32 to vector<1x256xf32>
    %520 = arith.maximumf %519, %508 : vector<1x256xf32>
    %521 = vector.broadcast %cst_189 : f32 to vector<1x256xf32>
    %522 = arith.minimumf %521, %520 : vector<1x256xf32>
    %cst_190 = arith.constant 1.000000e+00 : f32
    %523 = vector.broadcast %cst_190 : f32 to vector<1x256xf32>
    %524 = arith.addf %508, %523 : vector<1x256xf32>
    %cst_191 = arith.constant 0.000000e+00 : f32
    %cst_192 = arith.constant 1.700000e+01 : f32
    %525 = vector.broadcast %cst_191 : f32 to vector<1x256xf32>
    %526 = arith.maximumf %525, %524 : vector<1x256xf32>
    %527 = vector.broadcast %cst_192 : f32 to vector<1x256xf32>
    %528 = arith.minimumf %527, %526 : vector<1x256xf32>
    %cst_193 = arith.constant 0.000000e+00 : f32
    %cst_194 = arith.constant 1.700000e+01 : f32
    %529 = vector.broadcast %cst_193 : f32 to vector<1x256xf32>
    %530 = arith.maximumf %529, %504 : vector<1x256xf32>
    %531 = vector.broadcast %cst_194 : f32 to vector<1x256xf32>
    %532 = arith.minimumf %531, %530 : vector<1x256xf32>
    %cst_195 = arith.constant 0.000000e+00 : f32
    %cst_196 = arith.constant 1.700000e+01 : f32
    %533 = vector.broadcast %cst_195 : f32 to vector<1x256xf32>
    %534 = arith.maximumf %533, %506 : vector<1x256xf32>
    %535 = vector.broadcast %cst_196 : f32 to vector<1x256xf32>
    %536 = arith.minimumf %535, %534 : vector<1x256xf32>
    %537 = arith.subf %512, %532 : vector<1x256xf32>
    %cst_197 = arith.constant 1.000000e+00 : f32
    %538 = vector.broadcast %cst_197 : f32 to vector<1x256xf32>
    %539 = arith.addf %538, %537 : vector<1x256xf32>
    %540 = arith.subf %518, %532 : vector<1x256xf32>
    %cst_198 = arith.constant 1.000000e+00 : f32
    %541 = vector.broadcast %cst_198 : f32 to vector<1x256xf32>
    %542 = arith.subf %541, %540 : vector<1x256xf32>
    %543 = arith.subf %522, %536 : vector<1x256xf32>
    %cst_199 = arith.constant 1.000000e+00 : f32
    %544 = vector.broadcast %cst_199 : f32 to vector<1x256xf32>
    %545 = arith.addf %544, %543 : vector<1x256xf32>
    %546 = arith.subf %528, %536 : vector<1x256xf32>
    %cst_200 = arith.constant 1.000000e+00 : f32
    %547 = vector.broadcast %cst_200 : f32 to vector<1x256xf32>
    %548 = arith.subf %547, %546 : vector<1x256xf32>
    %549 = arith.fptosi %512 : vector<1x256xf32> to vector<1x256xi32>
    %550 = arith.fptosi %518 : vector<1x256xf32> to vector<1x256xi32>
    %551 = arith.fptosi %522 : vector<1x256xf32> to vector<1x256xi32>
    %552 = arith.fptosi %528 : vector<1x256xf32> to vector<1x256xi32>
    %553 = vector.broadcast %549 : vector<1x256xi32> to vector<18x256xi32>
    %554 = arith.cmpi eq, %3, %553 : vector<18x256xi32>
    %cst_201 = arith.constant 0.000000e+00 : f32
    %555 = vector.shape_cast %539 : vector<1x256xf32> to vector<1x256xf32>
    %556 = vector.broadcast %555 : vector<1x256xf32> to vector<18x256xf32>
    %557 = vector.broadcast %cst_201 : f32 to vector<18x256xf32>
    %558 = arith.select %554, %556, %557 : vector<18x256xi1>, vector<18x256xf32>
    %559 = vector.broadcast %550 : vector<1x256xi32> to vector<18x256xi32>
    %560 = arith.cmpi eq, %3, %559 : vector<18x256xi32>
    %cst_202 = arith.constant 0.000000e+00 : f32
    %561 = vector.shape_cast %542 : vector<1x256xf32> to vector<1x256xf32>
    %562 = vector.broadcast %561 : vector<1x256xf32> to vector<18x256xf32>
    %563 = vector.broadcast %cst_202 : f32 to vector<18x256xf32>
    %564 = arith.select %560, %562, %563 : vector<18x256xi1>, vector<18x256xf32>
    %565 = arith.addf %558, %564 : vector<18x256xf32>
    %566 = arith.truncf %565 : vector<18x256xf32> to vector<18x256xbf16>
    %cst_203 = arith.constant dense<0.000000e+00> : vector<72x256xf32>
    %567 = tpu.matmul %1, %566, %cst_203 {dimension_numbers = #tpu.dot_dimension_numbers<[1], [0], [0], [1], [0, 0, 1, 1], [], []>} : vector<72x18xbf16>, vector<18x256xbf16>, vector<72x256xf32> -> vector<72x256xf32>
    %568 = vector.broadcast %551 : vector<1x256xi32> to vector<18x256xi32>
    %569 = arith.cmpi eq, %4, %568 : vector<18x256xi32>
    %cst_204 = arith.constant 0.000000e+00 : f32
    %570 = vector.shape_cast %545 : vector<1x256xf32> to vector<1x256xf32>
    %571 = vector.broadcast %570 : vector<1x256xf32> to vector<18x256xf32>
    %572 = vector.broadcast %cst_204 : f32 to vector<18x256xf32>
    %573 = arith.select %569, %571, %572 : vector<18x256xi1>, vector<18x256xf32>
    %574 = vector.broadcast %552 : vector<1x256xi32> to vector<18x256xi32>
    %575 = arith.cmpi eq, %4, %574 : vector<18x256xi32>
    %cst_205 = arith.constant 0.000000e+00 : f32
    %576 = vector.shape_cast %548 : vector<1x256xf32> to vector<1x256xf32>
    %577 = vector.broadcast %576 : vector<1x256xf32> to vector<18x256xf32>
    %578 = vector.broadcast %cst_205 : f32 to vector<18x256xf32>
    %579 = arith.select %575, %577, %578 : vector<18x256xi1>, vector<18x256xf32>
    %580 = arith.addf %573, %579 : vector<18x256xf32>
    %581 = tpu.concatenate %580, %580, %580, %580 in 0 : vector<18x256xf32>, vector<18x256xf32>, vector<18x256xf32>, vector<18x256xf32> -> vector<72x256xf32>
    %582 = arith.mulf %567, %581 : vector<72x256xf32>
    %cst_206 = arith.constant dense<0.000000e+00> : vector<8x256xf32>
    %583 = tpu.matmul %2, %582, %cst_206 {dimension_numbers = #tpu.dot_dimension_numbers<[1], [0], [0], [1], [0, 0, 1, 1], [], []>} : vector<8x72xf32>, vector<72x256xf32>, vector<8x256xf32> -> vector<8x256xf32>
    %584 = arith.truncf %583 : vector<8x256xf32> to vector<8x256xbf16>
    %c48 = arith.constant 48 : index
    %c0_207 = arith.constant 0 : index
    %585 = vector.load %arg7[%c48, %c0_207] : memref<72x256xbf16, #tpu.memory_space<vmem>>, vector<8x256xbf16>
    tpu.vector_store %arg7[%c48, %c0_207], %584 {strides = array<i32>} : memref<72x256xbf16, #tpu.memory_space<vmem>>, vector<8x256xbf16>,
    %c0_208 = arith.constant 0 : index
    %c7 = arith.constant 7 : index
    %c0_209 = arith.constant 0 : index
    %586 = vector.load %arg3[%c0_208, %c7, %c0_209] : memref<1x18x256xf32, #tpu.memory_space<vmem>>, vector<1x1x256xf32>
    %587 = vector.shape_cast %586 : vector<1x1x256xf32> to vector<1x256xf32>
    %c0_210 = arith.constant 0 : index
    %c16_211 = arith.constant 16 : index
    %c0_212 = arith.constant 0 : index
    %588 = vector.load %arg3[%c0_210, %c16_211, %c0_212] : memref<1x18x256xf32, #tpu.memory_space<vmem>>, vector<1x1x256xf32>
    %589 = vector.shape_cast %588 : vector<1x1x256xf32> to vector<1x256xf32>
    %590 = math.floor %587 : vector<1x256xf32>
    %591 = math.floor %589 : vector<1x256xf32>
    %cst_213 = arith.constant 0.000000e+00 : f32
    %cst_214 = arith.constant 1.700000e+01 : f32
    %592 = vector.broadcast %cst_213 : f32 to vector<1x256xf32>
    %593 = arith.maximumf %592, %590 : vector<1x256xf32>
    %594 = vector.broadcast %cst_214 : f32 to vector<1x256xf32>
    %595 = arith.minimumf %594, %593 : vector<1x256xf32>
    %cst_215 = arith.constant 1.000000e+00 : f32
    %596 = vector.broadcast %cst_215 : f32 to vector<1x256xf32>
    %597 = arith.addf %590, %596 : vector<1x256xf32>
    %cst_216 = arith.constant 0.000000e+00 : f32
    %cst_217 = arith.constant 1.700000e+01 : f32
    %598 = vector.broadcast %cst_216 : f32 to vector<1x256xf32>
    %599 = arith.maximumf %598, %597 : vector<1x256xf32>
    %600 = vector.broadcast %cst_217 : f32 to vector<1x256xf32>
    %601 = arith.minimumf %600, %599 : vector<1x256xf32>
    %cst_218 = arith.constant 0.000000e+00 : f32
    %cst_219 = arith.constant 1.700000e+01 : f32
    %602 = vector.broadcast %cst_218 : f32 to vector<1x256xf32>
    %603 = arith.maximumf %602, %591 : vector<1x256xf32>
    %604 = vector.broadcast %cst_219 : f32 to vector<1x256xf32>
    %605 = arith.minimumf %604, %603 : vector<1x256xf32>
    %cst_220 = arith.constant 1.000000e+00 : f32
    %606 = vector.broadcast %cst_220 : f32 to vector<1x256xf32>
    %607 = arith.addf %591, %606 : vector<1x256xf32>
    %cst_221 = arith.constant 0.000000e+00 : f32
    %cst_222 = arith.constant 1.700000e+01 : f32
    %608 = vector.broadcast %cst_221 : f32 to vector<1x256xf32>
    %609 = arith.maximumf %608, %607 : vector<1x256xf32>
    %610 = vector.broadcast %cst_222 : f32 to vector<1x256xf32>
    %611 = arith.minimumf %610, %609 : vector<1x256xf32>
    %cst_223 = arith.constant 0.000000e+00 : f32
    %cst_224 = arith.constant 1.700000e+01 : f32
    %612 = vector.broadcast %cst_223 : f32 to vector<1x256xf32>
    %613 = arith.maximumf %612, %587 : vector<1x256xf32>
    %614 = vector.broadcast %cst_224 : f32 to vector<1x256xf32>
    %615 = arith.minimumf %614, %613 : vector<1x256xf32>
    %cst_225 = arith.constant 0.000000e+00 : f32
    %cst_226 = arith.constant 1.700000e+01 : f32
    %616 = vector.broadcast %cst_225 : f32 to vector<1x256xf32>
    %617 = arith.maximumf %616, %589 : vector<1x256xf32>
    %618 = vector.broadcast %cst_226 : f32 to vector<1x256xf32>
    %619 = arith.minimumf %618, %617 : vector<1x256xf32>
    %620 = arith.subf %595, %615 : vector<1x256xf32>
    %cst_227 = arith.constant 1.000000e+00 : f32
    %621 = vector.broadcast %cst_227 : f32 to vector<1x256xf32>
    %622 = arith.addf %621, %620 : vector<1x256xf32>
    %623 = arith.subf %601, %615 : vector<1x256xf32>
    %cst_228 = arith.constant 1.000000e+00 : f32
    %624 = vector.broadcast %cst_228 : f32 to vector<1x256xf32>
    %625 = arith.subf %624, %623 : vector<1x256xf32>
    %626 = arith.subf %605, %619 : vector<1x256xf32>
    %cst_229 = arith.constant 1.000000e+00 : f32
    %627 = vector.broadcast %cst_229 : f32 to vector<1x256xf32>
    %628 = arith.addf %627, %626 : vector<1x256xf32>
    %629 = arith.subf %611, %619 : vector<1x256xf32>
    %cst_230 = arith.constant 1.000000e+00 : f32
    %630 = vector.broadcast %cst_230 : f32 to vector<1x256xf32>
    %631 = arith.subf %630, %629 : vector<1x256xf32>
    %632 = arith.fptosi %595 : vector<1x256xf32> to vector<1x256xi32>
    %633 = arith.fptosi %601 : vector<1x256xf32> to vector<1x256xi32>
    %634 = arith.fptosi %605 : vector<1x256xf32> to vector<1x256xi32>
    %635 = arith.fptosi %611 : vector<1x256xf32> to vector<1x256xi32>
    %636 = vector.broadcast %632 : vector<1x256xi32> to vector<18x256xi32>
    %637 = arith.cmpi eq, %3, %636 : vector<18x256xi32>
    %cst_231 = arith.constant 0.000000e+00 : f32
    %638 = vector.shape_cast %622 : vector<1x256xf32> to vector<1x256xf32>
    %639 = vector.broadcast %638 : vector<1x256xf32> to vector<18x256xf32>
    %640 = vector.broadcast %cst_231 : f32 to vector<18x256xf32>
    %641 = arith.select %637, %639, %640 : vector<18x256xi1>, vector<18x256xf32>
    %642 = vector.broadcast %633 : vector<1x256xi32> to vector<18x256xi32>
    %643 = arith.cmpi eq, %3, %642 : vector<18x256xi32>
    %cst_232 = arith.constant 0.000000e+00 : f32
    %644 = vector.shape_cast %625 : vector<1x256xf32> to vector<1x256xf32>
    %645 = vector.broadcast %644 : vector<1x256xf32> to vector<18x256xf32>
    %646 = vector.broadcast %cst_232 : f32 to vector<18x256xf32>
    %647 = arith.select %643, %645, %646 : vector<18x256xi1>, vector<18x256xf32>
    %648 = arith.addf %641, %647 : vector<18x256xf32>
    %649 = arith.truncf %648 : vector<18x256xf32> to vector<18x256xbf16>
    %cst_233 = arith.constant dense<0.000000e+00> : vector<72x256xf32>
    %650 = tpu.matmul %1, %649, %cst_233 {dimension_numbers = #tpu.dot_dimension_numbers<[1], [0], [0], [1], [0, 0, 1, 1], [], []>} : vector<72x18xbf16>, vector<18x256xbf16>, vector<72x256xf32> -> vector<72x256xf32>
    %651 = vector.broadcast %634 : vector<1x256xi32> to vector<18x256xi32>
    %652 = arith.cmpi eq, %4, %651 : vector<18x256xi32>
    %cst_234 = arith.constant 0.000000e+00 : f32
    %653 = vector.shape_cast %628 : vector<1x256xf32> to vector<1x256xf32>
    %654 = vector.broadcast %653 : vector<1x256xf32> to vector<18x256xf32>
    %655 = vector.broadcast %cst_234 : f32 to vector<18x256xf32>
    %656 = arith.select %652, %654, %655 : vector<18x256xi1>, vector<18x256xf32>
    %657 = vector.broadcast %635 : vector<1x256xi32> to vector<18x256xi32>
    %658 = arith.cmpi eq, %4, %657 : vector<18x256xi32>
    %cst_235 = arith.constant 0.000000e+00 : f32
    %659 = vector.shape_cast %631 : vector<1x256xf32> to vector<1x256xf32>
    %660 = vector.broadcast %659 : vector<1x256xf32> to vector<18x256xf32>
    %661 = vector.broadcast %cst_235 : f32 to vector<18x256xf32>
    %662 = arith.select %658, %660, %661 : vector<18x256xi1>, vector<18x256xf32>
    %663 = arith.addf %656, %662 : vector<18x256xf32>
    %664 = tpu.concatenate %663, %663, %663, %663 in 0 : vector<18x256xf32>, vector<18x256xf32>, vector<18x256xf32>, vector<18x256xf32> -> vector<72x256xf32>
    %665 = arith.mulf %650, %664 : vector<72x256xf32>
    %cst_236 = arith.constant dense<0.000000e+00> : vector<8x256xf32>
    %666 = tpu.matmul %2, %665, %cst_236 {dimension_numbers = #tpu.dot_dimension_numbers<[1], [0], [0], [1], [0, 0, 1, 1], [], []>} : vector<8x72xf32>, vector<72x256xf32>, vector<8x256xf32> -> vector<8x256xf32>
    %667 = arith.truncf %666 : vector<8x256xf32> to vector<8x256xbf16>
    %c56 = arith.constant 56 : index
    %c0_237 = arith.constant 0 : index
    %668 = vector.load %arg7[%c56, %c0_237] : memref<72x256xbf16, #tpu.memory_space<vmem>>, vector<8x256xbf16>
    tpu.vector_store %arg7[%c56, %c0_237], %667 {strides = array<i32>} : memref<72x256xbf16, #tpu.memory_space<vmem>>, vector<8x256xbf16>,
    %c0_238 = arith.constant 0 : index
    %c8_239 = arith.constant 8 : index
    %c0_240 = arith.constant 0 : index
    %669 = vector.load %arg3[%c0_238, %c8_239, %c0_240] : memref<1x18x256xf32, #tpu.memory_space<vmem>>, vector<1x1x256xf32>
    %670 = vector.shape_cast %669 : vector<1x1x256xf32> to vector<1x256xf32>
    %c0_241 = arith.constant 0 : index
    %c17 = arith.constant 17 : index
    %c0_242 = arith.constant 0 : index
    %671 = vector.load %arg3[%c0_241, %c17, %c0_242] : memref<1x18x256xf32, #tpu.memory_space<vmem>>, vector<1x1x256xf32>
    %672 = vector.shape_cast %671 : vector<1x1x256xf32> to vector<1x256xf32>
    %673 = math.floor %670 : vector<1x256xf32>
    %674 = math.floor %672 : vector<1x256xf32>
    %cst_243 = arith.constant 0.000000e+00 : f32
    %cst_244 = arith.constant 1.700000e+01 : f32
    %675 = vector.broadcast %cst_243 : f32 to vector<1x256xf32>
    %676 = arith.maximumf %675, %673 : vector<1x256xf32>
    %677 = vector.broadcast %cst_244 : f32 to vector<1x256xf32>
    %678 = arith.minimumf %677, %676 : vector<1x256xf32>
    %cst_245 = arith.constant 1.000000e+00 : f32
    %679 = vector.broadcast %cst_245 : f32 to vector<1x256xf32>
    %680 = arith.addf %673, %679 : vector<1x256xf32>
    %cst_246 = arith.constant 0.000000e+00 : f32
    %cst_247 = arith.constant 1.700000e+01 : f32
    %681 = vector.broadcast %cst_246 : f32 to vector<1x256xf32>
    %682 = arith.maximumf %681, %680 : vector<1x256xf32>
    %683 = vector.broadcast %cst_247 : f32 to vector<1x256xf32>
    %684 = arith.minimumf %683, %682 : vector<1x256xf32>
    %cst_248 = arith.constant 0.000000e+00 : f32
    %cst_249 = arith.constant 1.700000e+01 : f32
    %685 = vector.broadcast %cst_248 : f32 to vector<1x256xf32>
    %686 = arith.maximumf %685, %674 : vector<1x256xf32>
    %687 = vector.broadcast %cst_249 : f32 to vector<1x256xf32>
    %688 = arith.minimumf %687, %686 : vector<1x256xf32>
    %cst_250 = arith.constant 1.000000e+00 : f32
    %689 = vector.broadcast %cst_250 : f32 to vector<1x256xf32>
    %690 = arith.addf %674, %689 : vector<1x256xf32>
    %cst_251 = arith.constant 0.000000e+00 : f32
    %cst_252 = arith.constant 1.700000e+01 : f32
    %691 = vector.broadcast %cst_251 : f32 to vector<1x256xf32>
    %692 = arith.maximumf %691, %690 : vector<1x256xf32>
    %693 = vector.broadcast %cst_252 : f32 to vector<1x256xf32>
    %694 = arith.minimumf %693, %692 : vector<1x256xf32>
    %cst_253 = arith.constant 0.000000e+00 : f32
    %cst_254 = arith.constant 1.700000e+01 : f32
    %695 = vector.broadcast %cst_253 : f32 to vector<1x256xf32>
    %696 = arith.maximumf %695, %670 : vector<1x256xf32>
    %697 = vector.broadcast %cst_254 : f32 to vector<1x256xf32>
    %698 = arith.minimumf %697, %696 : vector<1x256xf32>
    %cst_255 = arith.constant 0.000000e+00 : f32
    %cst_256 = arith.constant 1.700000e+01 : f32
    %699 = vector.broadcast %cst_255 : f32 to vector<1x256xf32>
    %700 = arith.maximumf %699, %672 : vector<1x256xf32>
    %701 = vector.broadcast %cst_256 : f32 to vector<1x256xf32>
    %702 = arith.minimumf %701, %700 : vector<1x256xf32>
    %703 = arith.subf %678, %698 : vector<1x256xf32>
    %cst_257 = arith.constant 1.000000e+00 : f32
    %704 = vector.broadcast %cst_257 : f32 to vector<1x256xf32>
    %705 = arith.addf %704, %703 : vector<1x256xf32>
    %706 = arith.subf %684, %698 : vector<1x256xf32>
    %cst_258 = arith.constant 1.000000e+00 : f32
    %707 = vector.broadcast %cst_258 : f32 to vector<1x256xf32>
    %708 = arith.subf %707, %706 : vector<1x256xf32>
    %709 = arith.subf %688, %702 : vector<1x256xf32>
    %cst_259 = arith.constant 1.000000e+00 : f32
    %710 = vector.broadcast %cst_259 : f32 to vector<1x256xf32>
    %711 = arith.addf %710, %709 : vector<1x256xf32>
    %712 = arith.subf %694, %702 : vector<1x256xf32>
    %cst_260 = arith.constant 1.000000e+00 : f32
    %713 = vector.broadcast %cst_260 : f32 to vector<1x256xf32>
    %714 = arith.subf %713, %712 : vector<1x256xf32>
    %715 = arith.fptosi %678 : vector<1x256xf32> to vector<1x256xi32>
    %716 = arith.fptosi %684 : vector<1x256xf32> to vector<1x256xi32>
    %717 = arith.fptosi %688 : vector<1x256xf32> to vector<1x256xi32>
    %718 = arith.fptosi %694 : vector<1x256xf32> to vector<1x256xi32>
    %719 = vector.broadcast %715 : vector<1x256xi32> to vector<18x256xi32>
    %720 = arith.cmpi eq, %3, %719 : vector<18x256xi32>
    %cst_261 = arith.constant 0.000000e+00 : f32
    %721 = vector.shape_cast %705 : vector<1x256xf32> to vector<1x256xf32>
    %722 = vector.broadcast %721 : vector<1x256xf32> to vector<18x256xf32>
    %723 = vector.broadcast %cst_261 : f32 to vector<18x256xf32>
    %724 = arith.select %720, %722, %723 : vector<18x256xi1>, vector<18x256xf32>
    %725 = vector.broadcast %716 : vector<1x256xi32> to vector<18x256xi32>
    %726 = arith.cmpi eq, %3, %725 : vector<18x256xi32>
    %cst_262 = arith.constant 0.000000e+00 : f32
    %727 = vector.shape_cast %708 : vector<1x256xf32> to vector<1x256xf32>
    %728 = vector.broadcast %727 : vector<1x256xf32> to vector<18x256xf32>
    %729 = vector.broadcast %cst_262 : f32 to vector<18x256xf32>
    %730 = arith.select %726, %728, %729 : vector<18x256xi1>, vector<18x256xf32>
    %731 = arith.addf %724, %730 : vector<18x256xf32>
    %732 = arith.truncf %731 : vector<18x256xf32> to vector<18x256xbf16>
    %cst_263 = arith.constant dense<0.000000e+00> : vector<72x256xf32>
    %733 = tpu.matmul %1, %732, %cst_263 {dimension_numbers = #tpu.dot_dimension_numbers<[1], [0], [0], [1], [0, 0, 1, 1], [], []>} : vector<72x18xbf16>, vector<18x256xbf16>, vector<72x256xf32> -> vector<72x256xf32>
    %734 = vector.broadcast %717 : vector<1x256xi32> to vector<18x256xi32>
    %735 = arith.cmpi eq, %4, %734 : vector<18x256xi32>
    %cst_264 = arith.constant 0.000000e+00 : f32
    %736 = vector.shape_cast %711 : vector<1x256xf32> to vector<1x256xf32>
    %737 = vector.broadcast %736 : vector<1x256xf32> to vector<18x256xf32>
    %738 = vector.broadcast %cst_264 : f32 to vector<18x256xf32>
    %739 = arith.select %735, %737, %738 : vector<18x256xi1>, vector<18x256xf32>
    %740 = vector.broadcast %718 : vector<1x256xi32> to vector<18x256xi32>
    %741 = arith.cmpi eq, %4, %740 : vector<18x256xi32>
    %cst_265 = arith.constant 0.000000e+00 : f32
    %742 = vector.shape_cast %714 : vector<1x256xf32> to vector<1x256xf32>
    %743 = vector.broadcast %742 : vector<1x256xf32> to vector<18x256xf32>
    %744 = vector.broadcast %cst_265 : f32 to vector<18x256xf32>
    %745 = arith.select %741, %743, %744 : vector<18x256xi1>, vector<18x256xf32>
    %746 = arith.addf %739, %745 : vector<18x256xf32>
    %747 = tpu.concatenate %746, %746, %746, %746 in 0 : vector<18x256xf32>, vector<18x256xf32>, vector<18x256xf32>, vector<18x256xf32> -> vector<72x256xf32>
    %748 = arith.mulf %733, %747 : vector<72x256xf32>
    %cst_266 = arith.constant dense<0.000000e+00> : vector<8x256xf32>
    %749 = tpu.matmul %2, %748, %cst_266 {dimension_numbers = #tpu.dot_dimension_numbers<[1], [0], [0], [1], [0, 0, 1, 1], [], []>} : vector<8x72xf32>, vector<72x256xf32>, vector<8x256xf32> -> vector<8x256xf32>
    %750 = arith.truncf %749 : vector<8x256xf32> to vector<8x256xbf16>
    %c64 = arith.constant 64 : index
    %c0_267 = arith.constant 0 : index
    %751 = vector.load %arg7[%c64, %c0_267] : memref<72x256xbf16, #tpu.memory_space<vmem>>, vector<8x256xbf16>
    tpu.vector_store %arg7[%c64, %c0_267], %750 {strides = array<i32>} : memref<72x256xbf16, #tpu.memory_space<vmem>>, vector<8x256xbf16>,
    %c0_268 = arith.constant 0 : index
    %c0_269 = arith.constant 0 : index
    %752 = vector.load %arg4[%c0_268, %c0_269] : memref<8x72xbf16, #tpu.memory_space<vmem>>, vector<8x72xbf16>
    %c0_270 = arith.constant 0 : index
    %c0_271 = arith.constant 0 : index
    %753 = vector.load %arg7[%c0_270, %c0_271] : memref<72x256xbf16, #tpu.memory_space<vmem>>, vector<72x256xbf16>
    %cst_272 = arith.constant dense<0.000000e+00> : vector<8x256xf32>
    %754 = tpu.matmul %752, %753, %cst_272 {dimension_numbers = #tpu.dot_dimension_numbers<[1], [0], [0], [1], [0, 0, 1, 1], [], []>} : vector<8x72xbf16>, vector<72x256xbf16>, vector<8x256xf32> -> vector<8x256xf32>
    %c0_273 = arith.constant 0 : index
    %c0_274 = arith.constant 0 : index
    %c0_275 = arith.constant 0 : index
    %755 = vector.load %arg6[%c0_273, %c0_274, %c0_275] : memref<1x8x256xf32, #tpu.memory_space<vmem>>, vector<1x8x256xf32>
    %756 = vector.shape_cast %755 : vector<1x8x256xf32> to vector<8x256xf32>
    %757 = vector.shape_cast %754 : vector<8x256xf32> to vector<1x8x256xf32>
    tpu.vector_store %arg6[%c0_273, %c0_274, %c0_275], %757 {strides = array<i32>} : memref<1x8x256xf32, #tpu.memory_space<vmem>>, vector<1x8x256xf32>,
    return
  }
  func.func @transform_0(%arg0: i32, %arg1: i32) -> (i32, i32, i32) {
    %c0_i32 = arith.constant 0 : i32
    %c0_i32_0 = arith.constant 0 : i32
    %c0_i32_1 = arith.constant 0 : i32
    return %arg0, %c0_i32, %c0_i32_0 : i32, i32, i32
  }
  func.func @transform_1(%arg0: i32, %arg1: i32) -> (i32, i32, i32) {
    %c0_i32 = arith.constant 0 : i32
    %c0_i32_0 = arith.constant 0 : i32
    return %arg0, %c0_i32, %arg1 : i32, i32, i32
  }
  func.func @transform_2(%arg0: i32, %arg1: i32) -> (i32, i32) {
    %c0_i32 = arith.constant 0 : i32
    %c0_i32_0 = arith.constant 0 : i32
    %c0_i32_1 = arith.constant 0 : i32
    return %c0_i32, %c0_i32_0 : i32, i32
  }
  func.func @transform_3(%arg0: i32, %arg1: i32) -> (i32, i32) {
    %c0_i32 = arith.constant 0 : i32
    %c0_i32_0 = arith.constant 0 : i32
    %c0_i32_1 = arith.constant 0 : i32
    return %c0_i32, %c0_i32_0 : i32, i32
  }
  func.func @transform_4(%arg0: i32, %arg1: i32) -> (i32, i32, i32) {
    %c0_i32 = arith.constant 0 : i32
    %c0_i32_0 = arith.constant 0 : i32
    return %arg0, %c0_i32, %arg1 : i32, i32, i32
  }
}

</mosaic_0001>

<llo_original>
// kernel: tpu_custom_call.1
$region0: #{tpu_custom_call.1}
  #allocation0 [shape = 'u32[]', space=smem, size = 0x4, offset = 0x4, fixed_abs, tag = 'smem constant byte address 0x4 - core index']
  #allocation1 [shape = 'u32[144,128]{1,0:T(1,128)}', space=vmem, size = 0x12000, scoped, tag = 'internal scratch']
  #allocation2 [shape = 'bf16[72,256]{1,0:T(8,128)(2,1)}', space=vmem, size = 0x9000, scoped, tag = 'scratch operand']
  %s0 = inlined_call_operand.vmem [shape: bf16[2,72,18], index: 0, kind: input, shape index: {}]
  %s1 = inlined_call_operand.vmem [shape: f32[2,18,256], index: 1, kind: input, shape index: {}]
  %s2 = inlined_call_operand.vmem [shape: bf16[8,72], index: 2, kind: input, shape index: {}]
  %s3 = inlined_call_operand.vmem [shape: f32[8,72], index: 3, kind: input, shape index: {}]
  %s4 = inlined_call_operand.hbm [shape: f32[2,8,256], index: 4, kind: output, shape index: {}]
  %s5 = sld [smem:[#allocation0]]
  $region49: #{tpu_custom_call.1} parent=0
    _
  %s7 = ssub.s32 1, %s5
  %s8 = scalar_select 0, %s7, %s5
  $region1: #{tpu_custom_call.1} parent=0
    #allocation3 [shape = 'u8[16384]{0}', space=vmem, size = 0x4000, scoped, tag = 'output window, operand 0']
    #allocation4 [shape = 's32[2]{0}', space=sflag, size = 0x8, scoped, tag = 'scoped memory for tpu_custom_call.1']
    %9 = vsyncpa [#allocation4], 0
    %s10 = scalar_lea.sflag [#allocation4], 1
    %11 = vsyncpa %s10, 0
    loop: start=0, step=1, limit=4
    $region2: #{tpu_custom_call.1} parent=1 // loop_pre_header
      _
    $region3: #{tpu_custom_call.1} parent=1 // loop_header
      %s13 = sphi 0, %s17
      %p14 = scmp.ge.s32.totalorder %s13, 4
      %s20 = sphi 0, %s32
      %s21 = sphi 0, %s28
      %s22 = sphi 0, %s20
      %s23 = sphi 0, %s21
      %s24 = sphi 0, %s22
      %s25 = sphi 0, %s23
      %s35 = sphi 0, %s37
      %s38 = sphi 0, %s35
      %s39 = sphi 0, %s38
      %s55 = sphi 0, %s39
      %s63 = sphi 0, %s65
      %s66 = sphi 0, %s63
      %s67 = sphi 0, %s66
      %s83 = sphi 0, %s67
      %s87 = sphi 0, %s87
      %s89 = sphi 0, %s87
      %s90 = sphi 0, %s89
      %s104 = sphi 0, %s90
      %s108 = sphi 0, %s108
      %s110 = sphi 0, %s108
      %s111 = sphi 0, %s110
      %s125 = sphi 0, %s111
      %s133 = sphi 0, %s135
      %s136 = sphi 0, %s133
      %s137 = sphi 0, %s136
      %s153 = sphi 0, %s137
    $region4: #{tpu_custom_call.1} parent=1 // loop_header_branch
      %16 = sbr.rel (%p14) target = $region8
    $region5: #{tpu_custom_call.1} parent=1 // loop_body
      %s18 = ssub.s32 %s13, 1
      %s19 = ssub.s32 %s13, 2
      %s26 = sadd.s32 1, %s21
      %p27 = scmp.ge.s32.totalorder %s26, 1
      %s28 = scalar_select %p27, 0, %s26
      %s29 = sadd.s32 1, %s20
      %s30 = scalar_select %p27, %s29, %s20
      %p31 = scmp.ge.s32.totalorder %s30, 2
      %s32 = scalar_select %p31, 0, %s30
      %s33 = ssub.s32 %s20, %s32
      %p34 = scmp.eq.s32.totalorder %s33, 0
      %s36 = sadd.s32 %s35, 1
      %s37 = scalar_select %p34, %s35, %s36
      %p40 = pneg %p34
      %p41 = scmp.eq.s32.totalorder %s13, 1
      %p42 = por %p40, %p41
      %p43 = scmp.ne.s32.totalorder %s35, %s38
      %p44 = scmp.eq.s32.totalorder %s13, 0
      %p45 = por %p43, %p44
      %p46 = scmp.ne.s32.totalorder %s35, %s38
      %p47 = scmp.eq.s32.totalorder %s18, 1
      %p48 = por %p46, %p47
      %p49 = scmp.ne.s32.totalorder %s38, %s39
      %p50 = scmp.eq.s32.totalorder %s18, 0
      %p51 = por %p49, %p50
      %p52 = scmp.ne.s32.totalorder %s38, %s39
      %p53 = scmp.eq.s32.totalorder %s19, 1
      %p54 = por %p52, %p53
      %p56 = scmp.ne.s32.totalorder %s39, %s55
      %p57 = scmp.eq.s32.totalorder %s19, 0
      %p58 = por %p56, %p57
      %s59 = ssub.s32 %s20, %s32
      %s60 = ssub.s32 %s21, %s28
      %s61 = sor.u32 %s59, %s60
      %p62 = scmp.eq.s32.totalorder %s61, 0
      %s64 = sadd.s32 %s63, 1
      %s65 = scalar_select %p62, %s63, %s64
      %p68 = pneg %p62
      %p69 = scmp.eq.s32.totalorder %s13, 1
      %p70 = por %p68, %p69
      %p71 = scmp.ne.s32.totalorder %s63, %s66
      %p72 = scmp.eq.s32.totalorder %s13, 0
      %p73 = por %p71, %p72
      %p74 = scmp.ne.s32.totalorder %s63, %s66
      %p75 = scmp.eq.s32.totalorder %s18, 1
      %p76 = por %p74, %p75
      %p77 = scmp.ne.s32.totalorder %s66, %s67
      %p78 = scmp.eq.s32.totalorder %s18, 0
      %p79 = por %p77, %p78
      %p80 = scmp.ne.s32.totalorder %s66, %s67
      %p81 = scmp.eq.s32.totalorder %s19, 1
      %p82 = por %p80, %p81
      %p84 = scmp.ne.s32.totalorder %s67, %s83
      %p85 = scmp.eq.s32.totalorder %s19, 0
      %p86 = por %p84, %p85
      %s88 = sadd.s32 %s87, 1
      %p91 = scmp.eq.s32.totalorder %s13, 1
      %p92 = scmp.ne.s32.totalorder %s87, %s89
      %p93 = scmp.eq.s32.totalorder %s13, 0
      %p94 = por %p92, %p93
      %p95 = scmp.ne.s32.totalorder %s87, %s89
      %p96 = scmp.eq.s32.totalorder %s18, 1
      %p97 = por %p95, %p96
      %p98 = scmp.ne.s32.totalorder %s89, %s90
      %p99 = scmp.eq.s32.totalorder %s18, 0
      %p100 = por %p98, %p99
      %p101 = scmp.ne.s32.totalorder %s89, %s90
      %p102 = scmp.eq.s32.totalorder %s19, 1
      %p103 = por %p101, %p102
      %p105 = scmp.ne.s32.totalorder %s90, %s104
      %p106 = scmp.eq.s32.totalorder %s19, 0
      %p107 = por %p105, %p106
      %s109 = sadd.s32 %s108, 1
      %p112 = scmp.eq.s32.totalorder %s13, 1
      %p113 = scmp.ne.s32.totalorder %s108, %s110
      %p114 = scmp.eq.s32.totalorder %s13, 0
      %p115 = por %p113, %p114
      %p116 = scmp.ne.s32.totalorder %s108, %s110
      %p117 = scmp.eq.s32.totalorder %s18, 1
      %p118 = por %p116, %p117
      %p119 = scmp.ne.s32.totalorder %s110, %s111
      %p120 = scmp.eq.s32.totalorder %s18, 0
      %p121 = por %p119, %p120
      %p122 = scmp.ne.s32.totalorder %s110, %s111
      %p123 = scmp.eq.s32.totalorder %s19, 1
      %p124 = por %p122, %p123
      %p126 = scmp.ne.s32.totalorder %s111, %s125
      %p127 = scmp.eq.s32.totalorder %s19, 0
      %p128 = por %p126, %p127
      %s129 = ssub.s32 %s20, %s32
      %s130 = ssub.s32 %s21, %s28
      %s131 = sor.u32 %s129, %s130
      %p132 = scmp.eq.s32.totalorder %s131, 0
      %s134 = sadd.s32 %s133, 1
      %s135 = scalar_select %p132, %s133, %s134
      %p138 = pneg %p132
      %p139 = scmp.eq.s32.totalorder %s13, 1
      %p140 = por %p138, %p139
      %p141 = scmp.ne.s32.totalorder %s133, %s136
      %p142 = scmp.eq.s32.totalorder %s13, 0
      %p143 = por %p141, %p142
      %p144 = scmp.ne.s32.totalorder %s133, %s136
      %p145 = scmp.eq.s32.totalorder %s18, 1
      %p146 = por %p144, %p145
      %p147 = scmp.ne.s32.totalorder %s136, %s137
      %p148 = scmp.eq.s32.totalorder %s18, 0
      %p149 = por %p147, %p148
      %p150 = scmp.ne.s32.totalorder %s136, %s137
      %p151 = scmp.eq.s32.totalorder %s19, 1
      %p152 = por %p150, %p151
      %p154 = scmp.ne.s32.totalorder %s137, %s153
      %p155 = scmp.eq.s32.totalorder %s19, 0
      %p156 = por %p154, %p155
      %p157 = scmp.le.s32.totalorder 1, %s13
      %p158 = scmp.lt.s32.totalorder %s13, 3
      %p159 = pnand %p157, %p158
      %p160 = pneg %p159
      // Predicated region
      $region9: #{tpu_custom_call.1} parent=5 // pred_check
        _
      $region10: #{tpu_custom_call.1} parent=5 // pred_check_branch
        %162 = sbr.rel (%p159) target = $region12
      $region11: #{tpu_custom_call.1} parent=5 // pred_region
        %s163 = ssub.s32 %s13, 1
        // Predicated region
        $region13: #{tpu_custom_call.1} parent=11 // pred_check
          %p164 = pneg %p100
        $region14: #{tpu_custom_call.1} parent=11 // pred_check_branch
          %166 = sbr.rel (%p164) target = $region16
        $region15: #{tpu_custom_call.1} parent=11 // pred_region
          _
        $region16: #{tpu_custom_call.1} parent=11 // pred_fallthru
          _
        // Predicated region
        $region17: #{tpu_custom_call.1} parent=11 // pred_check
          %p167 = pneg %p121
        $region18: #{tpu_custom_call.1} parent=11 // pred_check_branch
          %169 = sbr.rel (%p167) target = $region20
        $region19: #{tpu_custom_call.1} parent=11 // pred_region
          _
        $region20: #{tpu_custom_call.1} parent=11 // pred_fallthru
          _
      $region12: #{tpu_custom_call.1} parent=5 // pred_fallthru
        _
      %p170 = scmp.lt.s32.totalorder %s13, 2
      // Predicated region
      $region21: #{tpu_custom_call.1} parent=5 // pred_check
        %p171 = pneg %p170
      $region22: #{tpu_custom_call.1} parent=5 // pred_check_branch
        %173 = sbr.rel (%p171) target = $region24
      $region23: #{tpu_custom_call.1} parent=5 // pred_region
        // Predicated region
        $region25: #{tpu_custom_call.1} parent=23 // pred_check
          %p174 = pneg %p45
        $region26: #{tpu_custom_call.1} parent=23 // pred_check_branch
          %176 = sbr.rel (%p174) target = $region28
        $region27: #{tpu_custom_call.1} parent=23 // pred_region
          %p177 = scmp.lt.s32.totalorder %s20, 1
          %s178 = scalar_select %p177, %s20, 1
          %s179 = smul.addr %s178, 9
          %s180 = smul.addr %s179, 4
          %s181 = scalar_lea.vmem %s0, %s180
        $region28: #{tpu_custom_call.1} parent=23 // pred_fallthru
          _
        // Predicated region
        $region29: #{tpu_custom_call.1} parent=23 // pred_check
          %p182 = pneg %p73
        $region30: #{tpu_custom_call.1} parent=23 // pred_check_branch
          %184 = sbr.rel (%p182) target = $region32
        $region31: #{tpu_custom_call.1} parent=23 // pred_region
          %s185 = smul.u32 2, %s21
          %p186 = scmp.lt.s32.totalorder %s20, 1
          %s187 = scalar_select %p186, %s20, 1
          %p188 = scmp.lt.s32.totalorder %s185, 1
          %s189 = scalar_select %p188, %s185, 1
          %s190 = smul.addr %s187, 6
          %s191 = sadd.s32 %s189, %s190
          %s192 = smul.addr %s191, 8
          %s193 = scalar_lea.vmem %s1, %s192
          %s194 = smul.u32 2, %s21
        $region32: #{tpu_custom_call.1} parent=23 // pred_fallthru
          _
      $region24: #{tpu_custom_call.1} parent=5 // pred_fallthru
        _
      %p195 = scmp.le.s32.totalorder 1, %s13
      %p196 = scmp.lt.s32.totalorder %s13, 3
      %p197 = pnand %p195, %p196
      %p198 = pneg %p197
      // Predicated region
      $region33: #{tpu_custom_call.1} parent=5 // pred_check
        _
      $region34: #{tpu_custom_call.1} parent=5 // pred_check_branch
        %200 = sbr.rel (%p197) target = $region36
      $region35: #{tpu_custom_call.1} parent=5 // pred_region
        %s201 = ssub.s32 %s13, 1
        %p202 = scmp.lt.s32.totalorder %s22, 1
        %s203 = scalar_select %p202, %s22, 1
        %s204 = smul.addr %s203, 9
        %s205 = smul.addr %s204, 4
        %s206 = scalar_lea.vmem %s0, %s205
        %p207 = pneg %p51
        %p208 = pneg %p48
        %s209 = smul.u32 2, %s23
        %p210 = scmp.lt.s32.totalorder %s22, 1
        %s211 = scalar_select %p210, %s22, 1
        %p212 = scmp.lt.s32.totalorder %s209, 1
        %s213 = scalar_select %p212, %s209, 1
        %s214 = smul.addr %s211, 6
        %s215 = sadd.s32 %s213, %s214
        %s216 = smul.addr %s215, 8
        %s217 = scalar_lea.vmem %s1, %s216
        %p218 = pneg %p79
        %p219 = pneg %p76
        %p220 = pneg %p100
        %p221 = pneg %p97
        %p222 = pneg %p121
        %p223 = pneg %p118
        %p224 = pneg %p149
        %p225 = pneg %p146
        %s226 = sand.u32 %s136, 1
        %s227 = scalar_lea.sflag [#allocation4], %s226
        %s228 = sand.u32 %s136, 1
        %s229 = smul.addr %s228, 16
        %s230 = scalar_lea.vmem [#allocation3], %s229
        %p231 = scmp.lt.s32.totalorder %s22, 1
        %s232 = scalar_select %p231, %s22, 1
        %s233 = smul.addr %s232, 9
        %s234 = smul.addr %s233, 4
        %s235 = scalar_lea.vmem %s0, %s234
        %s236 = smul.u32 2, %s23
        %p237 = scmp.lt.s32.totalorder %s22, 1
        %s238 = scalar_select %p237, %s22, 1
        %p239 = scmp.lt.s32.totalorder %s236, 1
        %s240 = scalar_select %p239, %s236, 1
        %s241 = smul.addr %s238, 6
        %s242 = sadd.s32 %s240, %s241
        %s243 = smul.addr %s242, 8
        %s244 = scalar_lea.vmem %s1, %s243
        %s245 = smul.u32 2, %s23
        %s246 = smul.u32 2, %s23
        %v248 = vld [vmem:[%s235] sm:$0xf]
        %v249 = vld [vmem:[%s235 + $0x4] sm:$0xf]
        %v250 = vld [vmem:[%s235 + $0x8] sm:$0xf]
        %v251 = vld [vmem:[%s235 + $0xc] sm:$0xf]
        %v252 = vld [vmem:[%s235 + $0x10] sm:$0xf]
        %v253 = vld [vmem:[%s235 + $0x14] sm:$0xf]
        %v254 = vld [vmem:[%s235 + $0x18] sm:$0xf]
        %v255 = vld [vmem:[%s235 + $0x1c] sm:$0xf]
        %v256 = vld [vmem:[%s235 + $0x20] sm:$0xf]
        %v257 = vld [vmem:[%s3] sm:$0xff]
        %v258 = vlaneseq
        %v259 = vshrl.u32 %v258, 7
        %v260 = vadd.s32 %v259, 8
        %v261 = vadd.s32 %v259, 16
        %v262 = vld [vmem:[%s244] ss:$8 sm:$0x3]
        %s263 = scalar_lea.vmem %s244, 17
        %v264 = vld [vmem:[%s263] ss:$8 sm:$0x3]
        %v265 = vfloor.f32 %v262
        %v266 = vfloor.f32 %v264
        %v267 = vmax.f32 %v265, 0.0
        %v268 = vmin.f32 %v267, 17.0
        %v269 = vadd.f32 %v265, 1.0
        %v270 = vmax.f32 %v269, 0.0
        %v271 = vmin.f32 %v270, 17.0
        %v272 = vmax.f32 %v266, 0.0
        %v273 = vmin.f32 %v272, 17.0
        %v274 = vadd.f32 %v266, 1.0
        %v275 = vmax.f32 %v274, 0.0
        %v276 = vmin.f32 %v275, 17.0
        %v277 = vmax.f32 %v262, 0.0
        %v278 = vmin.f32 %v277, 17.0
        %v279 = vmax.f32 %v264, 0.0
        %v280 = vmin.f32 %v279, 17.0
        %v281 = vsub.f32 %v268, %v278
        %v282 = vadd.f32 %v281, 1.0
        %v283 = vsub.f32 %v271, %v278
        %v284 = vsub.f32 1.0, %v283
        %v285 = vsub.f32 %v273, %v280
        %v286 = vadd.f32 %v285, 1.0
        %v287 = vsub.f32 %v276, %v280
        %v288 = vsub.f32 1.0, %v287
        %v289 = vcvt.f32.s32.to.zero.pseudo %v268
        %v290 = vcvt.f32.s32.to.zero.pseudo %v271
        %v291 = vcvt.f32.s32.to.zero.pseudo %v273
        %v292 = vcvt.f32.s32.to.zero.pseudo %v276
        %v293 = vlaneseq
        %v294 = vshrl.u32 %v293, 7
        %v295 = vsub.s32 0, %v294
        %v296 = vrot.slane %v289, %v295
        %v297 = vlaneseq
        %v298 = vshrl.u32 %v297, 7
        %v299 = vsub.s32 1, %v298
        %v300 = vrot.slane %v289, %v299
        %vm301 = vcmp.eq.s32.totalorder %v259, %v296
        %vm302 = vcmp.eq.s32.totalorder %v259, %v300
        %vm303 = vcmp.eq.s32.totalorder %v260, %v296
        %vm304 = vcmp.eq.s32.totalorder %v260, %v300
        %vm305 = vcmp.eq.s32.totalorder %v261, %v296
        %vm306 = vcmp.eq.s32.totalorder %v261, %v300
        %v308 = vlaneseq
        %v309 = vshrl.u32 %v308, 7
        %v310 = vsub.s32 0, %v309
        %v311 = vrot.slane %v282, %v310
        %v312 = vlaneseq
        %v313 = vshrl.u32 %v312, 7
        %v314 = vsub.s32 1, %v313
        %v315 = vrot.slane %v282, %v314
        %v318 = vsel %vm301, %v311, 0.0
        %v319 = vsel %vm302, %v315, 0.0
        %v320 = vsel %vm303, %v311, 0.0
        %v321 = vsel %vm304, %v315, 0.0
        %v322 = vsel %vm305, %v311, 0.0
        %v323 = vsel %vm306, %v315, 0.0
        %v324 = vlaneseq
        %v325 = vshrl.u32 %v324, 7
        %v326 = vsub.s32 0, %v325
        %v327 = vrot.slane %v290, %v326
        %v328 = vlaneseq
        %v329 = vshrl.u32 %v328, 7
        %v330 = vsub.s32 1, %v329
        %v331 = vrot.slane %v290, %v330
        %vm332 = vcmp.eq.s32.totalorder %v259, %v327
        %vm333 = vcmp.eq.s32.totalorder %v259, %v331
        %vm334 = vcmp.eq.s32.totalorder %v260, %v327
        %vm335 = vcmp.eq.s32.totalorder %v260, %v331
        %vm336 = vcmp.eq.s32.totalorder %v261, %v327
        %vm337 = vcmp.eq.s32.totalorder %v261, %v331
        %v339 = vlaneseq
        %v340 = vshrl.u32 %v339, 7
        %v341 = vsub.s32 0, %v340
        %v342 = vrot.slane %v284, %v341
        %v343 = vlaneseq
        %v344 = vshrl.u32 %v343, 7
        %v345 = vsub.s32 1, %v344
        %v346 = vrot.slane %v284, %v345
        %v349 = vsel %vm332, %v342, 0.0
        %v350 = vsel %vm333, %v346, 0.0
        %v351 = vsel %vm334, %v342, 0.0
        %v352 = vsel %vm335, %v346, 0.0
        %v353 = vsel %vm336, %v342, 0.0
        %v354 = vsel %vm337, %v346, 0.0
        %v355 = vadd.f32 %v318, %v349
        %v356 = vadd.f32 %v319, %v350
        %v357 = vadd.f32 %v320, %v351
        %v358 = vadd.f32 %v321, %v352
        %v359 = vadd.f32 %v322, %v353
        %v360 = vadd.f32 %v323, %v354
        %v361 = vpack.c.bf16 %v357, %v355
        %v362 = vpack.c.bf16 %v358, %v356
        %v363 = vpack.c.bf16 %v359, %v359
        %v364 = vpack.c.bf16 %v360, %v360
        %v374 = vunpack.c.l.b16 %v248
        %v375 = vunpack.c.l.b16 %v249
        %v376 = vunpack.c.l.b16 %v250
        %v377 = vunpack.c.l.b16 %v251
        %v378 = vunpack.c.l.b16 %v252
        %v379 = vunpack.c.l.b16 %v253
        %v380 = vunpack.c.l.b16 %v254
        %v381 = vunpack.c.l.b16 %v255
        %v382 = vunpack.c.l.b16 %v256
        %v383 = vpack.c.b16 %v375, %v374
        %v384 = vpack.c.b16 %v377, %v376
        %v385 = vpack.c.b16 %v379, %v378
        %v386 = vpack.c.b16 %v381, %v380
        %v387 = vpack.c.b16 %v382, %v382
        %vm388 = vcmask 146432
        %v390 = vsel %vm388, %v383, 0
        %v393 = vsel %vm388, %v384, 0
        %v396 = vsel %vm388, %v385, 0
        %v399 = vsel %vm388, %v386, 0
        %v402 = vsel %vm388, %v387, 0
        %vm404 = vcmask 1040384
        %v406 = vsel %vm404, %v363, 0
        %v409 = vsel %vm404, %v364, 0
        %411 = vmatprep.subr.bf16.mxu0 %v362
        %412 = vmatpush1.bf16.msra.mxu0 %v361
        %413 = vmatprep.subr.bf16.mxu0 %v409
        %414 = vmatpush1.bf16.msra.mxu0 %v406
        %415 = vmatprep.subr.bf16.mxu0 0
        %416 = vmatpush1.bf16.msra.mxu0 0
        %417 = vmatprep.subr.bf16.mxu0 0
        %418 = vmatpush1.bf16.msra.mxu0 0
        %419 = vmatprep.subr.bf16.mxu0 0
        %420 = vmatpush1.bf16.msra.mxu0 0
        %421 = vmatprep.subr.bf16.mxu0 0
        %422 = vmatpush1.bf16.msra.mxu0 0
        %423 = vmatprep.subr.bf16.mxu0 0
        %424 = vmatpush1.bf16.msra.mxu0 0
        %425 = vmatprep.subr.bf16.mxu0 0
        %426 = vmatpush1.bf16.msra.mxu0 0
        %427 = vmatprep.subr.bf16.mxu0 0
        %428 = vmatpush1.bf16.msra.mxu0 0
        %429 = vmatprep.subr.bf16.mxu0 0
        %430 = vmatpush1.bf16.msra.mxu0 0
        %431 = vmatprep.subr.bf16.mxu0 0
        %432 = vmatpush1.bf16.msra.mxu0 0
        %433 = vmatprep.subr.bf16.mxu0 0
        %434 = vmatpush1.bf16.msra.mxu0 0
        %435 = vmatprep.subr.bf16.mxu0 0
        %436 = vmatpush1.bf16.msra.mxu0 0
        %437 = vmatprep.subr.bf16.mxu0 0
        %438 = vmatpush1.bf16.msra.mxu0 0
        %439 = vmatprep.subr.bf16.mxu0 0
        %440 = vmatpush1.bf16.msra.mxu0 0
        %441 = vmatprep.subr.bf16.mxu0 0
        %442 = vmatpush1.bf16.msra.mxu0 0
        %443 = vmatprep.mubr.bf16.mxu0 0
        %444 = vmatmul.mubr.bf16.gmra.mrb[0].mxu0 %v390
        %v445 = vpop.f32.mrb[0].mxu0
        %v446 = vadd.f32 0.0, %v445
        %v447 = vpop.f32.mrb[0].mxu0
        %v448 = vadd.f32 0.0, %v447
        %v449 = vpop.f32.mrb[0].mxu0
        %v450 = vadd.f32 0.0, %v449
        %v451 = vpop.f32.mrb[0].mxu0
        %v452 = vadd.f32 0.0, %v451
        %453 = vmatprep.mubr.bf16.mxu0 0
        %454 = vmatmul.mubr.bf16.gmra.mrb[0].mxu0 %v393
        %v455 = vpop.f32.mrb[0].mxu0
        %v456 = vadd.f32 0.0, %v455
        %v457 = vpop.f32.mrb[0].mxu0
        %v458 = vadd.f32 0.0, %v457
        %v459 = vpop.f32.mrb[0].mxu0
        %v460 = vadd.f32 0.0, %v459
        %v461 = vpop.f32.mrb[0].mxu0
        %v462 = vadd.f32 0.0, %v461
        %463 = vmatprep.mubr.bf16.mxu0 0
        %464 = vmatmul.mubr.bf16.gmra.mrb[0].mxu0 %v396
        %v465 = vpop.f32.mrb[0].mxu0
        %v466 = vadd.f32 0.0, %v465
        %v467 = vpop.f32.mrb[0].mxu0
        %v468 = vadd.f32 0.0, %v467
        %v469 = vpop.f32.mrb[0].mxu0
        %v470 = vadd.f32 0.0, %v469
        %v471 = vpop.f32.mrb[0].mxu0
        %v472 = vadd.f32 0.0, %v471
        %473 = vmatprep.mubr.bf16.mxu0 0
        %474 = vmatmul.mubr.bf16.gmra.mrb[0].mxu0 %v399
        %v475 = vpop.f32.mrb[0].mxu0
        %v476 = vadd.f32 0.0, %v475
        %v477 = vpop.f32.mrb[0].mxu0
        %v478 = vadd.f32 0.0, %v477
        %v479 = vpop.f32.mrb[0].mxu0
        %v480 = vadd.f32 0.0, %v479
        %v481 = vpop.f32.mrb[0].mxu0
        %v482 = vadd.f32 0.0, %v481
        %483 = vmatprep.mubr.bf16.mxu0 0
        %484 = vmatmul.mubr.bf16.gmra.mrb[0].mxu0 %v402
        %v485 = vpop.f32.mrb[0].mxu0
        %v486 = vadd.f32 0.0, %v485
        %v487 = vpop.f32.mrb[0].mxu0
        %v488 = vadd.f32 0.0, %v487
        %v489 = vpop.f32.mrb[0].mxu0
        %v490 = vpop.f32.mrb[0].mxu0
        %491 = vdwg.mxu0
        %v492 = vlaneseq
        %v493 = vshrl.u32 %v492, 7
        %v494 = vsub.s32 0, %v493
        %v495 = vrot.slane %v291, %v494
        %v496 = vlaneseq
        %v497 = vshrl.u32 %v496, 7
        %v498 = vsub.s32 1, %v497
        %v499 = vrot.slane %v291, %v498
        %vm500 = vcmp.eq.s32.totalorder %v259, %v495
        %vm501 = vcmp.eq.s32.totalorder %v259, %v499
        %vm502 = vcmp.eq.s32.totalorder %v260, %v495
        %vm503 = vcmp.eq.s32.totalorder %v260, %v499
        %vm504 = vcmp.eq.s32.totalorder %v261, %v495
        %vm505 = vcmp.eq.s32.totalorder %v261, %v499
        %v507 = vlaneseq
        %v508 = vshrl.u32 %v507, 7
        %v509 = vsub.s32 0, %v508
        %v510 = vrot.slane %v286, %v509
        %v511 = vlaneseq
        %v512 = vshrl.u32 %v511, 7
        %v513 = vsub.s32 1, %v512
        %v514 = vrot.slane %v286, %v513
        %v517 = vsel %vm500, %v510, 0.0
        %v518 = vsel %vm501, %v514, 0.0
        %v519 = vsel %vm502, %v510, 0.0
        %v520 = vsel %vm503, %v514, 0.0
        %v521 = vsel %vm504, %v510, 0.0
        %v522 = vsel %vm505, %v514, 0.0
        %v523 = vlaneseq
        %v524 = vshrl.u32 %v523, 7
        %v525 = vsub.s32 0, %v524
        %v526 = vrot.slane %v292, %v525
        %v527 = vlaneseq
        %v528 = vshrl.u32 %v527, 7
        %v529 = vsub.s32 1, %v528
        %v530 = vrot.slane %v292, %v529
        %vm531 = vcmp.eq.s32.totalorder %v259, %v526
        %vm532 = vcmp.eq.s32.totalorder %v259, %v530
        %vm533 = vcmp.eq.s32.totalorder %v260, %v526
        %vm534 = vcmp.eq.s32.totalorder %v260, %v530
        %vm535 = vcmp.eq.s32.totalorder %v261, %v526
        %vm536 = vcmp.eq.s32.totalorder %v261, %v530
        %v538 = vlaneseq
        %v539 = vshrl.u32 %v538, 7
        %v540 = vsub.s32 0, %v539
        %v541 = vrot.slane %v288, %v540
        %v542 = vlaneseq
        %v543 = vshrl.u32 %v542, 7
        %v544 = vsub.s32 1, %v543
        %v545 = vrot.slane %v288, %v544
        %v548 = vsel %vm531, %v541, 0.0
        %v549 = vsel %vm532, %v545, 0.0
        %v550 = vsel %vm533, %v541, 0.0
        %v551 = vsel %vm534, %v545, 0.0
        %v552 = vsel %vm535, %v541, 0.0
        %v553 = vsel %vm536, %v545, 0.0
        %v554 = vadd.f32 %v517, %v548
        %v555 = vadd.f32 %v518, %v549
        %v556 = vadd.f32 %v519, %v550
        %v557 = vadd.f32 %v520, %v551
        %v558 = vadd.f32 %v521, %v552
        %v559 = vadd.f32 %v522, %v553
        %vm566 = vcmask 1041408
        %v567 = vrot.slane %v554, 6
        %v568 = vrot.slane %v555, 6
        %v569 = vrot.slane %v556, 6
        %v570 = vsel %vm566, %v567, %v569
        %v571 = vrot.slane %v557, 6
        %v572 = vsel %vm566, %v568, %v571
        %v573 = vrot.slane %v558, 6
        %v574 = vsel %vm566, %v569, %v573
        %v575 = vrot.slane %v559, 6
        %v576 = vsel %vm566, %v571, %v575
        %vm583 = vcmask 1043456
        %v584 = vrot.slane %v554, 4
        %v585 = vrot.slane %v555, 4
        %v586 = vrot.slane %v556, 4
        %v587 = vsel %vm583, %v584, %v586
        %v588 = vrot.slane %v557, 4
        %v589 = vsel %vm583, %v585, %v588
        %v590 = vrot.slane %v558, 4
        %v591 = vsel %vm583, %v586, %v590
        %v592 = vrot.slane %v559, 4
        %v593 = vsel %vm583, %v588, %v592
        %vm600 = vcmask 1045504
        %v601 = vrot.slane %v554, 2
        %v602 = vrot.slane %v555, 2
        %v603 = vrot.slane %v556, 2
        %v604 = vsel %vm600, %v601, %v603
        %v605 = vrot.slane %v557, 2
        %v606 = vsel %vm600, %v602, %v605
        %v607 = vrot.slane %v558, 2
        %v608 = vsel %vm600, %v603, %v607
        %v609 = vrot.slane %v559, 2
        %v610 = vsel %vm600, %v605, %v609
        %v617 = vsel %vm566, %v558, %v567
        %v618 = vsel %vm566, %v559, %v568
        %v619 = vsel %vm583, %v574, %v584
        %v620 = vsel %vm583, %v576, %v585
        %v621 = vsel %vm600, %v591, %v601
        %v622 = vsel %vm600, %v593, %v602
        %v623 = vmul.f32 %v446, %v554
        %v624 = vmul.f32 %v448, %v555
        %v625 = vmul.f32 %v450, %v556
        %v626 = vmul.f32 %v452, %v557
        %v627 = vmul.f32 %v456, %v617
        %v628 = vmul.f32 %v458, %v618
        %v629 = vmul.f32 %v460, %v570
        %v630 = vmul.f32 %v462, %v572
        %v631 = vmul.f32 %v466, %v619
        %v632 = vmul.f32 %v468, %v620
        %v633 = vmul.f32 %v470, %v587
        %v634 = vmul.f32 %v472, %v589
        %v635 = vmul.f32 %v476, %v621
        %v636 = vmul.f32 %v478, %v622
        %v637 = vmul.f32 %v480, %v604
        %v638 = vmul.f32 %v482, %v606
        %v639 = vmul.f32 %v486, %v608
        %v640 = vmul.f32 %v488, %v610
        %vm641 = vcmask 588800
        %v643 = vsel %vm641, %v257, 0
        %645 = vmatprep.subr.mxu0 %v624
        %646 = vmatpush1.msra.mxu0 %v623
        %647 = vmatprep.subr.mxu0 %v626
        %648 = vmatpush1.msra.mxu0 %v625
        %649 = vmatprep.subr.mxu0 %v628
        %650 = vmatpush1.msra.mxu0 %v627
        %651 = vmatprep.subr.mxu0 %v630
        %652 = vmatpush1.msra.mxu0 %v629
        %653 = vmatprep.subr.mxu0 %v632
        %654 = vmatpush1.msra.mxu0 %v631
        %655 = vmatprep.subr.mxu0 %v634
        %656 = vmatpush1.msra.mxu0 %v633
        %657 = vmatprep.subr.mxu0 %v636
        %658 = vmatpush1.msra.mxu0 %v635
        %659 = vmatprep.subr.mxu0 %v638
        %660 = vmatpush1.msra.mxu0 %v637
        %661 = vmatprep.subr.mxu0 %v640
        %662 = vmatpush1.msra.mxu0 %v639
        %663 = vmatprep.subr.mxu0 0.0
        %664 = vmatpush1.msra.mxu0 0.0
        %665 = vmatprep.subr.mxu0 0.0
        %666 = vmatpush1.msra.mxu0 0.0
        %667 = vmatprep.subr.mxu0 0.0
        %668 = vmatpush1.msra.mxu0 0.0
        %669 = vmatprep.subr.mxu0 0.0
        %670 = vmatpush1.msra.mxu0 0.0
        %671 = vmatprep.subr.mxu0 0.0
        %672 = vmatpush1.msra.mxu0 0.0
        %673 = vmatprep.subr.mxu0 0.0
        %674 = vmatpush1.msra.mxu0 0.0
        %675 = vmatprep.subr.mxu0 0.0
        %676 = vmatpush1.msra.mxu0 0.0
        %677 = vmatprep.subr.mxu0 0.0
        %678 = vmatpush1.msra.mxu0 0.0
        %679 = vmatprep.subr.mxu0 0.0
        %680 = vmatpush1.msra.mxu0 0.0
        %681 = vmatprep.subr.mxu0 0.0
        %682 = vmatpush1.msra.mxu0 0.0
        %683 = vmatprep.subr.mxu0 0.0
        %684 = vmatpush1.msra.mxu0 0.0
        %685 = vmatprep.subr.mxu0 0.0
        %686 = vmatpush1.msra.mxu0 0.0
        %687 = vmatprep.subr.mxu0 0.0
        %688 = vmatpush1.msra.mxu0 0.0
        %689 = vmatprep.subr.mxu0 0.0
        %690 = vmatpush1.msra.mxu0 0.0
        %691 = vmatprep.subr.mxu0 0.0
        %692 = vmatpush1.msra.mxu0 0.0
        %693 = vmatprep.subr.mxu0 0.0
        %694 = vmatpush1.msra.mxu0 0.0
        %695 = vmatprep.subr.mxu0 0.0
        %696 = vmatpush1.msra.mxu0 0.0
        %697 = vmatprep.subr.mxu0 0.0
        %698 = vmatpush1.msra.mxu0 0.0
        %699 = vmatprep.subr.mxu0 0.0
        %700 = vmatpush1.msra.mxu0 0.0
        %701 = vmatprep.subr.mxu0 0.0
        %702 = vmatpush1.msra.mxu0 0.0
        %703 = vmatprep.subr.mxu0 0.0
        %704 = vmatpush1.msra.mxu0 0.0
        %705 = vmatprep.subr.mxu0 0.0
        %706 = vmatpush1.msra.mxu0 0.0
        %707 = vmatprep.subr.mxu0 0.0
        %708 = vmatpush1.msra.mxu0 0.0
        %709 = vmatprep.mubr.f32.mxu0 0.0
        %710 = vmatmul.mubr.f32.gmra.mrb[0].mxu0 %v643
        %v711 = vpop.f32.mrb[0].mxu0
        %v712 = vadd.f32 0.0, %v711
        %v713 = vpop.f32.mrb[0].mxu0
        %v714 = vadd.f32 0.0, %v713
        %715 = vdwg.mxu0
        %v716 = vpack.c.bf16 %v712, %v712
        %v717 = vpack.c.bf16 %v714, %v714
        %v720 = vunpack.c.l.b16 %v716
        %v721 = vunpack.c.l.b16 %v717
        %v722 = vpack.c.b16 %v721, %v720
        %724 = vst [vmem:[#allocation2] sm:$0xff] %v722
        %s725 = scalar_lea.vmem %s244, 1
        %v726 = vld [vmem:[%s725] ss:$8 sm:$0x3]
        %s727 = scalar_lea.vmem %s244, 18
        %v728 = vld [vmem:[%s727] ss:$8 sm:$0x3]
        %v729 = vfloor.f32 %v726
        %v730 = vfloor.f32 %v728
        %v731 = vmax.f32 %v729, 0.0
        %v732 = vmin.f32 %v731, 17.0
        %v733 = vadd.f32 %v729, 1.0
        %v734 = vmax.f32 %v733, 0.0
        %v735 = vmin.f32 %v734, 17.0
        %v736 = vmax.f32 %v730, 0.0
        %v737 = vmin.f32 %v736, 17.0
        %v738 = vadd.f32 %v730, 1.0
        %v739 = vmax.f32 %v738, 0.0
        %v740 = vmin.f32 %v739, 17.0
        %v741 = vmax.f32 %v726, 0.0
        %v742 = vmin.f32 %v741, 17.0
        %v743 = vmax.f32 %v728, 0.0
        %v744 = vmin.f32 %v743, 17.0
        %v745 = vsub.f32 %v732, %v742
        %v746 = vadd.f32 %v745, 1.0
        %v747 = vsub.f32 %v735, %v742
        %v748 = vsub.f32 1.0, %v747
        %v749 = vsub.f32 %v737, %v744
        %v750 = vadd.f32 %v749, 1.0
        %v751 = vsub.f32 %v740, %v744
        %v752 = vsub.f32 1.0, %v751
        %v753 = vcvt.f32.s32.to.zero.pseudo %v732
        %v754 = vcvt.f32.s32.to.zero.pseudo %v735
        %v755 = vcvt.f32.s32.to.zero.pseudo %v737
        %v756 = vcvt.f32.s32.to.zero.pseudo %v740
        %v757 = vlaneseq
        %v758 = vshrl.u32 %v757, 7
        %v759 = vsub.s32 0, %v758
        %v760 = vrot.slane %v753, %v759
        %v761 = vlaneseq
        %v762 = vshrl.u32 %v761, 7
        %v763 = vsub.s32 1, %v762
        %v764 = vrot.slane %v753, %v763
        %vm765 = vcmp.eq.s32.totalorder %v259, %v760
        %vm766 = vcmp.eq.s32.totalorder %v259, %v764
        %vm767 = vcmp.eq.s32.totalorder %v260, %v760
        %vm768 = vcmp.eq.s32.totalorder %v260, %v764
        %vm769 = vcmp.eq.s32.totalorder %v261, %v760
        %vm770 = vcmp.eq.s32.totalorder %v261, %v764
        %v772 = vlaneseq
        %v773 = vshrl.u32 %v772, 7
        %v774 = vsub.s32 0, %v773
        %v775 = vrot.slane %v746, %v774
        %v776 = vlaneseq
        %v777 = vshrl.u32 %v776, 7
        %v778 = vsub.s32 1, %v777
        %v779 = vrot.slane %v746, %v778
        %v782 = vsel %vm765, %v775, 0.0
        %v783 = vsel %vm766, %v779, 0.0
        %v784 = vsel %vm767, %v775, 0.0
        %v785 = vsel %vm768, %v779, 0.0
        %v786 = vsel %vm769, %v775, 0.0
        %v787 = vsel %vm770, %v779, 0.0
        %v788 = vlaneseq
        %v789 = vshrl.u32 %v788, 7
        %v790 = vsub.s32 0, %v789
        %v791 = vrot.slane %v754, %v790
        %v792 = vlaneseq
        %v793 = vshrl.u32 %v792, 7
        %v794 = vsub.s32 1, %v793
        %v795 = vrot.slane %v754, %v794
        %vm796 = vcmp.eq.s32.totalorder %v259, %v791
        %vm797 = vcmp.eq.s32.totalorder %v259, %v795
        %vm798 = vcmp.eq.s32.totalorder %v260, %v791
        %vm799 = vcmp.eq.s32.totalorder %v260, %v795
        %vm800 = vcmp.eq.s32.totalorder %v261, %v791
        %vm801 = vcmp.eq.s32.totalorder %v261, %v795
        %v803 = vlaneseq
        %v804 = vshrl.u32 %v803, 7
        %v805 = vsub.s32 0, %v804
        %v806 = vrot.slane %v748, %v805
        %v807 = vlaneseq
        %v808 = vshrl.u32 %v807, 7
        %v809 = vsub.s32 1, %v808
        %v810 = vrot.slane %v748, %v809
        %v813 = vsel %vm796, %v806, 0.0
        %v814 = vsel %vm797, %v810, 0.0
        %v815 = vsel %vm798, %v806, 0.0
        %v816 = vsel %vm799, %v810, 0.0
        %v817 = vsel %vm800, %v806, 0.0
        %v818 = vsel %vm801, %v810, 0.0
        %v819 = vadd.f32 %v782, %v813
        %v820 = vadd.f32 %v783, %v814
        %v821 = vadd.f32 %v784, %v815
        %v822 = vadd.f32 %v785, %v816
        %v823 = vadd.f32 %v786, %v817
        %v824 = vadd.f32 %v787, %v818
        %v825 = vpack.c.bf16 %v821, %v819
        %v826 = vpack.c.bf16 %v822, %v820
        %v827 = vpack.c.bf16 %v823, %v823
        %v828 = vpack.c.bf16 %v824, %v824
        %v830 = vsel %vm404, %v827, 0
        %v833 = vsel %vm404, %v828, 0
        %835 = vmatprep.subr.bf16.mxu0 %v826
        %836 = vmatpush1.bf16.msra.mxu0 %v825
        %837 = vmatprep.subr.bf16.mxu0 %v833
        %838 = vmatpush1.bf16.msra.mxu0 %v830
        %839 = vmatprep.subr.bf16.mxu0 0
        %840 = vmatpush1.bf16.msra.mxu0 0
        %841 = vmatprep.subr.bf16.mxu0 0
        %842 = vmatpush1.bf16.msra.mxu0 0
        %843 = vmatprep.subr.bf16.mxu0 0
        %844 = vmatpush1.bf16.msra.mxu0 0
        %845 = vmatprep.subr.bf16.mxu0 0
        %846 = vmatpush1.bf16.msra.mxu0 0
        %847 = vmatprep.subr.bf16.mxu0 0
        %848 = vmatpush1.bf16.msra.mxu0 0
        %849 = vmatprep.subr.bf16.mxu0 0
        %850 = vmatpush1.bf16.msra.mxu0 0
        %851 = vmatprep.subr.bf16.mxu0 0
        %852 = vmatpush1.bf16.msra.mxu0 0
        %853 = vmatprep.subr.bf16.mxu0 0
        %854 = vmatpush1.bf16.msra.mxu0 0
        %855 = vmatprep.subr.bf16.mxu0 0
        %856 = vmatpush1.bf16.msra.mxu0 0
        %857 = vmatprep.subr.bf16.mxu0 0
        %858 = vmatpush1.bf16.msra.mxu0 0
        %859 = vmatprep.subr.bf16.mxu0 0
        %860 = vmatpush1.bf16.msra.mxu0 0
        %861 = vmatprep.subr.bf16.mxu0 0
        %862 = vmatpush1.bf16.msra.mxu0 0
        %863 = vmatprep.subr.bf16.mxu0 0
        %864 = vmatpush1.bf16.msra.mxu0 0
        %865 = vmatprep.subr.bf16.mxu0 0
        %866 = vmatpush1.bf16.msra.mxu0 0
        %867 = vmatprep.mubr.bf16.mxu0 0
        %868 = vmatmul.mubr.bf16.gmra.mrb[0].mxu0 %v390
        %v869 = vpop.f32.mrb[0].mxu0
        %v870 = vadd.f32 0.0, %v869
        %v871 = vpop.f32.mrb[0].mxu0
        %v872 = vadd.f32 0.0, %v871
        %v873 = vpop.f32.mrb[0].mxu0
        %v874 = vadd.f32 0.0, %v873
        %v875 = vpop.f32.mrb[0].mxu0
        %v876 = vadd.f32 0.0, %v875
        %877 = vmatprep.mubr.bf16.mxu0 0
        %878 = vmatmul.mubr.bf16.gmra.mrb[0].mxu0 %v393
        %v879 = vpop.f32.mrb[0].mxu0
        %v880 = vadd.f32 0.0, %v879
        %v881 = vpop.f32.mrb[0].mxu0
        %v882 = vadd.f32 0.0, %v881
        %v883 = vpop.f32.mrb[0].mxu0
        %v884 = vadd.f32 0.0, %v883
        %v885 = vpop.f32.mrb[0].mxu0
        %v886 = vadd.f32 0.0, %v885
        %887 = vmatprep.mubr.bf16.mxu0 0
        %888 = vmatmul.mubr.bf16.gmra.mrb[0].mxu0 %v396
        %v889 = vpop.f32.mrb[0].mxu0
        %v890 = vadd.f32 0.0, %v889
        %v891 = vpop.f32.mrb[0].mxu0
        %v892 = vadd.f32 0.0, %v891
        %v893 = vpop.f32.mrb[0].mxu0
        %v894 = vadd.f32 0.0, %v893
        %v895 = vpop.f32.mrb[0].mxu0
        %v896 = vadd.f32 0.0, %v895
        %897 = vmatprep.mubr.bf16.mxu0 0
        %898 = vmatmul.mubr.bf16.gmra.mrb[0].mxu0 %v399
        %v899 = vpop.f32.mrb[0].mxu0
        %v900 = vadd.f32 0.0, %v899
        %v901 = vpop.f32.mrb[0].mxu0
        %v902 = vadd.f32 0.0, %v901
        %v903 = vpop.f32.mrb[0].mxu0
        %v904 = vadd.f32 0.0, %v903
        %v905 = vpop.f32.mrb[0].mxu0
        %v906 = vadd.f32 0.0, %v905
        %907 = vmatprep.mubr.bf16.mxu0 0
        %908 = vmatmul.mubr.bf16.gmra.mrb[0].mxu0 %v402
        %v909 = vpop.f32.mrb[0].mxu0
        %v910 = vadd.f32 0.0, %v909
        %v911 = vpop.f32.mrb[0].mxu0
        %v912 = vadd.f32 0.0, %v911
        %v913 = vpop.f32.mrb[0].mxu0
        %v914 = vpop.f32.mrb[0].mxu0
        %915 = vdwg.mxu0
        %v916 = vlaneseq
        %v917 = vshrl.u32 %v916, 7
        %v918 = vsub.s32 0, %v917
        %v919 = vrot.slane %v755, %v918
        %v920 = vlaneseq
        %v921 = vshrl.u32 %v920, 7
        %v922 = vsub.s32 1, %v921
        %v923 = vrot.slane %v755, %v922
        %vm924 = vcmp.eq.s32.totalorder %v259, %v919
        %vm925 = vcmp.eq.s32.totalorder %v259, %v923
        %vm926 = vcmp.eq.s32.totalorder %v260, %v919
        %vm927 = vcmp.eq.s32.totalorder %v260, %v923
        %vm928 = vcmp.eq.s32.totalorder %v261, %v919
        %vm929 = vcmp.eq.s32.totalorder %v261, %v923
        %v931 = vlaneseq
        %v932 = vshrl.u32 %v931, 7
        %v933 = vsub.s32 0, %v932
        %v934 = vrot.slane %v750, %v933
        %v935 = vlaneseq
        %v936 = vshrl.u32 %v935, 7
        %v937 = vsub.s32 1, %v936
        %v938 = vrot.slane %v750, %v937
        %v941 = vsel %vm924, %v934, 0.0
        %v942 = vsel %vm925, %v938, 0.0
        %v943 = vsel %vm926, %v934, 0.0
        %v944 = vsel %vm927, %v938, 0.0
        %v945 = vsel %vm928, %v934, 0.0
        %v946 = vsel %vm929, %v938, 0.0
        %v947 = vlaneseq
        %v948 = vshrl.u32 %v947, 7
        %v949 = vsub.s32 0, %v948
        %v950 = vrot.slane %v756, %v949
        %v951 = vlaneseq
        %v952 = vshrl.u32 %v951, 7
        %v953 = vsub.s32 1, %v952
        %v954 = vrot.slane %v756, %v953
        %vm955 = vcmp.eq.s32.totalorder %v259, %v950
        %vm956 = vcmp.eq.s32.totalorder %v259, %v954
        %vm957 = vcmp.eq.s32.totalorder %v260, %v950
        %vm958 = vcmp.eq.s32.totalorder %v260, %v954
        %vm959 = vcmp.eq.s32.totalorder %v261, %v950
        %vm960 = vcmp.eq.s32.totalorder %v261, %v954
        %v962 = vlaneseq
        %v963 = vshrl.u32 %v962, 7
        %v964 = vsub.s32 0, %v963
        %v965 = vrot.slane %v752, %v964
        %v966 = vlaneseq
        %v967 = vshrl.u32 %v966, 7
        %v968 = vsub.s32 1, %v967
        %v969 = vrot.slane %v752, %v968
        %v972 = vsel %vm955, %v965, 0.0
        %v973 = vsel %vm956, %v969, 0.0
        %v974 = vsel %vm957, %v965, 0.0
        %v975 = vsel %vm958, %v969, 0.0
        %v976 = vsel %vm959, %v965, 0.0
        %v977 = vsel %vm960, %v969, 0.0
        %v978 = vadd.f32 %v941, %v972
        %v979 = vadd.f32 %v942, %v973
        %v980 = vadd.f32 %v943, %v974
        %v981 = vadd.f32 %v944, %v975
        %v982 = vadd.f32 %v945, %v976
        %v983 = vadd.f32 %v946, %v977
        %v990 = vrot.slane %v978, 6
        %v991 = vrot.slane %v979, 6
        %v992 = vrot.slane %v980, 6
        %v993 = vsel %vm566, %v990, %v992
        %v994 = vrot.slane %v981, 6
        %v995 = vsel %vm566, %v991, %v994
        %v996 = vrot.slane %v982, 6
        %v997 = vsel %vm566, %v992, %v996
        %v998 = vrot.slane %v983, 6
        %v999 = vsel %vm566, %v994, %v998
        %v1006 = vrot.slane %v978, 4
        %v1007 = vrot.slane %v979, 4
        %v1008 = vrot.slane %v980, 4
        %v1009 = vsel %vm583, %v1006, %v1008
        %v1010 = vrot.slane %v981, 4
        %v1011 = vsel %vm583, %v1007, %v1010
        %v1012 = vrot.slane %v982, 4
        %v1013 = vsel %vm583, %v1008, %v1012
        %v1014 = vrot.slane %v983, 4
        %v1015 = vsel %vm583, %v1010, %v1014
        %v1022 = vrot.slane %v978, 2
        %v1023 = vrot.slane %v979, 2
        %v1024 = vrot.slane %v980, 2
        %v1025 = vsel %vm600, %v1022, %v1024
        %v1026 = vrot.slane %v981, 2
        %v1027 = vsel %vm600, %v1023, %v1026
        %v1028 = vrot.slane %v982, 2
        %v1029 = vsel %vm600, %v1024, %v1028
        %v1030 = vrot.slane %v983, 2
        %v1031 = vsel %vm600, %v1026, %v1030
        %v1038 = vsel %vm566, %v982, %v990
        %v1039 = vsel %vm566, %v983, %v991
        %v1040 = vsel %vm583, %v997, %v1006
        %v1041 = vsel %vm583, %v999, %v1007
        %v1042 = vsel %vm600, %v1013, %v1022
        %v1043 = vsel %vm600, %v1015, %v1023
        %v1044 = vmul.f32 %v870, %v978
        %v1045 = vmul.f32 %v872, %v979
        %v1046 = vmul.f32 %v874, %v980
        %v1047 = vmul.f32 %v876, %v981
        %v1048 = vmul.f32 %v880, %v1038
        %v1049 = vmul.f32 %v882, %v1039
        %v1050 = vmul.f32 %v884, %v993
        %v1051 = vmul.f32 %v886, %v995
        %v1052 = vmul.f32 %v890, %v1040
        %v1053 = vmul.f32 %v892, %v1041
        %v1054 = vmul.f32 %v894, %v1009
        %v1055 = vmul.f32 %v896, %v1011
        %v1056 = vmul.f32 %v900, %v1042
        %v1057 = vmul.f32 %v902, %v1043
        %v1058 = vmul.f32 %v904, %v1025
        %v1059 = vmul.f32 %v906, %v1027
        %v1060 = vmul.f32 %v910, %v1029
        %v1061 = vmul.f32 %v912, %v1031
        %1062 = vmatprep.subr.mxu0 %v1045
        %1063 = vmatpush1.msra.mxu0 %v1044
        %1064 = vmatprep.subr.mxu0 %v1047
        %1065 = vmatpush1.msra.mxu0 %v1046
        %1066 = vmatprep.subr.mxu0 %v1049
        %1067 = vmatpush1.msra.mxu0 %v1048
        %1068 = vmatprep.subr.mxu0 %v1051
        %1069 = vmatpush1.msra.mxu0 %v1050
        %1070 = vmatprep.subr.mxu0 %v1053
        %1071 = vmatpush1.msra.mxu0 %v1052
        %1072 = vmatprep.subr.mxu0 %v1055
        %1073 = vmatpush1.msra.mxu0 %v1054
        %1074 = vmatprep.subr.mxu0 %v1057
        %1075 = vmatpush1.msra.mxu0 %v1056
        %1076 = vmatprep.subr.mxu0 %v1059
        %1077 = vmatpush1.msra.mxu0 %v1058
        %1078 = vmatprep.subr.mxu0 %v1061
        %1079 = vmatpush1.msra.mxu0 %v1060
        %1080 = vmatprep.subr.mxu0 0.0
        %1081 = vmatpush1.msra.mxu0 0.0
        %1082 = vmatprep.subr.mxu0 0.0
        %1083 = vmatpush1.msra.mxu0 0.0
        %1084 = vmatprep.subr.mxu0 0.0
        %1085 = vmatpush1.msra.mxu0 0.0
        %1086 = vmatprep.subr.mxu0 0.0
        %1087 = vmatpush1.msra.mxu0 0.0
        %1088 = vmatprep.subr.mxu0 0.0
        %1089 = vmatpush1.msra.mxu0 0.0
        %1090 = vmatprep.subr.mxu0 0.0
        %1091 = vmatpush1.msra.mxu0 0.0
        %1092 = vmatprep.subr.mxu0 0.0
        %1093 = vmatpush1.msra.mxu0 0.0
        %1094 = vmatprep.subr.mxu0 0.0
        %1095 = vmatpush1.msra.mxu0 0.0
        %1096 = vmatprep.subr.mxu0 0.0
        %1097 = vmatpush1.msra.mxu0 0.0
        %1098 = vmatprep.subr.mxu0 0.0
        %1099 = vmatpush1.msra.mxu0 0.0
        %1100 = vmatprep.subr.mxu0 0.0
        %1101 = vmatpush1.msra.mxu0 0.0
        %1102 = vmatprep.subr.mxu0 0.0
        %1103 = vmatpush1.msra.mxu0 0.0
        %1104 = vmatprep.subr.mxu0 0.0
        %1105 = vmatpush1.msra.mxu0 0.0
        %1106 = vmatprep.subr.mxu0 0.0
        %1107 = vmatpush1.msra.mxu0 0.0
        %1108 = vmatprep.subr.mxu0 0.0
        %1109 = vmatpush1.msra.mxu0 0.0
        %1110 = vmatprep.subr.mxu0 0.0
        %1111 = vmatpush1.msra.mxu0 0.0
        %1112 = vmatprep.subr.mxu0 0.0
        %1113 = vmatpush1.msra.mxu0 0.0
        %1114 = vmatprep.subr.mxu0 0.0
        %1115 = vmatpush1.msra.mxu0 0.0
        %1116 = vmatprep.subr.mxu0 0.0
        %1117 = vmatpush1.msra.mxu0 0.0
        %1118 = vmatprep.subr.mxu0 0.0
        %1119 = vmatpush1.msra.mxu0 0.0
        %1120 = vmatprep.subr.mxu0 0.0
        %1121 = vmatpush1.msra.mxu0 0.0
        %1122 = vmatprep.subr.mxu0 0.0
        %1123 = vmatpush1.msra.mxu0 0.0
        %1124 = vmatprep.subr.mxu0 0.0
        %1125 = vmatpush1.msra.mxu0 0.0
        %1126 = vmatprep.mubr.f32.mxu0 0.0
        %1127 = vmatmul.mubr.f32.gmra.mrb[0].mxu0 %v643
        %v1128 = vpop.f32.mrb[0].mxu0
        %v1129 = vadd.f32 0.0, %v1128
        %v1130 = vpop.f32.mrb[0].mxu0
        %v1131 = vadd.f32 0.0, %v1130
        %1132 = vdwg.mxu0
        %v1133 = vpack.c.bf16 %v1129, %v1129
        %v1134 = vpack.c.bf16 %v1131, %v1131
        %v1137 = vunpack.c.l.b16 %v1133
        %v1138 = vunpack.c.l.b16 %v1134
        %v1139 = vpack.c.b16 %v1138, %v1137
        %1141 = vst [vmem:[#allocation2 + $0x8] sm:$0xff] %v1139
        %s1142 = scalar_lea.vmem %s244, 2
        %v1143 = vld [vmem:[%s1142] ss:$8 sm:$0x3]
        %s1144 = scalar_lea.vmem %s244, 19
        %v1145 = vld [vmem:[%s1144] ss:$8 sm:$0x3]
        %v1146 = vfloor.f32 %v1143
        %v1147 = vfloor.f32 %v1145
        %v1148 = vmax.f32 %v1146, 0.0
        %v1149 = vmin.f32 %v1148, 17.0
        %v1150 = vadd.f32 %v1146, 1.0
        %v1151 = vmax.f32 %v1150, 0.0
        %v1152 = vmin.f32 %v1151, 17.0
        %v1153 = vmax.f32 %v1147, 0.0
        %v1154 = vmin.f32 %v1153, 17.0
        %v1155 = vadd.f32 %v1147, 1.0
        %v1156 = vmax.f32 %v1155, 0.0
        %v1157 = vmin.f32 %v1156, 17.0
        %v1158 = vmax.f32 %v1143, 0.0
        %v1159 = vmin.f32 %v1158, 17.0
        %v1160 = vmax.f32 %v1145, 0.0
        %v1161 = vmin.f32 %v1160, 17.0
        %v1162 = vsub.f32 %v1149, %v1159
        %v1163 = vadd.f32 %v1162, 1.0
        %v1164 = vsub.f32 %v1152, %v1159
        %v1165 = vsub.f32 1.0, %v1164
        %v1166 = vsub.f32 %v1154, %v1161
        %v1167 = vadd.f32 %v1166, 1.0
        %v1168 = vsub.f32 %v1157, %v1161
        %v1169 = vsub.f32 1.0, %v1168
        %v1170 = vcvt.f32.s32.to.zero.pseudo %v1149
        %v1171 = vcvt.f32.s32.to.zero.pseudo %v1152
        %v1172 = vcvt.f32.s32.to.zero.pseudo %v1154
        %v1173 = vcvt.f32.s32.to.zero.pseudo %v1157
        %v1174 = vlaneseq
        %v1175 = vshrl.u32 %v1174, 7
        %v1176 = vsub.s32 0, %v1175
        %v1177 = vrot.slane %v1170, %v1176
        %v1178 = vlaneseq
        %v1179 = vshrl.u32 %v1178, 7
        %v1180 = vsub.s32 1, %v1179
        %v1181 = vrot.slane %v1170, %v1180
        %vm1182 = vcmp.eq.s32.totalorder %v259, %v1177
        %vm1183 = vcmp.eq.s32.totalorder %v259, %v1181
        %vm1184 = vcmp.eq.s32.totalorder %v260, %v1177
        %vm1185 = vcmp.eq.s32.totalorder %v260, %v1181
        %vm1186 = vcmp.eq.s32.totalorder %v261, %v1177
        %vm1187 = vcmp.eq.s32.totalorder %v261, %v1181
        %v1189 = vlaneseq
        %v1190 = vshrl.u32 %v1189, 7
        %v1191 = vsub.s32 0, %v1190
        %v1192 = vrot.slane %v1163, %v1191
        %v1193 = vlaneseq
        %v1194 = vshrl.u32 %v1193, 7
        %v1195 = vsub.s32 1, %v1194
        %v1196 = vrot.slane %v1163, %v1195
        %v1199 = vsel %vm1182, %v1192, 0.0
        %v1200 = vsel %vm1183, %v1196, 0.0
        %v1201 = vsel %vm1184, %v1192, 0.0
        %v1202 = vsel %vm1185, %v1196, 0.0
        %v1203 = vsel %vm1186, %v1192, 0.0
        %v1204 = vsel %vm1187, %v1196, 0.0
        %v1205 = vlaneseq
        %v1206 = vshrl.u32 %v1205, 7
        %v1207 = vsub.s32 0, %v1206
        %v1208 = vrot.slane %v1171, %v1207
        %v1209 = vlaneseq
        %v1210 = vshrl.u32 %v1209, 7
        %v1211 = vsub.s32 1, %v1210
        %v1212 = vrot.slane %v1171, %v1211
        %vm1213 = vcmp.eq.s32.totalorder %v259, %v1208
        %vm1214 = vcmp.eq.s32.totalorder %v259, %v1212
        %vm1215 = vcmp.eq.s32.totalorder %v260, %v1208
        %vm1216 = vcmp.eq.s32.totalorder %v260, %v1212
        %vm1217 = vcmp.eq.s32.totalorder %v261, %v1208
        %vm1218 = vcmp.eq.s32.totalorder %v261, %v1212
        %v1220 = vlaneseq
        %v1221 = vshrl.u32 %v1220, 7
        %v1222 = vsub.s32 0, %v1221
        %v1223 = vrot.slane %v1165, %v1222
        %v1224 = vlaneseq
        %v1225 = vshrl.u32 %v1224, 7
        %v1226 = vsub.s32 1, %v1225
        %v1227 = vrot.slane %v1165, %v1226
        %v1230 = vsel %vm1213, %v1223, 0.0
        %v1231 = vsel %vm1214, %v1227, 0.0
        %v1232 = vsel %vm1215, %v1223, 0.0
        %v1233 = vsel %vm1216, %v1227, 0.0
        %v1234 = vsel %vm1217, %v1223, 0.0
        %v1235 = vsel %vm1218, %v1227, 0.0
        %v1236 = vadd.f32 %v1199, %v1230
        %v1237 = vadd.f32 %v1200, %v1231
        %v1238 = vadd.f32 %v1201, %v1232
        %v1239 = vadd.f32 %v1202, %v1233
        %v1240 = vadd.f32 %v1203, %v1234
        %v1241 = vadd.f32 %v1204, %v1235
        %v1242 = vpack.c.bf16 %v1238, %v1236
        %v1243 = vpack.c.bf16 %v1239, %v1237
        %v1244 = vpack.c.bf16 %v1240, %v1240
        %v1245 = vpack.c.bf16 %v1241, %v1241
        %v1247 = vsel %vm404, %v1244, 0
        %v1250 = vsel %vm404, %v1245, 0
        %1252 = vmatprep.subr.bf16.mxu0 %v1243
        %1253 = vmatpush1.bf16.msra.mxu0 %v1242
        %1254 = vmatprep.subr.bf16.mxu0 %v1250
        %1255 = vmatpush1.bf16.msra.mxu0 %v1247
        %1256 = vmatprep.subr.bf16.mxu0 0
        %1257 = vmatpush1.bf16.msra.mxu0 0
        %1258 = vmatprep.subr.bf16.mxu0 0
        %1259 = vmatpush1.bf16.msra.mxu0 0
        %1260 = vmatprep.subr.bf16.mxu0 0
        %1261 = vmatpush1.bf16.msra.mxu0 0
        %1262 = vmatprep.subr.bf16.mxu0 0
        %1263 = vmatpush1.bf16.msra.mxu0 0
        %1264 = vmatprep.subr.bf16.mxu0 0
        %1265 = vmatpush1.bf16.msra.mxu0 0
        %1266 = vmatprep.subr.bf16.mxu0 0
        %1267 = vmatpush1.bf16.msra.mxu0 0
        %1268 = vmatprep.subr.bf16.mxu0 0
        %1269 = vmatpush1.bf16.msra.mxu0 0
        %1270 = vmatprep.subr.bf16.mxu0 0
        %1271 = vmatpush1.bf16.msra.mxu0 0
        %1272 = vmatprep.subr.bf16.mxu0 0
        %1273 = vmatpush1.bf16.msra.mxu0 0
        %1274 = vmatprep.subr.bf16.mxu0 0
        %1275 = vmatpush1.bf16.msra.mxu0 0
        %1276 = vmatprep.subr.bf16.mxu0 0
        %1277 = vmatpush1.bf16.msra.mxu0 0
        %1278 = vmatprep.subr.bf16.mxu0 0
        %1279 = vmatpush1.bf16.msra.mxu0 0
        %1280 = vmatprep.subr.bf16.mxu0 0
        %1281 = vmatpush1.bf16.msra.mxu0 0
        %1282 = vmatprep.subr.bf16.mxu0 0
        %1283 = vmatpush1.bf16.msra.mxu0 0
        %1284 = vmatprep.mubr.bf16.mxu0 0
        %1285 = vmatmul.mubr.bf16.gmra.mrb[0].mxu0 %v390
        %v1286 = vpop.f32.mrb[0].mxu0
        %v1287 = vadd.f32 0.0, %v1286
        %v1288 = vpop.f32.mrb[0].mxu0
        %v1289 = vadd.f32 0.0, %v1288
        %v1290 = vpop.f32.mrb[0].mxu0
        %v1291 = vadd.f32 0.0, %v1290
        %v1292 = vpop.f32.mrb[0].mxu0
        %v1293 = vadd.f32 0.0, %v1292
        %1294 = vmatprep.mubr.bf16.mxu0 0
        %1295 = vmatmul.mubr.bf16.gmra.mrb[0].mxu0 %v393
        %v1296 = vpop.f32.mrb[0].mxu0
        %v1297 = vadd.f32 0.0, %v1296
        %v1298 = vpop.f32.mrb[0].mxu0
        %v1299 = vadd.f32 0.0, %v1298
        %v1300 = vpop.f32.mrb[0].mxu0
        %v1301 = vadd.f32 0.0, %v1300
        %v1302 = vpop.f32.mrb[0].mxu0
        %v1303 = vadd.f32 0.0, %v1302
        %1304 = vmatprep.mubr.bf16.mxu0 0
        %1305 = vmatmul.mubr.bf16.gmra.mrb[0].mxu0 %v396
        %v1306 = vpop.f32.mrb[0].mxu0
        %v1307 = vadd.f32 0.0, %v1306
        %v1308 = vpop.f32.mrb[0].mxu0
        %v1309 = vadd.f32 0.0, %v1308
        %v1310 = vpop.f32.mrb[0].mxu0
        %v1311 = vadd.f32 0.0, %v1310
        %v1312 = vpop.f32.mrb[0].mxu0
        %v1313 = vadd.f32 0.0, %v1312
        %1314 = vmatprep.mubr.bf16.mxu0 0
        %1315 = vmatmul.mubr.bf16.gmra.mrb[0].mxu0 %v399
        %v1316 = vpop.f32.mrb[0].mxu0
        %v1317 = vadd.f32 0.0, %v1316
        %v1318 = vpop.f32.mrb[0].mxu0
        %v1319 = vadd.f32 0.0, %v1318
        %v1320 = vpop.f32.mrb[0].mxu0
        %v1321 = vadd.f32 0.0, %v1320
        %v1322 = vpop.f32.mrb[0].mxu0
        %v1323 = vadd.f32 0.0, %v1322
        %1324 = vmatprep.mubr.bf16.mxu0 0
        %1325 = vmatmul.mubr.bf16.gmra.mrb[0].mxu0 %v402
        %v1326 = vpop.f32.mrb[0].mxu0
        %v1327 = vadd.f32 0.0, %v1326
        %v1328 = vpop.f32.mrb[0].mxu0
        %v1329 = vadd.f32 0.0, %v1328
        %v1330 = vpop.f32.mrb[0].mxu0
        %v1331 = vpop.f32.mrb[0].mxu0
        %1332 = vdwg.mxu0
        %v1333 = vlaneseq
        %v1334 = vshrl.u32 %v1333, 7
        %v1335 = vsub.s32 0, %v1334
        %v1336 = vrot.slane %v1172, %v1335
        %v1337 = vlaneseq
        %v1338 = vshrl.u32 %v1337, 7
        %v1339 = vsub.s32 1, %v1338
        %v1340 = vrot.slane %v1172, %v1339
        %vm1341 = vcmp.eq.s32.totalorder %v259, %v1336
        %vm1342 = vcmp.eq.s32.totalorder %v259, %v1340
        %vm1343 = vcmp.eq.s32.totalorder %v260, %v1336
        %vm1344 = vcmp.eq.s32.totalorder %v260, %v1340
        %vm1345 = vcmp.eq.s32.totalorder %v261, %v1336
        %vm1346 = vcmp.eq.s32.totalorder %v261, %v1340
        %v1348 = vlaneseq
        %v1349 = vshrl.u32 %v1348, 7
        %v1350 = vsub.s32 0, %v1349
        %v1351 = vrot.slane %v1167, %v1350
        %v1352 = vlaneseq
        %v1353 = vshrl.u32 %v1352, 7
        %v1354 = vsub.s32 1, %v1353
        %v1355 = vrot.slane %v1167, %v1354
        %v1358 = vsel %vm1341, %v1351, 0.0
        %v1359 = vsel %vm1342, %v1355, 0.0
        %v1360 = vsel %vm1343, %v1351, 0.0
        %v1361 = vsel %vm1344, %v1355, 0.0
        %v1362 = vsel %vm1345, %v1351, 0.0
        %v1363 = vsel %vm1346, %v1355, 0.0
        %v1364 = vlaneseq
        %v1365 = vshrl.u32 %v1364, 7
        %v1366 = vsub.s32 0, %v1365
        %v1367 = vrot.slane %v1173, %v1366
        %v1368 = vlaneseq
        %v1369 = vshrl.u32 %v1368, 7
        %v1370 = vsub.s32 1, %v1369
        %v1371 = vrot.slane %v1173, %v1370
        %vm1372 = vcmp.eq.s32.totalorder %v259, %v1367
        %vm1373 = vcmp.eq.s32.totalorder %v259, %v1371
        %vm1374 = vcmp.eq.s32.totalorder %v260, %v1367
        %vm1375 = vcmp.eq.s32.totalorder %v260, %v1371
        %vm1376 = vcmp.eq.s32.totalorder %v261, %v1367
        %vm1377 = vcmp.eq.s32.totalorder %v261, %v1371
        %v1379 = vlaneseq
        %v1380 = vshrl.u32 %v1379, 7
        %v1381 = vsub.s32 0, %v1380
        %v1382 = vrot.slane %v1169, %v1381
        %v1383 = vlaneseq
        %v1384 = vshrl.u32 %v1383, 7
        %v1385 = vsub.s32 1, %v1384
        %v1386 = vrot.slane %v1169, %v1385
        %v1389 = vsel %vm1372, %v1382, 0.0
        %v1390 = vsel %vm1373, %v1386, 0.0
        %v1391 = vsel %vm1374, %v1382, 0.0
        %v1392 = vsel %vm1375, %v1386, 0.0
        %v1393 = vsel %vm1376, %v1382, 0.0
        %v1394 = vsel %vm1377, %v1386, 0.0
        %v1395 = vadd.f32 %v1358, %v1389
        %v1396 = vadd.f32 %v1359, %v1390
        %v1397 = vadd.f32 %v1360, %v1391
        %v1398 = vadd.f32 %v1361, %v1392
        %v1399 = vadd.f32 %v1362, %v1393
        %v1400 = vadd.f32 %v1363, %v1394
        %v1407 = vrot.slane %v1395, 6
        %v1408 = vrot.slane %v1396, 6
        %v1409 = vrot.slane %v1397, 6
        %v1410 = vsel %vm566, %v1407, %v1409
        %v1411 = vrot.slane %v1398, 6
        %v1412 = vsel %vm566, %v1408, %v1411
        %v1413 = vrot.slane %v1399, 6
        %v1414 = vsel %vm566, %v1409, %v1413
        %v1415 = vrot.slane %v1400, 6
        %v1416 = vsel %vm566, %v1411, %v1415
        %v1423 = vrot.slane %v1395, 4
        %v1424 = vrot.slane %v1396, 4
        %v1425 = vrot.slane %v1397, 4
        %v1426 = vsel %vm583, %v1423, %v1425
        %v1427 = vrot.slane %v1398, 4
        %v1428 = vsel %vm583, %v1424, %v1427
        %v1429 = vrot.slane %v1399, 4
        %v1430 = vsel %vm583, %v1425, %v1429
        %v1431 = vrot.slane %v1400, 4
        %v1432 = vsel %vm583, %v1427, %v1431
        %v1439 = vrot.slane %v1395, 2
        %v1440 = vrot.slane %v1396, 2
        %v1441 = vrot.slane %v1397, 2
        %v1442 = vsel %vm600, %v1439, %v1441
        %v1443 = vrot.slane %v1398, 2
        %v1444 = vsel %vm600, %v1440, %v1443
        %v1445 = vrot.slane %v1399, 2
        %v1446 = vsel %vm600, %v1441, %v1445
        %v1447 = vrot.slane %v1400, 2
        %v1448 = vsel %vm600, %v1443, %v1447
        %v1455 = vsel %vm566, %v1399, %v1407
        %v1456 = vsel %vm566, %v1400, %v1408
        %v1457 = vsel %vm583, %v1414, %v1423
        %v1458 = vsel %vm583, %v1416, %v1424
        %v1459 = vsel %vm600, %v1430, %v1439
        %v1460 = vsel %vm600, %v1432, %v1440
        %v1461 = vmul.f32 %v1287, %v1395
        %v1462 = vmul.f32 %v1289, %v1396
        %v1463 = vmul.f32 %v1291, %v1397
        %v1464 = vmul.f32 %v1293, %v1398
        %v1465 = vmul.f32 %v1297, %v1455
        %v1466 = vmul.f32 %v1299, %v1456
        %v1467 = vmul.f32 %v1301, %v1410
        %v1468 = vmul.f32 %v1303, %v1412
        %v1469 = vmul.f32 %v1307, %v1457
        %v1470 = vmul.f32 %v1309, %v1458
        %v1471 = vmul.f32 %v1311, %v1426
        %v1472 = vmul.f32 %v1313, %v1428
        %v1473 = vmul.f32 %v1317, %v1459
        %v1474 = vmul.f32 %v1319, %v1460
        %v1475 = vmul.f32 %v1321, %v1442
        %v1476 = vmul.f32 %v1323, %v1444
        %v1477 = vmul.f32 %v1327, %v1446
        %v1478 = vmul.f32 %v1329, %v1448
        %1479 = vmatprep.subr.mxu0 %v1462
        %1480 = vmatpush1.msra.mxu0 %v1461
        %1481 = vmatprep.subr.mxu0 %v1464
        %1482 = vmatpush1.msra.mxu0 %v1463
        %1483 = vmatprep.subr.mxu0 %v1466
        %1484 = vmatpush1.msra.mxu0 %v1465
        %1485 = vmatprep.subr.mxu0 %v1468
        %1486 = vmatpush1.msra.mxu0 %v1467
        %1487 = vmatprep.subr.mxu0 %v1470
        %1488 = vmatpush1.msra.mxu0 %v1469
        %1489 = vmatprep.subr.mxu0 %v1472
        %1490 = vmatpush1.msra.mxu0 %v1471
        %1491 = vmatprep.subr.mxu0 %v1474
        %1492 = vmatpush1.msra.mxu0 %v1473
        %1493 = vmatprep.subr.mxu0 %v1476
        %1494 = vmatpush1.msra.mxu0 %v1475
        %1495 = vmatprep.subr.mxu0 %v1478
        %1496 = vmatpush1.msra.mxu0 %v1477
        %1497 = vmatprep.subr.mxu0 0.0
        %1498 = vmatpush1.msra.mxu0 0.0
        %1499 = vmatprep.subr.mxu0 0.0
        %1500 = vmatpush1.msra.mxu0 0.0
        %1501 = vmatprep.subr.mxu0 0.0
        %1502 = vmatpush1.msra.mxu0 0.0
        %1503 = vmatprep.subr.mxu0 0.0
        %1504 = vmatpush1.msra.mxu0 0.0
        %1505 = vmatprep.subr.mxu0 0.0
        %1506 = vmatpush1.msra.mxu0 0.0
        %1507 = vmatprep.subr.mxu0 0.0
        %1508 = vmatpush1.msra.mxu0 0.0
        %1509 = vmatprep.subr.mxu0 0.0
        %1510 = vmatpush1.msra.mxu0 0.0
        %1511 = vmatprep.subr.mxu0 0.0
        %1512 = vmatpush1.msra.mxu0 0.0
        %1513 = vmatprep.subr.mxu0 0.0
        %1514 = vmatpush1.msra.mxu0 0.0
        %1515 = vmatprep.subr.mxu0 0.0
        %1516 = vmatpush1.msra.mxu0 0.0
        %1517 = vmatprep.subr.mxu0 0.0
        %1518 = vmatpush1.msra.mxu0 0.0
        %1519 = vmatprep.subr.mxu0 0.0
        %1520 = vmatpush1.msra.mxu0 0.0
        %1521 = vmatprep.subr.mxu0 0.0
        %1522 = vmatpush1.msra.mxu0 0.0
        %1523 = vmatprep.subr.mxu0 0.0
        %1524 = vmatpush1.msra.mxu0 0.0
        %1525 = vmatprep.subr.mxu0 0.0
        %1526 = vmatpush1.msra.mxu0 0.0
        %1527 = vmatprep.subr.mxu0 0.0
        %1528 = vmatpush1.msra.mxu0 0.0
        %1529 = vmatprep.subr.mxu0 0.0
        %1530 = vmatpush1.msra.mxu0 0.0
        %1531 = vmatprep.subr.mxu0 0.0
        %1532 = vmatpush1.msra.mxu0 0.0
        %1533 = vmatprep.subr.mxu0 0.0
        %1534 = vmatpush1.msra.mxu0 0.0
        %1535 = vmatprep.subr.mxu0 0.0
        %1536 = vmatpush1.msra.mxu0 0.0
        %1537 = vmatprep.subr.mxu0 0.0
        %1538 = vmatpush1.msra.mxu0 0.0
        %1539 = vmatprep.subr.mxu0 0.0
        %1540 = vmatpush1.msra.mxu0 0.0
        %1541 = vmatprep.subr.mxu0 0.0
        %1542 = vmatpush1.msra.mxu0 0.0
        %1543 = vmatprep.mubr.f32.mxu0 0.0
        %1544 = vmatmul.mubr.f32.gmra.mrb[0].mxu0 %v643
        %v1545 = vpop.f32.mrb[0].mxu0
        %v1546 = vadd.f32 0.0, %v1545
        %v1547 = vpop.f32.mrb[0].mxu0
        %v1548 = vadd.f32 0.0, %v1547
        %1549 = vdwg.mxu0
        %v1550 = vpack.c.bf16 %v1546, %v1546
        %v1551 = vpack.c.bf16 %v1548, %v1548
        %v1554 = vunpack.c.l.b16 %v1550
        %v1555 = vunpack.c.l.b16 %v1551
        %v1556 = vpack.c.b16 %v1555, %v1554
        %1558 = vst [vmem:[#allocation2 + $0x10] sm:$0xff] %v1556
        %s1559 = scalar_lea.vmem %s244, 3
        %v1560 = vld [vmem:[%s1559] ss:$8 sm:$0x3]
        %s1561 = scalar_lea.vmem %s244, 20
        %v1562 = vld [vmem:[%s1561] ss:$8 sm:$0x3]
        %v1563 = vfloor.f32 %v1560
        %v1564 = vfloor.f32 %v1562
        %v1565 = vmax.f32 %v1563, 0.0
        %v1566 = vmin.f32 %v1565, 17.0
        %v1567 = vadd.f32 %v1563, 1.0
        %v1568 = vmax.f32 %v1567, 0.0
        %v1569 = vmin.f32 %v1568, 17.0
        %v1570 = vmax.f32 %v1564, 0.0
        %v1571 = vmin.f32 %v1570, 17.0
        %v1572 = vadd.f32 %v1564, 1.0
        %v1573 = vmax.f32 %v1572, 0.0
        %v1574 = vmin.f32 %v1573, 17.0
        %v1575 = vmax.f32 %v1560, 0.0
        %v1576 = vmin.f32 %v1575, 17.0
        %v1577 = vmax.f32 %v1562, 0.0
        %v1578 = vmin.f32 %v1577, 17.0
        %v1579 = vsub.f32 %v1566, %v1576
        %v1580 = vadd.f32 %v1579, 1.0
        %v1581 = vsub.f32 %v1569, %v1576
        %v1582 = vsub.f32 1.0, %v1581
        %v1583 = vsub.f32 %v1571, %v1578
        %v1584 = vadd.f32 %v1583, 1.0
        %v1585 = vsub.f32 %v1574, %v1578
        %v1586 = vsub.f32 1.0, %v1585
        %v1587 = vcvt.f32.s32.to.zero.pseudo %v1566
        %v1588 = vcvt.f32.s32.to.zero.pseudo %v1569
        %v1589 = vcvt.f32.s32.to.zero.pseudo %v1571
        %v1590 = vcvt.f32.s32.to.zero.pseudo %v1574
        %v1591 = vlaneseq
        %v1592 = vshrl.u32 %v1591, 7
        %v1593 = vsub.s32 0, %v1592
        %v1594 = vrot.slane %v1587, %v1593
        %v1595 = vlaneseq
        %v1596 = vshrl.u32 %v1595, 7
        %v1597 = vsub.s32 1, %v1596
        %v1598 = vrot.slane %v1587, %v1597
        %vm1599 = vcmp.eq.s32.totalorder %v259, %v1594
        %vm1600 = vcmp.eq.s32.totalorder %v259, %v1598
        %vm1601 = vcmp.eq.s32.totalorder %v260, %v1594
        %vm1602 = vcmp.eq.s32.totalorder %v260, %v1598
        %vm1603 = vcmp.eq.s32.totalorder %v261, %v1594
        %vm1604 = vcmp.eq.s32.totalorder %v261, %v1598
        %v1606 = vlaneseq
        %v1607 = vshrl.u32 %v1606, 7
        %v1608 = vsub.s32 0, %v1607
        %v1609 = vrot.slane %v1580, %v1608
        %v1610 = vlaneseq
        %v1611 = vshrl.u32 %v1610, 7
        %v1612 = vsub.s32 1, %v1611
        %v1613 = vrot.slane %v1580, %v1612
        %v1616 = vsel %vm1599, %v1609, 0.0
        %v1617 = vsel %vm1600, %v1613, 0.0
        %v1618 = vsel %vm1601, %v1609, 0.0
        %v1619 = vsel %vm1602, %v1613, 0.0
        %v1620 = vsel %vm1603, %v1609, 0.0
        %v1621 = vsel %vm1604, %v1613, 0.0
        %v1622 = vlaneseq
        %v1623 = vshrl.u32 %v1622, 7
        %v1624 = vsub.s32 0, %v1623
        %v1625 = vrot.slane %v1588, %v1624
        %v1626 = vlaneseq
        %v1627 = vshrl.u32 %v1626, 7
        %v1628 = vsub.s32 1, %v1627
        %v1629 = vrot.slane %v1588, %v1628
        %vm1630 = vcmp.eq.s32.totalorder %v259, %v1625
        %vm1631 = vcmp.eq.s32.totalorder %v259, %v1629
        %vm1632 = vcmp.eq.s32.totalorder %v260, %v1625
        %vm1633 = vcmp.eq.s32.totalorder %v260, %v1629
        %vm1634 = vcmp.eq.s32.totalorder %v261, %v1625
        %vm1635 = vcmp.eq.s32.totalorder %v261, %v1629
        %v1637 = vlaneseq
        %v1638 = vshrl.u32 %v1637, 7
        %v1639 = vsub.s32 0, %v1638
        %v1640 = vrot.slane %v1582, %v1639
        %v1641 = vlaneseq
        %v1642 = vshrl.u32 %v1641, 7
        %v1643 = vsub.s32 1, %v1642
        %v1644 = vrot.slane %v1582, %v1643
        %v1647 = vsel %vm1630, %v1640, 0.0
        %v1648 = vsel %vm1631, %v1644, 0.0
        %v1649 = vsel %vm1632, %v1640, 0.0
        %v1650 = vsel %vm1633, %v1644, 0.0
        %v1651 = vsel %vm1634, %v1640, 0.0
        %v1652 = vsel %vm1635, %v1644, 0.0
        %v1653 = vadd.f32 %v1616, %v1647
        %v1654 = vadd.f32 %v1617, %v1648
        %v1655 = vadd.f32 %v1618, %v1649
        %v1656 = vadd.f32 %v1619, %v1650
        %v1657 = vadd.f32 %v1620, %v1651
        %v1658 = vadd.f32 %v1621, %v1652
        %v1659 = vpack.c.bf16 %v1655, %v1653
        %v1660 = vpack.c.bf16 %v1656, %v1654
        %v1661 = vpack.c.bf16 %v1657, %v1657
        %v1662 = vpack.c.bf16 %v1658, %v1658
        %v1664 = vsel %vm404, %v1661, 0
        %v1667 = vsel %vm404, %v1662, 0
        %1669 = vmatprep.subr.bf16.mxu0 %v1660
        %1670 = vmatpush1.bf16.msra.mxu0 %v1659
        %1671 = vmatprep.subr.bf16.mxu0 %v1667
        %1672 = vmatpush1.bf16.msra.mxu0 %v1664
        %1673 = vmatprep.subr.bf16.mxu0 0
        %1674 = vmatpush1.bf16.msra.mxu0 0
        %1675 = vmatprep.subr.bf16.mxu0 0
        %1676 = vmatpush1.bf16.msra.mxu0 0
        %1677 = vmatprep.subr.bf16.mxu0 0
        %1678 = vmatpush1.bf16.msra.mxu0 0
        %1679 = vmatprep.subr.bf16.mxu0 0
        %1680 = vmatpush1.bf16.msra.mxu0 0
        %1681 = vmatprep.subr.bf16.mxu0 0
        %1682 = vmatpush1.bf16.msra.mxu0 0
        %1683 = vmatprep.subr.bf16.mxu0 0
        %1684 = vmatpush1.bf16.msra.mxu0 0
        %1685 = vmatprep.subr.bf16.mxu0 0
        %1686 = vmatpush1.bf16.msra.mxu0 0
        %1687 = vmatprep.subr.bf16.mxu0 0
        %1688 = vmatpush1.bf16.msra.mxu0 0
        %1689 = vmatprep.subr.bf16.mxu0 0
        %1690 = vmatpush1.bf16.msra.mxu0 0
        %1691 = vmatprep.subr.bf16.mxu0 0
        %1692 = vmatpush1.bf16.msra.mxu0 0
        %1693 = vmatprep.subr.bf16.mxu0 0
        %1694 = vmatpush1.bf16.msra.mxu0 0
        %1695 = vmatprep.subr.bf16.mxu0 0
        %1696 = vmatpush1.bf16.msra.mxu0 0
        %1697 = vmatprep.subr.bf16.mxu0 0
        %1698 = vmatpush1.bf16.msra.mxu0 0
        %1699 = vmatprep.subr.bf16.mxu0 0
        %1700 = vmatpush1.bf16.msra.mxu0 0
        %1701 = vmatprep.mubr.bf16.mxu0 0
        %1702 = vmatmul.mubr.bf16.gmra.mrb[0].mxu0 %v390
        %v1703 = vpop.f32.mrb[0].mxu0
        %v1704 = vadd.f32 0.0, %v1703
        %v1705 = vpop.f32.mrb[0].mxu0
        %v1706 = vadd.f32 0.0, %v1705
        %v1707 = vpop.f32.mrb[0].mxu0
        %v1708 = vadd.f32 0.0, %v1707
        %v1709 = vpop.f32.mrb[0].mxu0
        %v1710 = vadd.f32 0.0, %v1709
        %1711 = vmatprep.mubr.bf16.mxu0 0
        %1712 = vmatmul.mubr.bf16.gmra.mrb[0].mxu0 %v393
        %v1713 = vpop.f32.mrb[0].mxu0
        %v1714 = vadd.f32 0.0, %v1713
        %v1715 = vpop.f32.mrb[0].mxu0
        %v1716 = vadd.f32 0.0, %v1715
        %v1717 = vpop.f32.mrb[0].mxu0
        %v1718 = vadd.f32 0.0, %v1717
        %v1719 = vpop.f32.mrb[0].mxu0
        %v1720 = vadd.f32 0.0, %v1719
        %1721 = vmatprep.mubr.bf16.mxu0 0
        %1722 = vmatmul.mubr.bf16.gmra.mrb[0].mxu0 %v396
        %v1723 = vpop.f32.mrb[0].mxu0
        %v1724 = vadd.f32 0.0, %v1723
        %v1725 = vpop.f32.mrb[0].mxu0
        %v1726 = vadd.f32 0.0, %v1725
        %v1727 = vpop.f32.mrb[0].mxu0
        %v1728 = vadd.f32 0.0, %v1727
        %v1729 = vpop.f32.mrb[0].mxu0
        %v1730 = vadd.f32 0.0, %v1729
        %1731 = vmatprep.mubr.bf16.mxu0 0
        %1732 = vmatmul.mubr.bf16.gmra.mrb[0].mxu0 %v399
        %v1733 = vpop.f32.mrb[0].mxu0
        %v1734 = vadd.f32 0.0, %v1733
        %v1735 = vpop.f32.mrb[0].mxu0
        %v1736 = vadd.f32 0.0, %v1735
        %v1737 = vpop.f32.mrb[0].mxu0
        %v1738 = vadd.f32 0.0, %v1737
        %v1739 = vpop.f32.mrb[0].mxu0
        %v1740 = vadd.f32 0.0, %v1739
        %1741 = vmatprep.mubr.bf16.mxu0 0
        %1742 = vmatmul.mubr.bf16.gmra.mrb[0].mxu0 %v402
        %v1743 = vpop.f32.mrb[0].mxu0
        %v1744 = vadd.f32 0.0, %v1743
        %v1745 = vpop.f32.mrb[0].mxu0
        %v1746 = vadd.f32 0.0, %v1745
        %v1747 = vpop.f32.mrb[0].mxu0
        %v1748 = vpop.f32.mrb[0].mxu0
        %1749 = vdwg.mxu0
        %v1750 = vlaneseq
        %v1751 = vshrl.u32 %v1750, 7
        %v1752 = vsub.s32 0, %v1751
        %v1753 = vrot.slane %v1589, %v1752
        %v1754 = vlaneseq
        %v1755 = vshrl.u32 %v1754, 7
        %v1756 = vsub.s32 1, %v1755
        %v1757 = vrot.slane %v1589, %v1756
        %vm1758 = vcmp.eq.s32.totalorder %v259, %v1753
        %vm1759 = vcmp.eq.s32.totalorder %v259, %v1757
        %vm1760 = vcmp.eq.s32.totalorder %v260, %v1753
        %vm1761 = vcmp.eq.s32.totalorder %v260, %v1757
        %vm1762 = vcmp.eq.s32.totalorder %v261, %v1753
        %vm1763 = vcmp.eq.s32.totalorder %v261, %v1757
        %v1765 = vlaneseq
        %v1766 = vshrl.u32 %v1765, 7
        %v1767 = vsub.s32 0, %v1766
        %v1768 = vrot.slane %v1584, %v1767
        %v1769 = vlaneseq
        %v1770 = vshrl.u32 %v1769, 7
        %v1771 = vsub.s32 1, %v1770
        %v1772 = vrot.slane %v1584, %v1771
        %v1775 = vsel %vm1758, %v1768, 0.0
        %v1776 = vsel %vm1759, %v1772, 0.0
        %v1777 = vsel %vm1760, %v1768, 0.0
        %v1778 = vsel %vm1761, %v1772, 0.0
        %v1779 = vsel %vm1762, %v1768, 0.0
        %v1780 = vsel %vm1763, %v1772, 0.0
        %v1781 = vlaneseq
        %v1782 = vshrl.u32 %v1781, 7
        %v1783 = vsub.s32 0, %v1782
        %v1784 = vrot.slane %v1590, %v1783
        %v1785 = vlaneseq
        %v1786 = vshrl.u32 %v1785, 7
        %v1787 = vsub.s32 1, %v1786
        %v1788 = vrot.slane %v1590, %v1787
        %vm1789 = vcmp.eq.s32.totalorder %v259, %v1784
        %vm1790 = vcmp.eq.s32.totalorder %v259, %v1788
        %vm1791 = vcmp.eq.s32.totalorder %v260, %v1784
        %vm1792 = vcmp.eq.s32.totalorder %v260, %v1788
        %vm1793 = vcmp.eq.s32.totalorder %v261, %v1784
        %vm1794 = vcmp.eq.s32.totalorder %v261, %v1788
        %v1796 = vlaneseq
        %v1797 = vshrl.u32 %v1796, 7
        %v1798 = vsub.s32 0, %v1797
        %v1799 = vrot.slane %v1586, %v1798
        %v1800 = vlaneseq
        %v1801 = vshrl.u32 %v1800, 7
        %v1802 = vsub.s32 1, %v1801
        %v1803 = vrot.slane %v1586, %v1802
        %v1806 = vsel %vm1789, %v1799, 0.0
        %v1807 = vsel %vm1790, %v1803, 0.0
        %v1808 = vsel %vm1791, %v1799, 0.0
        %v1809 = vsel %vm1792, %v1803, 0.0
        %v1810 = vsel %vm1793, %v1799, 0.0
        %v1811 = vsel %vm1794, %v1803, 0.0
        %v1812 = vadd.f32 %v1775, %v1806
        %v1813 = vadd.f32 %v1776, %v1807
        %v1814 = vadd.f32 %v1777, %v1808
        %v1815 = vadd.f32 %v1778, %v1809
        %v1816 = vadd.f32 %v1779, %v1810
        %v1817 = vadd.f32 %v1780, %v1811
        %v1824 = vrot.slane %v1812, 6
        %v1825 = vrot.slane %v1813, 6
        %v1826 = vrot.slane %v1814, 6
        %v1827 = vsel %vm566, %v1824, %v1826
        %v1828 = vrot.slane %v1815, 6
        %v1829 = vsel %vm566, %v1825, %v1828
        %v1830 = vrot.slane %v1816, 6
        %v1831 = vsel %vm566, %v1826, %v1830
        %v1832 = vrot.slane %v1817, 6
        %v1833 = vsel %vm566, %v1828, %v1832
        %v1840 = vrot.slane %v1812, 4
        %v1841 = vrot.slane %v1813, 4
        %v1842 = vrot.slane %v1814, 4
        %v1843 = vsel %vm583, %v1840, %v1842
        %v1844 = vrot.slane %v1815, 4
        %v1845 = vsel %vm583, %v1841, %v1844
        %v1846 = vrot.slane %v1816, 4
        %v1847 = vsel %vm583, %v1842, %v1846
        %v1848 = vrot.slane %v1817, 4
        %v1849 = vsel %vm583, %v1844, %v1848
        %v1856 = vrot.slane %v1812, 2
        %v1857 = vrot.slane %v1813, 2
        %v1858 = vrot.slane %v1814, 2
        %v1859 = vsel %vm600, %v1856, %v1858
        %v1860 = vrot.slane %v1815, 2
        %v1861 = vsel %vm600, %v1857, %v1860
        %v1862 = vrot.slane %v1816, 2
        %v1863 = vsel %vm600, %v1858, %v1862
        %v1864 = vrot.slane %v1817, 2
        %v1865 = vsel %vm600, %v1860, %v1864
        %v1872 = vsel %vm566, %v1816, %v1824
        %v1873 = vsel %vm566, %v1817, %v1825
        %v1874 = vsel %vm583, %v1831, %v1840
        %v1875 = vsel %vm583, %v1833, %v1841
        %v1876 = vsel %vm600, %v1847, %v1856
        %v1877 = vsel %vm600, %v1849, %v1857
        %v1878 = vmul.f32 %v1704, %v1812
        %v1879 = vmul.f32 %v1706, %v1813
        %v1880 = vmul.f32 %v1708, %v1814
        %v1881 = vmul.f32 %v1710, %v1815
        %v1882 = vmul.f32 %v1714, %v1872
        %v1883 = vmul.f32 %v1716, %v1873
        %v1884 = vmul.f32 %v1718, %v1827
        %v1885 = vmul.f32 %v1720, %v1829
        %v1886 = vmul.f32 %v1724, %v1874
        %v1887 = vmul.f32 %v1726, %v1875
        %v1888 = vmul.f32 %v1728, %v1843
        %v1889 = vmul.f32 %v1730, %v1845
        %v1890 = vmul.f32 %v1734, %v1876
        %v1891 = vmul.f32 %v1736, %v1877
        %v1892 = vmul.f32 %v1738, %v1859
        %v1893 = vmul.f32 %v1740, %v1861
        %v1894 = vmul.f32 %v1744, %v1863
        %v1895 = vmul.f32 %v1746, %v1865
        %1896 = vmatprep.subr.mxu0 %v1879
        %1897 = vmatpush1.msra.mxu0 %v1878
        %1898 = vmatprep.subr.mxu0 %v1881
        %1899 = vmatpush1.msra.mxu0 %v1880
        %1900 = vmatprep.subr.mxu0 %v1883
        %1901 = vmatpush1.msra.mxu0 %v1882
        %1902 = vmatprep.subr.mxu0 %v1885
        %1903 = vmatpush1.msra.mxu0 %v1884
        %1904 = vmatprep.subr.mxu0 %v1887
        %1905 = vmatpush1.msra.mxu0 %v1886
        %1906 = vmatprep.subr.mxu0 %v1889
        %1907 = vmatpush1.msra.mxu0 %v1888
        %1908 = vmatprep.subr.mxu0 %v1891
        %1909 = vmatpush1.msra.mxu0 %v1890
        %1910 = vmatprep.subr.mxu0 %v1893
        %1911 = vmatpush1.msra.mxu0 %v1892
        %1912 = vmatprep.subr.mxu0 %v1895
        %1913 = vmatpush1.msra.mxu0 %v1894
        %1914 = vmatprep.subr.mxu0 0.0
        %1915 = vmatpush1.msra.mxu0 0.0
        %1916 = vmatprep.subr.mxu0 0.0
        %1917 = vmatpush1.msra.mxu0 0.0
        %1918 = vmatprep.subr.mxu0 0.0
        %1919 = vmatpush1.msra.mxu0 0.0
        %1920 = vmatprep.subr.mxu0 0.0
        %1921 = vmatpush1.msra.mxu0 0.0
        %1922 = vmatprep.subr.mxu0 0.0
        %1923 = vmatpush1.msra.mxu0 0.0
        %1924 = vmatprep.subr.mxu0 0.0
        %1925 = vmatpush1.msra.mxu0 0.0
        %1926 = vmatprep.subr.mxu0 0.0
        %1927 = vmatpush1.msra.mxu0 0.0
        %1928 = vmatprep.subr.mxu0 0.0
        %1929 = vmatpush1.msra.mxu0 0.0
        %1930 = vmatprep.subr.mxu0 0.0
        %1931 = vmatpush1.msra.mxu0 0.0
        %1932 = vmatprep.subr.mxu0 0.0
        %1933 = vmatpush1.msra.mxu0 0.0
        %1934 = vmatprep.subr.mxu0 0.0
        %1935 = vmatpush1.msra.mxu0 0.0
        %1936 = vmatprep.subr.mxu0 0.0
        %1937 = vmatpush1.msra.mxu0 0.0
        %1938 = vmatprep.subr.mxu0 0.0
        %1939 = vmatpush1.msra.mxu0 0.0
        %1940 = vmatprep.subr.mxu0 0.0
        %1941 = vmatpush1.msra.mxu0 0.0
        %1942 = vmatprep.subr.mxu0 0.0
        %1943 = vmatpush1.msra.mxu0 0.0
        %1944 = vmatprep.subr.mxu0 0.0
        %1945 = vmatpush1.msra.mxu0 0.0
        %1946 = vmatprep.subr.mxu0 0.0
        %1947 = vmatpush1.msra.mxu0 0.0
        %1948 = vmatprep.subr.mxu0 0.0
        %1949 = vmatpush1.msra.mxu0 0.0
        %1950 = vmatprep.subr.mxu0 0.0
        %1951 = vmatpush1.msra.mxu0 0.0
        %1952 = vmatprep.subr.mxu0 0.0
        %1953 = vmatpush1.msra.mxu0 0.0
        %1954 = vmatprep.subr.mxu0 0.0
        %1955 = vmatpush1.msra.mxu0 0.0
        %1956 = vmatprep.subr.mxu0 0.0
        %1957 = vmatpush1.msra.mxu0 0.0
        %1958 = vmatprep.subr.mxu0 0.0
        %1959 = vmatpush1.msra.mxu0 0.0
        %1960 = vmatprep.mubr.f32.mxu0 0.0
        %1961 = vmatmul.mubr.f32.gmra.mrb[0].mxu0 %v643
        %v1962 = vpop.f32.mrb[0].mxu0
        %v1963 = vadd.f32 0.0, %v1962
        %v1964 = vpop.f32.mrb[0].mxu0
        %v1965 = vadd.f32 0.0, %v1964
        %1966 = vdwg.mxu0
        %v1967 = vpack.c.bf16 %v1963, %v1963
        %v1968 = vpack.c.bf16 %v1965, %v1965
        %v1971 = vunpack.c.l.b16 %v1967
        %v1972 = vunpack.c.l.b16 %v1968
        %v1973 = vpack.c.b16 %v1972, %v1971
        %1975 = vst [vmem:[#allocation2 + $0x18] sm:$0xff] %v1973
        %s1976 = scalar_lea.vmem %s244, 4
        %v1977 = vld [vmem:[%s1976] ss:$8 sm:$0x3]
        %s1978 = scalar_lea.vmem %s244, 21
        %v1979 = vld [vmem:[%s1978] ss:$8 sm:$0x3]
        %v1980 = vfloor.f32 %v1977
        %v1981 = vfloor.f32 %v1979
        %v1982 = vmax.f32 %v1980, 0.0
        %v1983 = vmin.f32 %v1982, 17.0
        %v1984 = vadd.f32 %v1980, 1.0
        %v1985 = vmax.f32 %v1984, 0.0
        %v1986 = vmin.f32 %v1985, 17.0
        %v1987 = vmax.f32 %v1981, 0.0
        %v1988 = vmin.f32 %v1987, 17.0
        %v1989 = vadd.f32 %v1981, 1.0
        %v1990 = vmax.f32 %v1989, 0.0
        %v1991 = vmin.f32 %v1990, 17.0
        %v1992 = vmax.f32 %v1977, 0.0
        %v1993 = vmin.f32 %v1992, 17.0
        %v1994 = vmax.f32 %v1979, 0.0
        %v1995 = vmin.f32 %v1994, 17.0
        %v1996 = vsub.f32 %v1983, %v1993
        %v1997 = vadd.f32 %v1996, 1.0
        %v1998 = vsub.f32 %v1986, %v1993
        %v1999 = vsub.f32 1.0, %v1998
        %v2000 = vsub.f32 %v1988, %v1995
        %v2001 = vadd.f32 %v2000, 1.0
        %v2002 = vsub.f32 %v1991, %v1995
        %v2003 = vsub.f32 1.0, %v2002
        %v2004 = vcvt.f32.s32.to.zero.pseudo %v1983
        %v2005 = vcvt.f32.s32.to.zero.pseudo %v1986
        %v2006 = vcvt.f32.s32.to.zero.pseudo %v1988
        %v2007 = vcvt.f32.s32.to.zero.pseudo %v1991
        %v2008 = vlaneseq
        %v2009 = vshrl.u32 %v2008, 7
        %v2010 = vsub.s32 0, %v2009
        %v2011 = vrot.slane %v2004, %v2010
        %v2012 = vlaneseq
        %v2013 = vshrl.u32 %v2012, 7
        %v2014 = vsub.s32 1, %v2013
        %v2015 = vrot.slane %v2004, %v2014
        %vm2016 = vcmp.eq.s32.totalorder %v259, %v2011
        %vm2017 = vcmp.eq.s32.totalorder %v259, %v2015
        %vm2018 = vcmp.eq.s32.totalorder %v260, %v2011
        %vm2019 = vcmp.eq.s32.totalorder %v260, %v2015
        %vm2020 = vcmp.eq.s32.totalorder %v261, %v2011
        %vm2021 = vcmp.eq.s32.totalorder %v261, %v2015
        %v2023 = vlaneseq
        %v2024 = vshrl.u32 %v2023, 7
        %v2025 = vsub.s32 0, %v2024
        %v2026 = vrot.slane %v1997, %v2025
        %v2027 = vlaneseq
        %v2028 = vshrl.u32 %v2027, 7
        %v2029 = vsub.s32 1, %v2028
        %v2030 = vrot.slane %v1997, %v2029
        %v2033 = vsel %vm2016, %v2026, 0.0
        %v2034 = vsel %vm2017, %v2030, 0.0
        %v2035 = vsel %vm2018, %v2026, 0.0
        %v2036 = vsel %vm2019, %v2030, 0.0
        %v2037 = vsel %vm2020, %v2026, 0.0
        %v2038 = vsel %vm2021, %v2030, 0.0
        %v2039 = vlaneseq
        %v2040 = vshrl.u32 %v2039, 7
        %v2041 = vsub.s32 0, %v2040
        %v2042 = vrot.slane %v2005, %v2041
        %v2043 = vlaneseq
        %v2044 = vshrl.u32 %v2043, 7
        %v2045 = vsub.s32 1, %v2044
        %v2046 = vrot.slane %v2005, %v2045
        %vm2047 = vcmp.eq.s32.totalorder %v259, %v2042
        %vm2048 = vcmp.eq.s32.totalorder %v259, %v2046
        %vm2049 = vcmp.eq.s32.totalorder %v260, %v2042
        %vm2050 = vcmp.eq.s32.totalorder %v260, %v2046
        %vm2051 = vcmp.eq.s32.totalorder %v261, %v2042
        %vm2052 = vcmp.eq.s32.totalorder %v261, %v2046
        %v2054 = vlaneseq
        %v2055 = vshrl.u32 %v2054, 7
        %v2056 = vsub.s32 0, %v2055
        %v2057 = vrot.slane %v1999, %v2056
        %v2058 = vlaneseq
        %v2059 = vshrl.u32 %v2058, 7
        %v2060 = vsub.s32 1, %v2059
        %v2061 = vrot.slane %v1999, %v2060
        %v2064 = vsel %vm2047, %v2057, 0.0
        %v2065 = vsel %vm2048, %v2061, 0.0
        %v2066 = vsel %vm2049, %v2057, 0.0
        %v2067 = vsel %vm2050, %v2061, 0.0
        %v2068 = vsel %vm2051, %v2057, 0.0
        %v2069 = vsel %vm2052, %v2061, 0.0
        %v2070 = vadd.f32 %v2033, %v2064
        %v2071 = vadd.f32 %v2034, %v2065
        %v2072 = vadd.f32 %v2035, %v2066
        %v2073 = vadd.f32 %v2036, %v2067
        %v2074 = vadd.f32 %v2037, %v2068
        %v2075 = vadd.f32 %v2038, %v2069
        %v2076 = vpack.c.bf16 %v2072, %v2070
        %v2077 = vpack.c.bf16 %v2073, %v2071
        %v2078 = vpack.c.bf16 %v2074, %v2074
        %v2079 = vpack.c.bf16 %v2075, %v2075
        %v2081 = vsel %vm404, %v2078, 0
        %v2084 = vsel %vm404, %v2079, 0
        %2086 = vmatprep.subr.bf16.mxu0 %v2077
        %2087 = vmatpush1.bf16.msra.mxu0 %v2076
        %2088 = vmatprep.subr.bf16.mxu0 %v2084
        %2089 = vmatpush1.bf16.msra.mxu0 %v2081
        %2090 = vmatprep.subr.bf16.mxu0 0
        %2091 = vmatpush1.bf16.msra.mxu0 0
        %2092 = vmatprep.subr.bf16.mxu0 0
        %2093 = vmatpush1.bf16.msra.mxu0 0
        %2094 = vmatprep.subr.bf16.mxu0 0
        %2095 = vmatpush1.bf16.msra.mxu0 0
        %2096 = vmatprep.subr.bf16.mxu0 0
        %2097 = vmatpush1.bf16.msra.mxu0 0
        %2098 = vmatprep.subr.bf16.mxu0 0
        %2099 = vmatpush1.bf16.msra.mxu0 0
        %2100 = vmatprep.subr.bf16.mxu0 0
        %2101 = vmatpush1.bf16.msra.mxu0 0
        %2102 = vmatprep.subr.bf16.mxu0 0
        %2103 = vmatpush1.bf16.msra.mxu0 0
        %2104 = vmatprep.subr.bf16.mxu0 0
        %2105 = vmatpush1.bf16.msra.mxu0 0
        %2106 = vmatprep.subr.bf16.mxu0 0
        %2107 = vmatpush1.bf16.msra.mxu0 0
        %2108 = vmatprep.subr.bf16.mxu0 0
        %2109 = vmatpush1.bf16.msra.mxu0 0
        %2110 = vmatprep.subr.bf16.mxu0 0
        %2111 = vmatpush1.bf16.msra.mxu0 0
        %2112 = vmatprep.subr.bf16.mxu0 0
        %2113 = vmatpush1.bf16.msra.mxu0 0
        %2114 = vmatprep.subr.bf16.mxu0 0
        %2115 = vmatpush1.bf16.msra.mxu0 0
        %2116 = vmatprep.subr.bf16.mxu0 0
        %2117 = vmatpush1.bf16.msra.mxu0 0
        %2118 = vmatprep.mubr.bf16.mxu0 0
        %2119 = vmatmul.mubr.bf16.gmra.mrb[0].mxu0 %v390
        %v2120 = vpop.f32.mrb[0].mxu0
        %v2121 = vadd.f32 0.0, %v2120
        %v2122 = vpop.f32.mrb[0].mxu0
        %v2123 = vadd.f32 0.0, %v2122
        %v2124 = vpop.f32.mrb[0].mxu0
        %v2125 = vadd.f32 0.0, %v2124
        %v2126 = vpop.f32.mrb[0].mxu0
        %v2127 = vadd.f32 0.0, %v2126
        %2128 = vmatprep.mubr.bf16.mxu0 0
        %2129 = vmatmul.mubr.bf16.gmra.mrb[0].mxu0 %v393
        %v2130 = vpop.f32.mrb[0].mxu0
        %v2131 = vadd.f32 0.0, %v2130
        %v2132 = vpop.f32.mrb[0].mxu0
        %v2133 = vadd.f32 0.0, %v2132
        %v2134 = vpop.f32.mrb[0].mxu0
        %v2135 = vadd.f32 0.0, %v2134
        %v2136 = vpop.f32.mrb[0].mxu0
        %v2137 = vadd.f32 0.0, %v2136
        %2138 = vmatprep.mubr.bf16.mxu0 0
        %2139 = vmatmul.mubr.bf16.gmra.mrb[0].mxu0 %v396
        %v2140 = vpop.f32.mrb[0].mxu0
        %v2141 = vadd.f32 0.0, %v2140
        %v2142 = vpop.f32.mrb[0].mxu0
        %v2143 = vadd.f32 0.0, %v2142
        %v2144 = vpop.f32.mrb[0].mxu0
        %v2145 = vadd.f32 0.0, %v2144
        %v2146 = vpop.f32.mrb[0].mxu0
        %v2147 = vadd.f32 0.0, %v2146
        %2148 = vmatprep.mubr.bf16.mxu0 0
        %2149 = vmatmul.mubr.bf16.gmra.mrb[0].mxu0 %v399
        %v2150 = vpop.f32.mrb[0].mxu0
        %v2151 = vadd.f32 0.0, %v2150
        %v2152 = vpop.f32.mrb[0].mxu0
        %v2153 = vadd.f32 0.0, %v2152
        %v2154 = vpop.f32.mrb[0].mxu0
        %v2155 = vadd.f32 0.0, %v2154
        %v2156 = vpop.f32.mrb[0].mxu0
        %v2157 = vadd.f32 0.0, %v2156
        %2158 = vmatprep.mubr.bf16.mxu0 0
        %2159 = vmatmul.mubr.bf16.gmra.mrb[0].mxu0 %v402
        %v2160 = vpop.f32.mrb[0].mxu0
        %v2161 = vadd.f32 0.0, %v2160
        %v2162 = vpop.f32.mrb[0].mxu0
        %v2163 = vadd.f32 0.0, %v2162
        %v2164 = vpop.f32.mrb[0].mxu0
        %v2165 = vpop.f32.mrb[0].mxu0
        %2166 = vdwg.mxu0
        %v2167 = vlaneseq
        %v2168 = vshrl.u32 %v2167, 7
        %v2169 = vsub.s32 0, %v2168
        %v2170 = vrot.slane %v2006, %v2169
        %v2171 = vlaneseq
        %v2172 = vshrl.u32 %v2171, 7
        %v2173 = vsub.s32 1, %v2172
        %v2174 = vrot.slane %v2006, %v2173
        %vm2175 = vcmp.eq.s32.totalorder %v259, %v2170
        %vm2176 = vcmp.eq.s32.totalorder %v259, %v2174
        %vm2177 = vcmp.eq.s32.totalorder %v260, %v2170
        %vm2178 = vcmp.eq.s32.totalorder %v260, %v2174
        %vm2179 = vcmp.eq.s32.totalorder %v261, %v2170
        %vm2180 = vcmp.eq.s32.totalorder %v261, %v2174
        %v2182 = vlaneseq
        %v2183 = vshrl.u32 %v2182, 7
        %v2184 = vsub.s32 0, %v2183
        %v2185 = vrot.slane %v2001, %v2184
        %v2186 = vlaneseq
        %v2187 = vshrl.u32 %v2186, 7
        %v2188 = vsub.s32 1, %v2187
        %v2189 = vrot.slane %v2001, %v2188
        %v2192 = vsel %vm2175, %v2185, 0.0
        %v2193 = vsel %vm2176, %v2189, 0.0
        %v2194 = vsel %vm2177, %v2185, 0.0
        %v2195 = vsel %vm2178, %v2189, 0.0
        %v2196 = vsel %vm2179, %v2185, 0.0
        %v2197 = vsel %vm2180, %v2189, 0.0
        %v2198 = vlaneseq
        %v2199 = vshrl.u32 %v2198, 7
        %v2200 = vsub.s32 0, %v2199
        %v2201 = vrot.slane %v2007, %v2200
        %v2202 = vlaneseq
        %v2203 = vshrl.u32 %v2202, 7
        %v2204 = vsub.s32 1, %v2203
        %v2205 = vrot.slane %v2007, %v2204
        %vm2206 = vcmp.eq.s32.totalorder %v259, %v2201
        %vm2207 = vcmp.eq.s32.totalorder %v259, %v2205
        %vm2208 = vcmp.eq.s32.totalorder %v260, %v2201
        %vm2209 = vcmp.eq.s32.totalorder %v260, %v2205
        %vm2210 = vcmp.eq.s32.totalorder %v261, %v2201
        %vm2211 = vcmp.eq.s32.totalorder %v261, %v2205
        %v2213 = vlaneseq
        %v2214 = vshrl.u32 %v2213, 7
        %v2215 = vsub.s32 0, %v2214
        %v2216 = vrot.slane %v2003, %v2215
        %v2217 = vlaneseq
        %v2218 = vshrl.u32 %v2217, 7
        %v2219 = vsub.s32 1, %v2218
        %v2220 = vrot.slane %v2003, %v2219
        %v2223 = vsel %vm2206, %v2216, 0.0
        %v2224 = vsel %vm2207, %v2220, 0.0
        %v2225 = vsel %vm2208, %v2216, 0.0
        %v2226 = vsel %vm2209, %v2220, 0.0
        %v2227 = vsel %vm2210, %v2216, 0.0
        %v2228 = vsel %vm2211, %v2220, 0.0
        %v2229 = vadd.f32 %v2192, %v2223
        %v2230 = vadd.f32 %v2193, %v2224
        %v2231 = vadd.f32 %v2194, %v2225
        %v2232 = vadd.f32 %v2195, %v2226
        %v2233 = vadd.f32 %v2196, %v2227
        %v2234 = vadd.f32 %v2197, %v2228
        %v2241 = vrot.slane %v2229, 6
        %v2242 = vrot.slane %v2230, 6
        %v2243 = vrot.slane %v2231, 6
        %v2244 = vsel %vm566, %v2241, %v2243
        %v2245 = vrot.slane %v2232, 6
        %v2246 = vsel %vm566, %v2242, %v2245
        %v2247 = vrot.slane %v2233, 6
        %v2248 = vsel %vm566, %v2243, %v2247
        %v2249 = vrot.slane %v2234, 6
        %v2250 = vsel %vm566, %v2245, %v2249
        %v2257 = vrot.slane %v2229, 4
        %v2258 = vrot.slane %v2230, 4
        %v2259 = vrot.slane %v2231, 4
        %v2260 = vsel %vm583, %v2257, %v2259
        %v2261 = vrot.slane %v2232, 4
        %v2262 = vsel %vm583, %v2258, %v2261
        %v2263 = vrot.slane %v2233, 4
        %v2264 = vsel %vm583, %v2259, %v2263
        %v2265 = vrot.slane %v2234, 4
        %v2266 = vsel %vm583, %v2261, %v2265
        %v2273 = vrot.slane %v2229, 2
        %v2274 = vrot.slane %v2230, 2
        %v2275 = vrot.slane %v2231, 2
        %v2276 = vsel %vm600, %v2273, %v2275
        %v2277 = vrot.slane %v2232, 2
        %v2278 = vsel %vm600, %v2274, %v2277
        %v2279 = vrot.slane %v2233, 2
        %v2280 = vsel %vm600, %v2275, %v2279
        %v2281 = vrot.slane %v2234, 2
        %v2282 = vsel %vm600, %v2277, %v2281
        %v2289 = vsel %vm566, %v2233, %v2241
        %v2290 = vsel %vm566, %v2234, %v2242
        %v2291 = vsel %vm583, %v2248, %v2257
        %v2292 = vsel %vm583, %v2250, %v2258
        %v2293 = vsel %vm600, %v2264, %v2273
        %v2294 = vsel %vm600, %v2266, %v2274
        %v2295 = vmul.f32 %v2121, %v2229
        %v2296 = vmul.f32 %v2123, %v2230
        %v2297 = vmul.f32 %v2125, %v2231
        %v2298 = vmul.f32 %v2127, %v2232
        %v2299 = vmul.f32 %v2131, %v2289
        %v2300 = vmul.f32 %v2133, %v2290
        %v2301 = vmul.f32 %v2135, %v2244
        %v2302 = vmul.f32 %v2137, %v2246
        %v2303 = vmul.f32 %v2141, %v2291
        %v2304 = vmul.f32 %v2143, %v2292
        %v2305 = vmul.f32 %v2145, %v2260
        %v2306 = vmul.f32 %v2147, %v2262
        %v2307 = vmul.f32 %v2151, %v2293
        %v2308 = vmul.f32 %v2153, %v2294
        %v2309 = vmul.f32 %v2155, %v2276
        %v2310 = vmul.f32 %v2157, %v2278
        %v2311 = vmul.f32 %v2161, %v2280
        %v2312 = vmul.f32 %v2163, %v2282
        %2313 = vmatprep.subr.mxu0 %v2296
        %2314 = vmatpush1.msra.mxu0 %v2295
        %2315 = vmatprep.subr.mxu0 %v2298
        %2316 = vmatpush1.msra.mxu0 %v2297
        %2317 = vmatprep.subr.mxu0 %v2300
        %2318 = vmatpush1.msra.mxu0 %v2299
        %2319 = vmatprep.subr.mxu0 %v2302
        %2320 = vmatpush1.msra.mxu0 %v2301
        %2321 = vmatprep.subr.mxu0 %v2304
        %2322 = vmatpush1.msra.mxu0 %v2303
        %2323 = vmatprep.subr.mxu0 %v2306
        %2324 = vmatpush1.msra.mxu0 %v2305
        %2325 = vmatprep.subr.mxu0 %v2308
        %2326 = vmatpush1.msra.mxu0 %v2307
        %2327 = vmatprep.subr.mxu0 %v2310
        %2328 = vmatpush1.msra.mxu0 %v2309
        %2329 = vmatprep.subr.mxu0 %v2312
        %2330 = vmatpush1.msra.mxu0 %v2311
        %2331 = vmatprep.subr.mxu0 0.0
        %2332 = vmatpush1.msra.mxu0 0.0
        %2333 = vmatprep.subr.mxu0 0.0
        %2334 = vmatpush1.msra.mxu0 0.0
        %2335 = vmatprep.subr.mxu0 0.0
        %2336 = vmatpush1.msra.mxu0 0.0
        %2337 = vmatprep.subr.mxu0 0.0
        %2338 = vmatpush1.msra.mxu0 0.0
        %2339 = vmatprep.subr.mxu0 0.0
        %2340 = vmatpush1.msra.mxu0 0.0
        %2341 = vmatprep.subr.mxu0 0.0
        %2342 = vmatpush1.msra.mxu0 0.0
        %2343 = vmatprep.subr.mxu0 0.0
        %2344 = vmatpush1.msra.mxu0 0.0
        %2345 = vmatprep.subr.mxu0 0.0
        %2346 = vmatpush1.msra.mxu0 0.0
        %2347 = vmatprep.subr.mxu0 0.0
        %2348 = vmatpush1.msra.mxu0 0.0
        %2349 = vmatprep.subr.mxu0 0.0
        %2350 = vmatpush1.msra.mxu0 0.0
        %2351 = vmatprep.subr.mxu0 0.0
        %2352 = vmatpush1.msra.mxu0 0.0
        %2353 = vmatprep.subr.mxu0 0.0
        %2354 = vmatpush1.msra.mxu0 0.0
        %2355 = vmatprep.subr.mxu0 0.0
        %2356 = vmatpush1.msra.mxu0 0.0
        %2357 = vmatprep.subr.mxu0 0.0
        %2358 = vmatpush1.msra.mxu0 0.0
        %2359 = vmatprep.subr.mxu0 0.0
        %2360 = vmatpush1.msra.mxu0 0.0
        %2361 = vmatprep.subr.mxu0 0.0
        %2362 = vmatpush1.msra.mxu0 0.0
        %2363 = vmatprep.subr.mxu0 0.0
        %2364 = vmatpush1.msra.mxu0 0.0
        %2365 = vmatprep.subr.mxu0 0.0
        %2366 = vmatpush1.msra.mxu0 0.0
        %2367 = vmatprep.subr.mxu0 0.0
        %2368 = vmatpush1.msra.mxu0 0.0
        %2369 = vmatprep.subr.mxu0 0.0
        %2370 = vmatpush1.msra.mxu0 0.0
        %2371 = vmatprep.subr.mxu0 0.0
        %2372 = vmatpush1.msra.mxu0 0.0
        %2373 = vmatprep.subr.mxu0 0.0
        %2374 = vmatpush1.msra.mxu0 0.0
        %2375 = vmatprep.subr.mxu0 0.0
        %2376 = vmatpush1.msra.mxu0 0.0
        %2377 = vmatprep.mubr.f32.mxu0 0.0
        %2378 = vmatmul.mubr.f32.gmra.mrb[0].mxu0 %v643
        %v2379 = vpop.f32.mrb[0].mxu0
        %v2380 = vadd.f32 0.0, %v2379
        %v2381 = vpop.f32.mrb[0].mxu0
        %v2382 = vadd.f32 0.0, %v2381
        %2383 = vdwg.mxu0
        %v2384 = vpack.c.bf16 %v2380, %v2380
        %v2385 = vpack.c.bf16 %v2382, %v2382
        %v2388 = vunpack.c.l.b16 %v2384
        %v2389 = vunpack.c.l.b16 %v2385
        %v2390 = vpack.c.b16 %v2389, %v2388
        %2392 = vst [vmem:[#allocation2 + $0x20] sm:$0xff] %v2390
        %s2393 = scalar_lea.vmem %s244, 5
        %v2394 = vld [vmem:[%s2393] ss:$8 sm:$0x3]
        %s2395 = scalar_lea.vmem %s244, 22
        %v2396 = vld [vmem:[%s2395] ss:$8 sm:$0x3]
        %v2397 = vfloor.f32 %v2394
        %v2398 = vfloor.f32 %v2396
        %v2399 = vmax.f32 %v2397, 0.0
        %v2400 = vmin.f32 %v2399, 17.0
        %v2401 = vadd.f32 %v2397, 1.0
        %v2402 = vmax.f32 %v2401, 0.0
        %v2403 = vmin.f32 %v2402, 17.0
        %v2404 = vmax.f32 %v2398, 0.0
        %v2405 = vmin.f32 %v2404, 17.0
        %v2406 = vadd.f32 %v2398, 1.0
        %v2407 = vmax.f32 %v2406, 0.0
        %v2408 = vmin.f32 %v2407, 17.0
        %v2409 = vmax.f32 %v2394, 0.0
        %v2410 = vmin.f32 %v2409, 17.0
        %v2411 = vmax.f32 %v2396, 0.0
        %v2412 = vmin.f32 %v2411, 17.0
        %v2413 = vsub.f32 %v2400, %v2410
        %v2414 = vadd.f32 %v2413, 1.0
        %v2415 = vsub.f32 %v2403, %v2410
        %v2416 = vsub.f32 1.0, %v2415
        %v2417 = vsub.f32 %v2405, %v2412
        %v2418 = vadd.f32 %v2417, 1.0
        %v2419 = vsub.f32 %v2408, %v2412
        %v2420 = vsub.f32 1.0, %v2419
        %v2421 = vcvt.f32.s32.to.zero.pseudo %v2400
        %v2422 = vcvt.f32.s32.to.zero.pseudo %v2403
        %v2423 = vcvt.f32.s32.to.zero.pseudo %v2405
        %v2424 = vcvt.f32.s32.to.zero.pseudo %v2408
        %v2425 = vlaneseq
        %v2426 = vshrl.u32 %v2425, 7
        %v2427 = vsub.s32 0, %v2426
        %v2428 = vrot.slane %v2421, %v2427
        %v2429 = vlaneseq
        %v2430 = vshrl.u32 %v2429, 7
        %v2431 = vsub.s32 1, %v2430
        %v2432 = vrot.slane %v2421, %v2431
        %vm2433 = vcmp.eq.s32.totalorder %v259, %v2428
        %vm2434 = vcmp.eq.s32.totalorder %v259, %v2432
        %vm2435 = vcmp.eq.s32.totalorder %v260, %v2428
        %vm2436 = vcmp.eq.s32.totalorder %v260, %v2432
        %vm2437 = vcmp.eq.s32.totalorder %v261, %v2428
        %vm2438 = vcmp.eq.s32.totalorder %v261, %v2432
        %v2440 = vlaneseq
        %v2441 = vshrl.u32 %v2440, 7
        %v2442 = vsub.s32 0, %v2441
        %v2443 = vrot.slane %v2414, %v2442
        %v2444 = vlaneseq
        %v2445 = vshrl.u32 %v2444, 7
        %v2446 = vsub.s32 1, %v2445
        %v2447 = vrot.slane %v2414, %v2446
        %v2450 = vsel %vm2433, %v2443, 0.0
        %v2451 = vsel %vm2434, %v2447, 0.0
        %v2452 = vsel %vm2435, %v2443, 0.0
        %v2453 = vsel %vm2436, %v2447, 0.0
        %v2454 = vsel %vm2437, %v2443, 0.0
        %v2455 = vsel %vm2438, %v2447, 0.0
        %v2456 = vlaneseq
        %v2457 = vshrl.u32 %v2456, 7
        %v2458 = vsub.s32 0, %v2457
        %v2459 = vrot.slane %v2422, %v2458
        %v2460 = vlaneseq
        %v2461 = vshrl.u32 %v2460, 7
        %v2462 = vsub.s32 1, %v2461
        %v2463 = vrot.slane %v2422, %v2462
        %vm2464 = vcmp.eq.s32.totalorder %v259, %v2459
        %vm2465 = vcmp.eq.s32.totalorder %v259, %v2463
        %vm2466 = vcmp.eq.s32.totalorder %v260, %v2459
        %vm2467 = vcmp.eq.s32.totalorder %v260, %v2463
        %vm2468 = vcmp.eq.s32.totalorder %v261, %v2459
        %vm2469 = vcmp.eq.s32.totalorder %v261, %v2463
        %v2471 = vlaneseq
        %v2472 = vshrl.u32 %v2471, 7
        %v2473 = vsub.s32 0, %v2472
        %v2474 = vrot.slane %v2416, %v2473
        %v2475 = vlaneseq
        %v2476 = vshrl.u32 %v2475, 7
        %v2477 = vsub.s32 1, %v2476
        %v2478 = vrot.slane %v2416, %v2477
        %v2481 = vsel %vm2464, %v2474, 0.0
        %v2482 = vsel %vm2465, %v2478, 0.0
        %v2483 = vsel %vm2466, %v2474, 0.0
        %v2484 = vsel %vm2467, %v2478, 0.0
        %v2485 = vsel %vm2468, %v2474, 0.0
        %v2486 = vsel %vm2469, %v2478, 0.0
        %v2487 = vadd.f32 %v2450, %v2481
        %v2488 = vadd.f32 %v2451, %v2482
        %v2489 = vadd.f32 %v2452, %v2483
        %v2490 = vadd.f32 %v2453, %v2484
        %v2491 = vadd.f32 %v2454, %v2485
        %v2492 = vadd.f32 %v2455, %v2486
        %v2493 = vpack.c.bf16 %v2489, %v2487
        %v2494 = vpack.c.bf16 %v2490, %v2488
        %v2495 = vpack.c.bf16 %v2491, %v2491
        %v2496 = vpack.c.bf16 %v2492, %v2492
        %v2498 = vsel %vm404, %v2495, 0
        %v2501 = vsel %vm404, %v2496, 0
        %2503 = vmatprep.subr.bf16.mxu0 %v2494
        %2504 = vmatpush1.bf16.msra.mxu0 %v2493
        %2505 = vmatprep.subr.bf16.mxu0 %v2501
        %2506 = vmatpush1.bf16.msra.mxu0 %v2498
        %2507 = vmatprep.subr.bf16.mxu0 0
        %2508 = vmatpush1.bf16.msra.mxu0 0
        %2509 = vmatprep.subr.bf16.mxu0 0
        %2510 = vmatpush1.bf16.msra.mxu0 0
        %2511 = vmatprep.subr.bf16.mxu0 0
        %2512 = vmatpush1.bf16.msra.mxu0 0
        %2513 = vmatprep.subr.bf16.mxu0 0
        %2514 = vmatpush1.bf16.msra.mxu0 0
        %2515 = vmatprep.subr.bf16.mxu0 0
        %2516 = vmatpush1.bf16.msra.mxu0 0
        %2517 = vmatprep.subr.bf16.mxu0 0
        %2518 = vmatpush1.bf16.msra.mxu0 0
        %2519 = vmatprep.subr.bf16.mxu0 0
        %2520 = vmatpush1.bf16.msra.mxu0 0
        %2521 = vmatprep.subr.bf16.mxu0 0
        %2522 = vmatpush1.bf16.msra.mxu0 0
        %2523 = vmatprep.subr.bf16.mxu0 0
        %2524 = vmatpush1.bf16.msra.mxu0 0
        %2525 = vmatprep.subr.bf16.mxu0 0
        %2526 = vmatpush1.bf16.msra.mxu0 0
        %2527 = vmatprep.subr.bf16.mxu0 0
        %2528 = vmatpush1.bf16.msra.mxu0 0
        %2529 = vmatprep.subr.bf16.mxu0 0
        %2530 = vmatpush1.bf16.msra.mxu0 0
        %2531 = vmatprep.subr.bf16.mxu0 0
        %2532 = vmatpush1.bf16.msra.mxu0 0
        %2533 = vmatprep.subr.bf16.mxu0 0
        %2534 = vmatpush1.bf16.msra.mxu0 0
        %2535 = vmatprep.mubr.bf16.mxu0 0
        %2536 = vmatmul.mubr.bf16.gmra.mrb[0].mxu0 %v390
        %v2537 = vpop.f32.mrb[0].mxu0
        %v2538 = vadd.f32 0.0, %v2537
        %v2539 = vpop.f32.mrb[0].mxu0
        %v2540 = vadd.f32 0.0, %v2539
        %v2541 = vpop.f32.mrb[0].mxu0
        %v2542 = vadd.f32 0.0, %v2541
        %v2543 = vpop.f32.mrb[0].mxu0
        %v2544 = vadd.f32 0.0, %v2543
        %2545 = vmatprep.mubr.bf16.mxu0 0
        %2546 = vmatmul.mubr.bf16.gmra.mrb[0].mxu0 %v393
        %v2547 = vpop.f32.mrb[0].mxu0
        %v2548 = vadd.f32 0.0, %v2547
        %v2549 = vpop.f32.mrb[0].mxu0
        %v2550 = vadd.f32 0.0, %v2549
        %v2551 = vpop.f32.mrb[0].mxu0
        %v2552 = vadd.f32 0.0, %v2551
        %v2553 = vpop.f32.mrb[0].mxu0
        %v2554 = vadd.f32 0.0, %v2553
        %2555 = vmatprep.mubr.bf16.mxu0 0
        %2556 = vmatmul.mubr.bf16.gmra.mrb[0].mxu0 %v396
        %v2557 = vpop.f32.mrb[0].mxu0
        %v2558 = vadd.f32 0.0, %v2557
        %v2559 = vpop.f32.mrb[0].mxu0
        %v2560 = vadd.f32 0.0, %v2559
        %v2561 = vpop.f32.mrb[0].mxu0
        %v2562 = vadd.f32 0.0, %v2561
        %v2563 = vpop.f32.mrb[0].mxu0
        %v2564 = vadd.f32 0.0, %v2563
        %2565 = vmatprep.mubr.bf16.mxu0 0
        %2566 = vmatmul.mubr.bf16.gmra.mrb[0].mxu0 %v399
        %v2567 = vpop.f32.mrb[0].mxu0
        %v2568 = vadd.f32 0.0, %v2567
        %v2569 = vpop.f32.mrb[0].mxu0
        %v2570 = vadd.f32 0.0, %v2569
        %v2571 = vpop.f32.mrb[0].mxu0
        %v2572 = vadd.f32 0.0, %v2571
        %v2573 = vpop.f32.mrb[0].mxu0
        %v2574 = vadd.f32 0.0, %v2573
        %2575 = vmatprep.mubr.bf16.mxu0 0
        %2576 = vmatmul.mubr.bf16.gmra.mrb[0].mxu0 %v402
        %v2577 = vpop.f32.mrb[0].mxu0
        %v2578 = vadd.f32 0.0, %v2577
        %v2579 = vpop.f32.mrb[0].mxu0
        %v2580 = vadd.f32 0.0, %v2579
        %v2581 = vpop.f32.mrb[0].mxu0
        %v2582 = vpop.f32.mrb[0].mxu0
        %2583 = vdwg.mxu0
        %v2584 = vlaneseq
        %v2585 = vshrl.u32 %v2584, 7
        %v2586 = vsub.s32 0, %v2585
        %v2587 = vrot.slane %v2423, %v2586
        %v2588 = vlaneseq
        %v2589 = vshrl.u32 %v2588, 7
        %v2590 = vsub.s32 1, %v2589
        %v2591 = vrot.slane %v2423, %v2590
        %vm2592 = vcmp.eq.s32.totalorder %v259, %v2587
        %vm2593 = vcmp.eq.s32.totalorder %v259, %v2591
        %vm2594 = vcmp.eq.s32.totalorder %v260, %v2587
        %vm2595 = vcmp.eq.s32.totalorder %v260, %v2591
        %vm2596 = vcmp.eq.s32.totalorder %v261, %v2587
        %vm2597 = vcmp.eq.s32.totalorder %v261, %v2591
        %v2599 = vlaneseq
        %v2600 = vshrl.u32 %v2599, 7
        %v2601 = vsub.s32 0, %v2600
        %v2602 = vrot.slane %v2418, %v2601
        %v2603 = vlaneseq
        %v2604 = vshrl.u32 %v2603, 7
        %v2605 = vsub.s32 1, %v2604
        %v2606 = vrot.slane %v2418, %v2605
        %v2609 = vsel %vm2592, %v2602, 0.0
        %v2610 = vsel %vm2593, %v2606, 0.0
        %v2611 = vsel %vm2594, %v2602, 0.0
        %v2612 = vsel %vm2595, %v2606, 0.0
        %v2613 = vsel %vm2596, %v2602, 0.0
        %v2614 = vsel %vm2597, %v2606, 0.0
        %v2615 = vlaneseq
        %v2616 = vshrl.u32 %v2615, 7
        %v2617 = vsub.s32 0, %v2616
        %v2618 = vrot.slane %v2424, %v2617
        %v2619 = vlaneseq
        %v2620 = vshrl.u32 %v2619, 7
        %v2621 = vsub.s32 1, %v2620
        %v2622 = vrot.slane %v2424, %v2621
        %vm2623 = vcmp.eq.s32.totalorder %v259, %v2618
        %vm2624 = vcmp.eq.s32.totalorder %v259, %v2622
        %vm2625 = vcmp.eq.s32.totalorder %v260, %v2618
        %vm2626 = vcmp.eq.s32.totalorder %v260, %v2622
        %vm2627 = vcmp.eq.s32.totalorder %v261, %v2618
        %vm2628 = vcmp.eq.s32.totalorder %v261, %v2622
        %v2630 = vlaneseq
        %v2631 = vshrl.u32 %v2630, 7
        %v2632 = vsub.s32 0, %v2631
        %v2633 = vrot.slane %v2420, %v2632
        %v2634 = vlaneseq
        %v2635 = vshrl.u32 %v2634, 7
        %v2636 = vsub.s32 1, %v2635
        %v2637 = vrot.slane %v2420, %v2636
        %v2640 = vsel %vm2623, %v2633, 0.0
        %v2641 = vsel %vm2624, %v2637, 0.0
        %v2642 = vsel %vm2625, %v2633, 0.0
        %v2643 = vsel %vm2626, %v2637, 0.0
        %v2644 = vsel %vm2627, %v2633, 0.0
        %v2645 = vsel %vm2628, %v2637, 0.0
        %v2646 = vadd.f32 %v2609, %v2640
        %v2647 = vadd.f32 %v2610, %v2641
        %v2648 = vadd.f32 %v2611, %v2642
        %v2649 = vadd.f32 %v2612, %v2643
        %v2650 = vadd.f32 %v2613, %v2644
        %v2651 = vadd.f32 %v2614, %v2645
        %v2658 = vrot.slane %v2646, 6
        %v2659 = vrot.slane %v2647, 6
        %v2660 = vrot.slane %v2648, 6
        %v2661 = vsel %vm566, %v2658, %v2660
        %v2662 = vrot.slane %v2649, 6
        %v2663 = vsel %vm566, %v2659, %v2662
        %v2664 = vrot.slane %v2650, 6
        %v2665 = vsel %vm566, %v2660, %v2664
        %v2666 = vrot.slane %v2651, 6
        %v2667 = vsel %vm566, %v2662, %v2666
        %v2674 = vrot.slane %v2646, 4
        %v2675 = vrot.slane %v2647, 4
        %v2676 = vrot.slane %v2648, 4
        %v2677 = vsel %vm583, %v2674, %v2676
        %v2678 = vrot.slane %v2649, 4
        %v2679 = vsel %vm583, %v2675, %v2678
        %v2680 = vrot.slane %v2650, 4
        %v2681 = vsel %vm583, %v2676, %v2680
        %v2682 = vrot.slane %v2651, 4
        %v2683 = vsel %vm583, %v2678, %v2682
        %v2690 = vrot.slane %v2646, 2
        %v2691 = vrot.slane %v2647, 2
        %v2692 = vrot.slane %v2648, 2
        %v2693 = vsel %vm600, %v2690, %v2692
        %v2694 = vrot.slane %v2649, 2
        %v2695 = vsel %vm600, %v2691, %v2694
        %v2696 = vrot.slane %v2650, 2
        %v2697 = vsel %vm600, %v2692, %v2696
        %v2698 = vrot.slane %v2651, 2
        %v2699 = vsel %vm600, %v2694, %v2698
        %v2706 = vsel %vm566, %v2650, %v2658
        %v2707 = vsel %vm566, %v2651, %v2659
        %v2708 = vsel %vm583, %v2665, %v2674
        %v2709 = vsel %vm583, %v2667, %v2675
        %v2710 = vsel %vm600, %v2681, %v2690
        %v2711 = vsel %vm600, %v2683, %v2691
        %v2712 = vmul.f32 %v2538, %v2646
        %v2713 = vmul.f32 %v2540, %v2647
        %v2714 = vmul.f32 %v2542, %v2648
        %v2715 = vmul.f32 %v2544, %v2649
        %v2716 = vmul.f32 %v2548, %v2706
        %v2717 = vmul.f32 %v2550, %v2707
        %v2718 = vmul.f32 %v2552, %v2661
        %v2719 = vmul.f32 %v2554, %v2663
        %v2720 = vmul.f32 %v2558, %v2708
        %v2721 = vmul.f32 %v2560, %v2709
        %v2722 = vmul.f32 %v2562, %v2677
        %v2723 = vmul.f32 %v2564, %v2679
        %v2724 = vmul.f32 %v2568, %v2710
        %v2725 = vmul.f32 %v2570, %v2711
        %v2726 = vmul.f32 %v2572, %v2693
        %v2727 = vmul.f32 %v2574, %v2695
        %v2728 = vmul.f32 %v2578, %v2697
        %v2729 = vmul.f32 %v2580, %v2699
        %2730 = vmatprep.subr.mxu0 %v2713
        %2731 = vmatpush1.msra.mxu0 %v2712
        %2732 = vmatprep.subr.mxu0 %v2715
        %2733 = vmatpush1.msra.mxu0 %v2714
        %2734 = vmatprep.subr.mxu0 %v2717
        %2735 = vmatpush1.msra.mxu0 %v2716
        %2736 = vmatprep.subr.mxu0 %v2719
        %2737 = vmatpush1.msra.mxu0 %v2718
        %2738 = vmatprep.subr.mxu0 %v2721
        %2739 = vmatpush1.msra.mxu0 %v2720
        %2740 = vmatprep.subr.mxu0 %v2723
        %2741 = vmatpush1.msra.mxu0 %v2722
        %2742 = vmatprep.subr.mxu0 %v2725
        %2743 = vmatpush1.msra.mxu0 %v2724
        %2744 = vmatprep.subr.mxu0 %v2727
        %2745 = vmatpush1.msra.mxu0 %v2726
        %2746 = vmatprep.subr.mxu0 %v2729
        %2747 = vmatpush1.msra.mxu0 %v2728
        %2748 = vmatprep.subr.mxu0 0.0
        %2749 = vmatpush1.msra.mxu0 0.0
        %2750 = vmatprep.subr.mxu0 0.0
        %2751 = vmatpush1.msra.mxu0 0.0
        %2752 = vmatprep.subr.mxu0 0.0
        %2753 = vmatpush1.msra.mxu0 0.0
        %2754 = vmatprep.subr.mxu0 0.0
        %2755 = vmatpush1.msra.mxu0 0.0
        %2756 = vmatprep.subr.mxu0 0.0
        %2757 = vmatpush1.msra.mxu0 0.0
        %2758 = vmatprep.subr.mxu0 0.0
        %2759 = vmatpush1.msra.mxu0 0.0
        %2760 = vmatprep.subr.mxu0 0.0
        %2761 = vmatpush1.msra.mxu0 0.0
        %2762 = vmatprep.subr.mxu0 0.0
        %2763 = vmatpush1.msra.mxu0 0.0
        %2764 = vmatprep.subr.mxu0 0.0
        %2765 = vmatpush1.msra.mxu0 0.0
        %2766 = vmatprep.subr.mxu0 0.0
        %2767 = vmatpush1.msra.mxu0 0.0
        %2768 = vmatprep.subr.mxu0 0.0
        %2769 = vmatpush1.msra.mxu0 0.0
        %2770 = vmatprep.subr.mxu0 0.0
        %2771 = vmatpush1.msra.mxu0 0.0
        %2772 = vmatprep.subr.mxu0 0.0
        %2773 = vmatpush1.msra.mxu0 0.0
        %2774 = vmatprep.subr.mxu0 0.0
        %2775 = vmatpush1.msra.mxu0 0.0
        %2776 = vmatprep.subr.mxu0 0.0
        %2777 = vmatpush1.msra.mxu0 0.0
        %2778 = vmatprep.subr.mxu0 0.0
        %2779 = vmatpush1.msra.mxu0 0.0
        %2780 = vmatprep.subr.mxu0 0.0
        %2781 = vmatpush1.msra.mxu0 0.0
        %2782 = vmatprep.subr.mxu0 0.0
        %2783 = vmatpush1.msra.mxu0 0.0
        %2784 = vmatprep.subr.mxu0 0.0
        %2785 = vmatpush1.msra.mxu0 0.0
        %2786 = vmatprep.subr.mxu0 0.0
        %2787 = vmatpush1.msra.mxu0 0.0
        %2788 = vmatprep.subr.mxu0 0.0
        %2789 = vmatpush1.msra.mxu0 0.0
        %2790 = vmatprep.subr.mxu0 0.0
        %2791 = vmatpush1.msra.mxu0 0.0
        %2792 = vmatprep.subr.mxu0 0.0
        %2793 = vmatpush1.msra.mxu0 0.0
        %2794 = vmatprep.mubr.f32.mxu0 0.0
        %2795 = vmatmul.mubr.f32.gmra.mrb[0].mxu0 %v643
        %v2796 = vpop.f32.mrb[0].mxu0
        %v2797 = vadd.f32 0.0, %v2796
        %v2798 = vpop.f32.mrb[0].mxu0
        %v2799 = vadd.f32 0.0, %v2798
        %2800 = vdwg.mxu0
        %v2801 = vpack.c.bf16 %v2797, %v2797
        %v2802 = vpack.c.bf16 %v2799, %v2799
        %v2805 = vunpack.c.l.b16 %v2801
        %v2806 = vunpack.c.l.b16 %v2802
        %v2807 = vpack.c.b16 %v2806, %v2805
        %2809 = vst [vmem:[#allocation2 + $0x28] sm:$0xff] %v2807
        %s2810 = scalar_lea.vmem %s244, 6
        %v2811 = vld [vmem:[%s2810] ss:$8 sm:$0x3]
        %s2812 = scalar_lea.vmem %s244, 23
        %v2813 = vld [vmem:[%s2812] ss:$8 sm:$0x3]
        %v2814 = vfloor.f32 %v2811
        %v2815 = vfloor.f32 %v2813
        %v2816 = vmax.f32 %v2814, 0.0
        %v2817 = vmin.f32 %v2816, 17.0
        %v2818 = vadd.f32 %v2814, 1.0
        %v2819 = vmax.f32 %v2818, 0.0
        %v2820 = vmin.f32 %v2819, 17.0
        %v2821 = vmax.f32 %v2815, 0.0
        %v2822 = vmin.f32 %v2821, 17.0
        %v2823 = vadd.f32 %v2815, 1.0
        %v2824 = vmax.f32 %v2823, 0.0
        %v2825 = vmin.f32 %v2824, 17.0
        %v2826 = vmax.f32 %v2811, 0.0
        %v2827 = vmin.f32 %v2826, 17.0
        %v2828 = vmax.f32 %v2813, 0.0
        %v2829 = vmin.f32 %v2828, 17.0
        %v2830 = vsub.f32 %v2817, %v2827
        %v2831 = vadd.f32 %v2830, 1.0
        %v2832 = vsub.f32 %v2820, %v2827
        %v2833 = vsub.f32 1.0, %v2832
        %v2834 = vsub.f32 %v2822, %v2829
        %v2835 = vadd.f32 %v2834, 1.0
        %v2836 = vsub.f32 %v2825, %v2829
        %v2837 = vsub.f32 1.0, %v2836
        %v2838 = vcvt.f32.s32.to.zero.pseudo %v2817
        %v2839 = vcvt.f32.s32.to.zero.pseudo %v2820
        %v2840 = vcvt.f32.s32.to.zero.pseudo %v2822
        %v2841 = vcvt.f32.s32.to.zero.pseudo %v2825
        %v2842 = vlaneseq
        %v2843 = vshrl.u32 %v2842, 7
        %v2844 = vsub.s32 0, %v2843
        %v2845 = vrot.slane %v2838, %v2844
        %v2846 = vlaneseq
        %v2847 = vshrl.u32 %v2846, 7
        %v2848 = vsub.s32 1, %v2847
        %v2849 = vrot.slane %v2838, %v2848
        %vm2850 = vcmp.eq.s32.totalorder %v259, %v2845
        %vm2851 = vcmp.eq.s32.totalorder %v259, %v2849
        %vm2852 = vcmp.eq.s32.totalorder %v260, %v2845
        %vm2853 = vcmp.eq.s32.totalorder %v260, %v2849
        %vm2854 = vcmp.eq.s32.totalorder %v261, %v2845
        %vm2855 = vcmp.eq.s32.totalorder %v261, %v2849
        %v2857 = vlaneseq
        %v2858 = vshrl.u32 %v2857, 7
        %v2859 = vsub.s32 0, %v2858
        %v2860 = vrot.slane %v2831, %v2859
        %v2861 = vlaneseq
        %v2862 = vshrl.u32 %v2861, 7
        %v2863 = vsub.s32 1, %v2862
        %v2864 = vrot.slane %v2831, %v2863
        %v2867 = vsel %vm2850, %v2860, 0.0
        %v2868 = vsel %vm2851, %v2864, 0.0
        %v2869 = vsel %vm2852, %v2860, 0.0
        %v2870 = vsel %vm2853, %v2864, 0.0
        %v2871 = vsel %vm2854, %v2860, 0.0
        %v2872 = vsel %vm2855, %v2864, 0.0
        %v2873 = vlaneseq
        %v2874 = vshrl.u32 %v2873, 7
        %v2875 = vsub.s32 0, %v2874
        %v2876 = vrot.slane %v2839, %v2875
        %v2877 = vlaneseq
        %v2878 = vshrl.u32 %v2877, 7
        %v2879 = vsub.s32 1, %v2878
        %v2880 = vrot.slane %v2839, %v2879
        %vm2881 = vcmp.eq.s32.totalorder %v259, %v2876
        %vm2882 = vcmp.eq.s32.totalorder %v259, %v2880
        %vm2883 = vcmp.eq.s32.totalorder %v260, %v2876
        %vm2884 = vcmp.eq.s32.totalorder %v260, %v2880
        %vm2885 = vcmp.eq.s32.totalorder %v261, %v2876
        %vm2886 = vcmp.eq.s32.totalorder %v261, %v2880
        %v2888 = vlaneseq
        %v2889 = vshrl.u32 %v2888, 7
        %v2890 = vsub.s32 0, %v2889
        %v2891 = vrot.slane %v2833, %v2890
        %v2892 = vlaneseq
        %v2893 = vshrl.u32 %v2892, 7
        %v2894 = vsub.s32 1, %v2893
        %v2895 = vrot.slane %v2833, %v2894
        %v2898 = vsel %vm2881, %v2891, 0.0
        %v2899 = vsel %vm2882, %v2895, 0.0
        %v2900 = vsel %vm2883, %v2891, 0.0
        %v2901 = vsel %vm2884, %v2895, 0.0
        %v2902 = vsel %vm2885, %v2891, 0.0
        %v2903 = vsel %vm2886, %v2895, 0.0
        %v2904 = vadd.f32 %v2867, %v2898
        %v2905 = vadd.f32 %v2868, %v2899
        %v2906 = vadd.f32 %v2869, %v2900
        %v2907 = vadd.f32 %v2870, %v2901
        %v2908 = vadd.f32 %v2871, %v2902
        %v2909 = vadd.f32 %v2872, %v2903
        %v2910 = vpack.c.bf16 %v2906, %v2904
        %v2911 = vpack.c.bf16 %v2907, %v2905
        %v2912 = vpack.c.bf16 %v2908, %v2908
        %v2913 = vpack.c.bf16 %v2909, %v2909
        %v2915 = vsel %vm404, %v2912, 0
        %v2918 = vsel %vm404, %v2913, 0
        %2920 = vmatprep.subr.bf16.mxu0 %v2911
        %2921 = vmatpush1.bf16.msra.mxu0 %v2910
        %2922 = vmatprep.subr.bf16.mxu0 %v2918
        %2923 = vmatpush1.bf16.msra.mxu0 %v2915
        %2924 = vmatprep.subr.bf16.mxu0 0
        %2925 = vmatpush1.bf16.msra.mxu0 0
        %2926 = vmatprep.subr.bf16.mxu0 0
        %2927 = vmatpush1.bf16.msra.mxu0 0
        %2928 = vmatprep.subr.bf16.mxu0 0
        %2929 = vmatpush1.bf16.msra.mxu0 0
        %2930 = vmatprep.subr.bf16.mxu0 0
        %2931 = vmatpush1.bf16.msra.mxu0 0
        %2932 = vmatprep.subr.bf16.mxu0 0
        %2933 = vmatpush1.bf16.msra.mxu0 0
        %2934 = vmatprep.subr.bf16.mxu0 0
        %2935 = vmatpush1.bf16.msra.mxu0 0
        %2936 = vmatprep.subr.bf16.mxu0 0
        %2937 = vmatpush1.bf16.msra.mxu0 0
        %2938 = vmatprep.subr.bf16.mxu0 0
        %2939 = vmatpush1.bf16.msra.mxu0 0
        %2940 = vmatprep.subr.bf16.mxu0 0
        %2941 = vmatpush1.bf16.msra.mxu0 0
        %2942 = vmatprep.subr.bf16.mxu0 0
        %2943 = vmatpush1.bf16.msra.mxu0 0
        %2944 = vmatprep.subr.bf16.mxu0 0
        %2945 = vmatpush1.bf16.msra.mxu0 0
        %2946 = vmatprep.subr.bf16.mxu0 0
        %2947 = vmatpush1.bf16.msra.mxu0 0
        %2948 = vmatprep.subr.bf16.mxu0 0
        %2949 = vmatpush1.bf16.msra.mxu0 0
        %2950 = vmatprep.subr.bf16.mxu0 0
        %2951 = vmatpush1.bf16.msra.mxu0 0
        %2952 = vmatprep.mubr.bf16.mxu0 0
        %2953 = vmatmul.mubr.bf16.gmra.mrb[0].mxu0 %v390
        %v2954 = vpop.f32.mrb[0].mxu0
        %v2955 = vadd.f32 0.0, %v2954
        %v2956 = vpop.f32.mrb[0].mxu0
        %v2957 = vadd.f32 0.0, %v2956
        %v2958 = vpop.f32.mrb[0].mxu0
        %v2959 = vadd.f32 0.0, %v2958
        %v2960 = vpop.f32.mrb[0].mxu0
        %v2961 = vadd.f32 0.0, %v2960
        %2962 = vmatprep.mubr.bf16.mxu0 0
        %2963 = vmatmul.mubr.bf16.gmra.mrb[0].mxu0 %v393
        %v2964 = vpop.f32.mrb[0].mxu0
        %v2965 = vadd.f32 0.0, %v2964
        %v2966 = vpop.f32.mrb[0].mxu0
        %v2967 = vadd.f32 0.0, %v2966
        %v2968 = vpop.f32.mrb[0].mxu0
        %v2969 = vadd.f32 0.0, %v2968
        %v2970 = vpop.f32.mrb[0].mxu0
        %v2971 = vadd.f32 0.0, %v2970
        %2972 = vmatprep.mubr.bf16.mxu0 0
        %2973 = vmatmul.mubr.bf16.gmra.mrb[0].mxu0 %v396
        %v2974 = vpop.f32.mrb[0].mxu0
        %v2975 = vadd.f32 0.0, %v2974
        %v2976 = vpop.f32.mrb[0].mxu0
        %v2977 = vadd.f32 0.0, %v2976
        %v2978 = vpop.f32.mrb[0].mxu0
        %v2979 = vadd.f32 0.0, %v2978
        %v2980 = vpop.f32.mrb[0].mxu0
        %v2981 = vadd.f32 0.0, %v2980
        %2982 = vmatprep.mubr.bf16.mxu0 0
        %2983 = vmatmul.mubr.bf16.gmra.mrb[0].mxu0 %v399
        %v2984 = vpop.f32.mrb[0].mxu0
        %v2985 = vadd.f32 0.0, %v2984
        %v2986 = vpop.f32.mrb[0].mxu0
        %v2987 = vadd.f32 0.0, %v2986
        %v2988 = vpop.f32.mrb[0].mxu0
        %v2989 = vadd.f32 0.0, %v2988
        %v2990 = vpop.f32.mrb[0].mxu0
        %v2991 = vadd.f32 0.0, %v2990
        %2992 = vmatprep.mubr.bf16.mxu0 0
        %2993 = vmatmul.mubr.bf16.gmra.mrb[0].mxu0 %v402
        %v2994 = vpop.f32.mrb[0].mxu0
        %v2995 = vadd.f32 0.0, %v2994
        %v2996 = vpop.f32.mrb[0].mxu0
        %v2997 = vadd.f32 0.0, %v2996
        %v2998 = vpop.f32.mrb[0].mxu0
        %v2999 = vpop.f32.mrb[0].mxu0
        %3000 = vdwg.mxu0
        %v3001 = vlaneseq
        %v3002 = vshrl.u32 %v3001, 7
        %v3003 = vsub.s32 0, %v3002
        %v3004 = vrot.slane %v2840, %v3003
        %v3005 = vlaneseq
        %v3006 = vshrl.u32 %v3005, 7
        %v3007 = vsub.s32 1, %v3006
        %v3008 = vrot.slane %v2840, %v3007
        %vm3009 = vcmp.eq.s32.totalorder %v259, %v3004
        %vm3010 = vcmp.eq.s32.totalorder %v259, %v3008
        %vm3011 = vcmp.eq.s32.totalorder %v260, %v3004
        %vm3012 = vcmp.eq.s32.totalorder %v260, %v3008
        %vm3013 = vcmp.eq.s32.totalorder %v261, %v3004
        %vm3014 = vcmp.eq.s32.totalorder %v261, %v3008
        %v3016 = vlaneseq
        %v3017 = vshrl.u32 %v3016, 7
        %v3018 = vsub.s32 0, %v3017
        %v3019 = vrot.slane %v2835, %v3018
        %v3020 = vlaneseq
        %v3021 = vshrl.u32 %v3020, 7
        %v3022 = vsub.s32 1, %v3021
        %v3023 = vrot.slane %v2835, %v3022
        %v3026 = vsel %vm3009, %v3019, 0.0
        %v3027 = vsel %vm3010, %v3023, 0.0
        %v3028 = vsel %vm3011, %v3019, 0.0
        %v3029 = vsel %vm3012, %v3023, 0.0
        %v3030 = vsel %vm3013, %v3019, 0.0
        %v3031 = vsel %vm3014, %v3023, 0.0
        %v3032 = vlaneseq
        %v3033 = vshrl.u32 %v3032, 7
        %v3034 = vsub.s32 0, %v3033
        %v3035 = vrot.slane %v2841, %v3034
        %v3036 = vlaneseq
        %v3037 = vshrl.u32 %v3036, 7
        %v3038 = vsub.s32 1, %v3037
        %v3039 = vrot.slane %v2841, %v3038
        %vm3040 = vcmp.eq.s32.totalorder %v259, %v3035
        %vm3041 = vcmp.eq.s32.totalorder %v259, %v3039
        %vm3042 = vcmp.eq.s32.totalorder %v260, %v3035
        %vm3043 = vcmp.eq.s32.totalorder %v260, %v3039
        %vm3044 = vcmp.eq.s32.totalorder %v261, %v3035
        %vm3045 = vcmp.eq.s32.totalorder %v261, %v3039
        %v3047 = vlaneseq
        %v3048 = vshrl.u32 %v3047, 7
        %v3049 = vsub.s32 0, %v3048
        %v3050 = vrot.slane %v2837, %v3049
        %v3051 = vlaneseq
        %v3052 = vshrl.u32 %v3051, 7
        %v3053 = vsub.s32 1, %v3052
        %v3054 = vrot.slane %v2837, %v3053
        %v3057 = vsel %vm3040, %v3050, 0.0
        %v3058 = vsel %vm3041, %v3054, 0.0
        %v3059 = vsel %vm3042, %v3050, 0.0
        %v3060 = vsel %vm3043, %v3054, 0.0
        %v3061 = vsel %vm3044, %v3050, 0.0
        %v3062 = vsel %vm3045, %v3054, 0.0
        %v3063 = vadd.f32 %v3026, %v3057
        %v3064 = vadd.f32 %v3027, %v3058
        %v3065 = vadd.f32 %v3028, %v3059
        %v3066 = vadd.f32 %v3029, %v3060
        %v3067 = vadd.f32 %v3030, %v3061
        %v3068 = vadd.f32 %v3031, %v3062
        %v3075 = vrot.slane %v3063, 6
        %v3076 = vrot.slane %v3064, 6
        %v3077 = vrot.slane %v3065, 6
        %v3078 = vsel %vm566, %v3075, %v3077
        %v3079 = vrot.slane %v3066, 6
        %v3080 = vsel %vm566, %v3076, %v3079
        %v3081 = vrot.slane %v3067, 6
        %v3082 = vsel %vm566, %v3077, %v3081
        %v3083 = vrot.slane %v3068, 6
        %v3084 = vsel %vm566, %v3079, %v3083
        %v3091 = vrot.slane %v3063, 4
        %v3092 = vrot.slane %v3064, 4
        %v3093 = vrot.slane %v3065, 4
        %v3094 = vsel %vm583, %v3091, %v3093
        %v3095 = vrot.slane %v3066, 4
        %v3096 = vsel %vm583, %v3092, %v3095
        %v3097 = vrot.slane %v3067, 4
        %v3098 = vsel %vm583, %v3093, %v3097
        %v3099 = vrot.slane %v3068, 4
        %v3100 = vsel %vm583, %v3095, %v3099
        %v3107 = vrot.slane %v3063, 2
        %v3108 = vrot.slane %v3064, 2
        %v3109 = vrot.slane %v3065, 2
        %v3110 = vsel %vm600, %v3107, %v3109
        %v3111 = vrot.slane %v3066, 2
        %v3112 = vsel %vm600, %v3108, %v3111
        %v3113 = vrot.slane %v3067, 2
        %v3114 = vsel %vm600, %v3109, %v3113
        %v3115 = vrot.slane %v3068, 2
        %v3116 = vsel %vm600, %v3111, %v3115
        %v3123 = vsel %vm566, %v3067, %v3075
        %v3124 = vsel %vm566, %v3068, %v3076
        %v3125 = vsel %vm583, %v3082, %v3091
        %v3126 = vsel %vm583, %v3084, %v3092
        %v3127 = vsel %vm600, %v3098, %v3107
        %v3128 = vsel %vm600, %v3100, %v3108
        %v3129 = vmul.f32 %v2955, %v3063
        %v3130 = vmul.f32 %v2957, %v3064
        %v3131 = vmul.f32 %v2959, %v3065
        %v3132 = vmul.f32 %v2961, %v3066
        %v3133 = vmul.f32 %v2965, %v3123
        %v3134 = vmul.f32 %v2967, %v3124
        %v3135 = vmul.f32 %v2969, %v3078
        %v3136 = vmul.f32 %v2971, %v3080
        %v3137 = vmul.f32 %v2975, %v3125
        %v3138 = vmul.f32 %v2977, %v3126
        %v3139 = vmul.f32 %v2979, %v3094
        %v3140 = vmul.f32 %v2981, %v3096
        %v3141 = vmul.f32 %v2985, %v3127
        %v3142 = vmul.f32 %v2987, %v3128
        %v3143 = vmul.f32 %v2989, %v3110
        %v3144 = vmul.f32 %v2991, %v3112
        %v3145 = vmul.f32 %v2995, %v3114
        %v3146 = vmul.f32 %v2997, %v3116
        %3147 = vmatprep.subr.mxu0 %v3130
        %3148 = vmatpush1.msra.mxu0 %v3129
        %3149 = vmatprep.subr.mxu0 %v3132
        %3150 = vmatpush1.msra.mxu0 %v3131
        %3151 = vmatprep.subr.mxu0 %v3134
        %3152 = vmatpush1.msra.mxu0 %v3133
        %3153 = vmatprep.subr.mxu0 %v3136
        %3154 = vmatpush1.msra.mxu0 %v3135
        %3155 = vmatprep.subr.mxu0 %v3138
        %3156 = vmatpush1.msra.mxu0 %v3137
        %3157 = vmatprep.subr.mxu0 %v3140
        %3158 = vmatpush1.msra.mxu0 %v3139
        %3159 = vmatprep.subr.mxu0 %v3142
        %3160 = vmatpush1.msra.mxu0 %v3141
        %3161 = vmatprep.subr.mxu0 %v3144
        %3162 = vmatpush1.msra.mxu0 %v3143
        %3163 = vmatprep.subr.mxu0 %v3146
        %3164 = vmatpush1.msra.mxu0 %v3145
        %3165 = vmatprep.subr.mxu0 0.0
        %3166 = vmatpush1.msra.mxu0 0.0
        %3167 = vmatprep.subr.mxu0 0.0
        %3168 = vmatpush1.msra.mxu0 0.0
        %3169 = vmatprep.subr.mxu0 0.0
        %3170 = vmatpush1.msra.mxu0 0.0
        %3171 = vmatprep.subr.mxu0 0.0
        %3172 = vmatpush1.msra.mxu0 0.0
        %3173 = vmatprep.subr.mxu0 0.0
        %3174 = vmatpush1.msra.mxu0 0.0
        %3175 = vmatprep.subr.mxu0 0.0
        %3176 = vmatpush1.msra.mxu0 0.0
        %3177 = vmatprep.subr.mxu0 0.0
        %3178 = vmatpush1.msra.mxu0 0.0
        %3179 = vmatprep.subr.mxu0 0.0
        %3180 = vmatpush1.msra.mxu0 0.0
        %3181 = vmatprep.subr.mxu0 0.0
        %3182 = vmatpush1.msra.mxu0 0.0
        %3183 = vmatprep.subr.mxu0 0.0
        %3184 = vmatpush1.msra.mxu0 0.0
        %3185 = vmatprep.subr.mxu0 0.0
        %3186 = vmatpush1.msra.mxu0 0.0
        %3187 = vmatprep.subr.mxu0 0.0
        %3188 = vmatpush1.msra.mxu0 0.0
        %3189 = vmatprep.subr.mxu0 0.0
        %3190 = vmatpush1.msra.mxu0 0.0
        %3191 = vmatprep.subr.mxu0 0.0
        %3192 = vmatpush1.msra.mxu0 0.0
        %3193 = vmatprep.subr.mxu0 0.0
        %3194 = vmatpush1.msra.mxu0 0.0
        %3195 = vmatprep.subr.mxu0 0.0
        %3196 = vmatpush1.msra.mxu0 0.0
        %3197 = vmatprep.subr.mxu0 0.0
        %3198 = vmatpush1.msra.mxu0 0.0
        %3199 = vmatprep.subr.mxu0 0.0
        %3200 = vmatpush1.msra.mxu0 0.0
        %3201 = vmatprep.subr.mxu0 0.0
        %3202 = vmatpush1.msra.mxu0 0.0
        %3203 = vmatprep.subr.mxu0 0.0
        %3204 = vmatpush1.msra.mxu0 0.0
        %3205 = vmatprep.subr.mxu0 0.0
        %3206 = vmatpush1.msra.mxu0 0.0
        %3207 = vmatprep.subr.mxu0 0.0
        %3208 = vmatpush1.msra.mxu0 0.0
        %3209 = vmatprep.subr.mxu0 0.0
        %3210 = vmatpush1.msra.mxu0 0.0
        %3211 = vmatprep.mubr.f32.mxu0 0.0
        %3212 = vmatmul.mubr.f32.gmra.mrb[0].mxu0 %v643
        %v3213 = vpop.f32.mrb[0].mxu0
        %v3214 = vadd.f32 0.0, %v3213
        %v3215 = vpop.f32.mrb[0].mxu0
        %v3216 = vadd.f32 0.0, %v3215
        %3217 = vdwg.mxu0
        %v3218 = vpack.c.bf16 %v3214, %v3214
        %v3219 = vpack.c.bf16 %v3216, %v3216
        %v3222 = vunpack.c.l.b16 %v3218
        %v3223 = vunpack.c.l.b16 %v3219
        %v3224 = vpack.c.b16 %v3223, %v3222
        %3226 = vst [vmem:[#allocation2 + $0x30] sm:$0xff] %v3224
        %s3227 = scalar_lea.vmem %s244, 7
        %v3228 = vld [vmem:[%s3227] ss:$8 sm:$0x3]
        %s3229 = scalar_lea.vmem %s244, 32
        %v3230 = vld [vmem:[%s3229] ss:$8 sm:$0x3]
        %v3231 = vfloor.f32 %v3228
        %v3232 = vfloor.f32 %v3230
        %v3233 = vmax.f32 %v3231, 0.0
        %v3234 = vmin.f32 %v3233, 17.0
        %v3235 = vadd.f32 %v3231, 1.0
        %v3236 = vmax.f32 %v3235, 0.0
        %v3237 = vmin.f32 %v3236, 17.0
        %v3238 = vmax.f32 %v3232, 0.0
        %v3239 = vmin.f32 %v3238, 17.0
        %v3240 = vadd.f32 %v3232, 1.0
        %v3241 = vmax.f32 %v3240, 0.0
        %v3242 = vmin.f32 %v3241, 17.0
        %v3243 = vmax.f32 %v3228, 0.0
        %v3244 = vmin.f32 %v3243, 17.0
        %v3245 = vmax.f32 %v3230, 0.0
        %v3246 = vmin.f32 %v3245, 17.0
        %v3247 = vsub.f32 %v3234, %v3244
        %v3248 = vadd.f32 %v3247, 1.0
        %v3249 = vsub.f32 %v3237, %v3244
        %v3250 = vsub.f32 1.0, %v3249
        %v3251 = vsub.f32 %v3239, %v3246
        %v3252 = vadd.f32 %v3251, 1.0
        %v3253 = vsub.f32 %v3242, %v3246
        %v3254 = vsub.f32 1.0, %v3253
        %v3255 = vcvt.f32.s32.to.zero.pseudo %v3234
        %v3256 = vcvt.f32.s32.to.zero.pseudo %v3237
        %v3257 = vcvt.f32.s32.to.zero.pseudo %v3239
        %v3258 = vcvt.f32.s32.to.zero.pseudo %v3242
        %v3259 = vlaneseq
        %v3260 = vshrl.u32 %v3259, 7
        %v3261 = vsub.s32 0, %v3260
        %v3262 = vrot.slane %v3255, %v3261
        %v3263 = vlaneseq
        %v3264 = vshrl.u32 %v3263, 7
        %v3265 = vsub.s32 1, %v3264
        %v3266 = vrot.slane %v3255, %v3265
        %vm3267 = vcmp.eq.s32.totalorder %v259, %v3262
        %vm3268 = vcmp.eq.s32.totalorder %v259, %v3266
        %vm3269 = vcmp.eq.s32.totalorder %v260, %v3262
        %vm3270 = vcmp.eq.s32.totalorder %v260, %v3266
        %vm3271 = vcmp.eq.s32.totalorder %v261, %v3262
        %vm3272 = vcmp.eq.s32.totalorder %v261, %v3266
        %v3274 = vlaneseq
        %v3275 = vshrl.u32 %v3274, 7
        %v3276 = vsub.s32 0, %v3275
        %v3277 = vrot.slane %v3248, %v3276
        %v3278 = vlaneseq
        %v3279 = vshrl.u32 %v3278, 7
        %v3280 = vsub.s32 1, %v3279
        %v3281 = vrot.slane %v3248, %v3280
        %v3284 = vsel %vm3267, %v3277, 0.0
        %v3285 = vsel %vm3268, %v3281, 0.0
        %v3286 = vsel %vm3269, %v3277, 0.0
        %v3287 = vsel %vm3270, %v3281, 0.0
        %v3288 = vsel %vm3271, %v3277, 0.0
        %v3289 = vsel %vm3272, %v3281, 0.0
        %v3290 = vlaneseq
        %v3291 = vshrl.u32 %v3290, 7
        %v3292 = vsub.s32 0, %v3291
        %v3293 = vrot.slane %v3256, %v3292
        %v3294 = vlaneseq
        %v3295 = vshrl.u32 %v3294, 7
        %v3296 = vsub.s32 1, %v3295
        %v3297 = vrot.slane %v3256, %v3296
        %vm3298 = vcmp.eq.s32.totalorder %v259, %v3293
        %vm3299 = vcmp.eq.s32.totalorder %v259, %v3297
        %vm3300 = vcmp.eq.s32.totalorder %v260, %v3293
        %vm3301 = vcmp.eq.s32.totalorder %v260, %v3297
        %vm3302 = vcmp.eq.s32.totalorder %v261, %v3293
        %vm3303 = vcmp.eq.s32.totalorder %v261, %v3297
        %v3305 = vlaneseq
        %v3306 = vshrl.u32 %v3305, 7
        %v3307 = vsub.s32 0, %v3306
        %v3308 = vrot.slane %v3250, %v3307
        %v3309 = vlaneseq
        %v3310 = vshrl.u32 %v3309, 7
        %v3311 = vsub.s32 1, %v3310
        %v3312 = vrot.slane %v3250, %v3311
        %v3315 = vsel %vm3298, %v3308, 0.0
        %v3316 = vsel %vm3299, %v3312, 0.0
        %v3317 = vsel %vm3300, %v3308, 0.0
        %v3318 = vsel %vm3301, %v3312, 0.0
        %v3319 = vsel %vm3302, %v3308, 0.0
        %v3320 = vsel %vm3303, %v3312, 0.0
        %v3321 = vadd.f32 %v3284, %v3315
        %v3322 = vadd.f32 %v3285, %v3316
        %v3323 = vadd.f32 %v3286, %v3317
        %v3324 = vadd.f32 %v3287, %v3318
        %v3325 = vadd.f32 %v3288, %v3319
        %v3326 = vadd.f32 %v3289, %v3320
        %v3327 = vpack.c.bf16 %v3323, %v3321
        %v3328 = vpack.c.bf16 %v3324, %v3322
        %v3329 = vpack.c.bf16 %v3325, %v3325
        %v3330 = vpack.c.bf16 %v3326, %v3326
        %v3332 = vsel %vm404, %v3329, 0
        %v3335 = vsel %vm404, %v3330, 0
        %3337 = vmatprep.subr.bf16.mxu0 %v3328
        %3338 = vmatpush1.bf16.msra.mxu0 %v3327
        %3339 = vmatprep.subr.bf16.mxu0 %v3335
        %3340 = vmatpush1.bf16.msra.mxu0 %v3332
        %3341 = vmatprep.subr.bf16.mxu0 0
        %3342 = vmatpush1.bf16.msra.mxu0 0
        %3343 = vmatprep.subr.bf16.mxu0 0
        %3344 = vmatpush1.bf16.msra.mxu0 0
        %3345 = vmatprep.subr.bf16.mxu0 0
        %3346 = vmatpush1.bf16.msra.mxu0 0
        %3347 = vmatprep.subr.bf16.mxu0 0
        %3348 = vmatpush1.bf16.msra.mxu0 0
        %3349 = vmatprep.subr.bf16.mxu0 0
        %3350 = vmatpush1.bf16.msra.mxu0 0
        %3351 = vmatprep.subr.bf16.mxu0 0
        %3352 = vmatpush1.bf16.msra.mxu0 0
        %3353 = vmatprep.subr.bf16.mxu0 0
        %3354 = vmatpush1.bf16.msra.mxu0 0
        %3355 = vmatprep.subr.bf16.mxu0 0
        %3356 = vmatpush1.bf16.msra.mxu0 0
        %3357 = vmatprep.subr.bf16.mxu0 0
        %3358 = vmatpush1.bf16.msra.mxu0 0
        %3359 = vmatprep.subr.bf16.mxu0 0
        %3360 = vmatpush1.bf16.msra.mxu0 0
        %3361 = vmatprep.subr.bf16.mxu0 0
        %3362 = vmatpush1.bf16.msra.mxu0 0
        %3363 = vmatprep.subr.bf16.mxu0 0
        %3364 = vmatpush1.bf16.msra.mxu0 0
        %3365 = vmatprep.subr.bf16.mxu0 0
        %3366 = vmatpush1.bf16.msra.mxu0 0
        %3367 = vmatprep.subr.bf16.mxu0 0
        %3368 = vmatpush1.bf16.msra.mxu0 0
        %3369 = vmatprep.mubr.bf16.mxu0 0
        %3370 = vmatmul.mubr.bf16.gmra.mrb[0].mxu0 %v390
        %v3371 = vpop.f32.mrb[0].mxu0
        %v3372 = vadd.f32 0.0, %v3371
        %v3373 = vpop.f32.mrb[0].mxu0
        %v3374 = vadd.f32 0.0, %v3373
        %v3375 = vpop.f32.mrb[0].mxu0
        %v3376 = vadd.f32 0.0, %v3375
        %v3377 = vpop.f32.mrb[0].mxu0
        %v3378 = vadd.f32 0.0, %v3377
        %3379 = vmatprep.mubr.bf16.mxu0 0
        %3380 = vmatmul.mubr.bf16.gmra.mrb[0].mxu0 %v393
        %v3381 = vpop.f32.mrb[0].mxu0
        %v3382 = vadd.f32 0.0, %v3381
        %v3383 = vpop.f32.mrb[0].mxu0
        %v3384 = vadd.f32 0.0, %v3383
        %v3385 = vpop.f32.mrb[0].mxu0
        %v3386 = vadd.f32 0.0, %v3385
        %v3387 = vpop.f32.mrb[0].mxu0
        %v3388 = vadd.f32 0.0, %v3387
        %3389 = vmatprep.mubr.bf16.mxu0 0
        %3390 = vmatmul.mubr.bf16.gmra.mrb[0].mxu0 %v396
        %v3391 = vpop.f32.mrb[0].mxu0
        %v3392 = vadd.f32 0.0, %v3391
        %v3393 = vpop.f32.mrb[0].mxu0
        %v3394 = vadd.f32 0.0, %v3393
        %v3395 = vpop.f32.mrb[0].mxu0
        %v3396 = vadd.f32 0.0, %v3395
        %v3397 = vpop.f32.mrb[0].mxu0
        %v3398 = vadd.f32 0.0, %v3397
        %3399 = vmatprep.mubr.bf16.mxu0 0
        %3400 = vmatmul.mubr.bf16.gmra.mrb[0].mxu0 %v399
        %v3401 = vpop.f32.mrb[0].mxu0
        %v3402 = vadd.f32 0.0, %v3401
        %v3403 = vpop.f32.mrb[0].mxu0
        %v3404 = vadd.f32 0.0, %v3403
        %v3405 = vpop.f32.mrb[0].mxu0
        %v3406 = vadd.f32 0.0, %v3405
        %v3407 = vpop.f32.mrb[0].mxu0
        %v3408 = vadd.f32 0.0, %v3407
        %3409 = vmatprep.mubr.bf16.mxu0 0
        %3410 = vmatmul.mubr.bf16.gmra.mrb[0].mxu0 %v402
        %v3411 = vpop.f32.mrb[0].mxu0
        %v3412 = vadd.f32 0.0, %v3411
        %v3413 = vpop.f32.mrb[0].mxu0
        %v3414 = vadd.f32 0.0, %v3413
        %v3415 = vpop.f32.mrb[0].mxu0
        %v3416 = vpop.f32.mrb[0].mxu0
        %3417 = vdwg.mxu0
        %v3418 = vlaneseq
        %v3419 = vshrl.u32 %v3418, 7
        %v3420 = vsub.s32 0, %v3419
        %v3421 = vrot.slane %v3257, %v3420
        %v3422 = vlaneseq
        %v3423 = vshrl.u32 %v3422, 7
        %v3424 = vsub.s32 1, %v3423
        %v3425 = vrot.slane %v3257, %v3424
        %vm3426 = vcmp.eq.s32.totalorder %v259, %v3421
        %vm3427 = vcmp.eq.s32.totalorder %v259, %v3425
        %vm3428 = vcmp.eq.s32.totalorder %v260, %v3421
        %vm3429 = vcmp.eq.s32.totalorder %v260, %v3425
        %vm3430 = vcmp.eq.s32.totalorder %v261, %v3421
        %vm3431 = vcmp.eq.s32.totalorder %v261, %v3425
        %v3433 = vlaneseq
        %v3434 = vshrl.u32 %v3433, 7
        %v3435 = vsub.s32 0, %v3434
        %v3436 = vrot.slane %v3252, %v3435
        %v3437 = vlaneseq
        %v3438 = vshrl.u32 %v3437, 7
        %v3439 = vsub.s32 1, %v3438
        %v3440 = vrot.slane %v3252, %v3439
        %v3443 = vsel %vm3426, %v3436, 0.0
        %v3444 = vsel %vm3427, %v3440, 0.0
        %v3445 = vsel %vm3428, %v3436, 0.0
        %v3446 = vsel %vm3429, %v3440, 0.0
        %v3447 = vsel %vm3430, %v3436, 0.0
        %v3448 = vsel %vm3431, %v3440, 0.0
        %v3449 = vlaneseq
        %v3450 = vshrl.u32 %v3449, 7
        %v3451 = vsub.s32 0, %v3450
        %v3452 = vrot.slane %v3258, %v3451
        %v3453 = vlaneseq
        %v3454 = vshrl.u32 %v3453, 7
        %v3455 = vsub.s32 1, %v3454
        %v3456 = vrot.slane %v3258, %v3455
        %vm3457 = vcmp.eq.s32.totalorder %v259, %v3452
        %vm3458 = vcmp.eq.s32.totalorder %v259, %v3456
        %vm3459 = vcmp.eq.s32.totalorder %v260, %v3452
        %vm3460 = vcmp.eq.s32.totalorder %v260, %v3456
        %vm3461 = vcmp.eq.s32.totalorder %v261, %v3452
        %vm3462 = vcmp.eq.s32.totalorder %v261, %v3456
        %v3464 = vlaneseq
        %v3465 = vshrl.u32 %v3464, 7
        %v3466 = vsub.s32 0, %v3465
        %v3467 = vrot.slane %v3254, %v3466
        %v3468 = vlaneseq
        %v3469 = vshrl.u32 %v3468, 7
        %v3470 = vsub.s32 1, %v3469
        %v3471 = vrot.slane %v3254, %v3470
        %v3474 = vsel %vm3457, %v3467, 0.0
        %v3475 = vsel %vm3458, %v3471, 0.0
        %v3476 = vsel %vm3459, %v3467, 0.0
        %v3477 = vsel %vm3460, %v3471, 0.0
        %v3478 = vsel %vm3461, %v3467, 0.0
        %v3479 = vsel %vm3462, %v3471, 0.0
        %v3480 = vadd.f32 %v3443, %v3474
        %v3481 = vadd.f32 %v3444, %v3475
        %v3482 = vadd.f32 %v3445, %v3476
        %v3483 = vadd.f32 %v3446, %v3477
        %v3484 = vadd.f32 %v3447, %v3478
        %v3485 = vadd.f32 %v3448, %v3479
        %v3492 = vrot.slane %v3480, 6
        %v3493 = vrot.slane %v3481, 6
        %v3494 = vrot.slane %v3482, 6
        %v3495 = vsel %vm566, %v3492, %v3494
        %v3496 = vrot.slane %v3483, 6
        %v3497 = vsel %vm566, %v3493, %v3496
        %v3498 = vrot.slane %v3484, 6
        %v3499 = vsel %vm566, %v3494, %v3498
        %v3500 = vrot.slane %v3485, 6
        %v3501 = vsel %vm566, %v3496, %v3500
        %v3508 = vrot.slane %v3480, 4
        %v3509 = vrot.slane %v3481, 4
        %v3510 = vrot.slane %v3482, 4
        %v3511 = vsel %vm583, %v3508, %v3510
        %v3512 = vrot.slane %v3483, 4
        %v3513 = vsel %vm583, %v3509, %v3512
        %v3514 = vrot.slane %v3484, 4
        %v3515 = vsel %vm583, %v3510, %v3514
        %v3516 = vrot.slane %v3485, 4
        %v3517 = vsel %vm583, %v3512, %v3516
        %v3524 = vrot.slane %v3480, 2
        %v3525 = vrot.slane %v3481, 2
        %v3526 = vrot.slane %v3482, 2
        %v3527 = vsel %vm600, %v3524, %v3526
        %v3528 = vrot.slane %v3483, 2
        %v3529 = vsel %vm600, %v3525, %v3528
        %v3530 = vrot.slane %v3484, 2
        %v3531 = vsel %vm600, %v3526, %v3530
        %v3532 = vrot.slane %v3485, 2
        %v3533 = vsel %vm600, %v3528, %v3532
        %v3540 = vsel %vm566, %v3484, %v3492
        %v3541 = vsel %vm566, %v3485, %v3493
        %v3542 = vsel %vm583, %v3499, %v3508
        %v3543 = vsel %vm583, %v3501, %v3509
        %v3544 = vsel %vm600, %v3515, %v3524
        %v3545 = vsel %vm600, %v3517, %v3525
        %v3546 = vmul.f32 %v3372, %v3480
        %v3547 = vmul.f32 %v3374, %v3481
        %v3548 = vmul.f32 %v3376, %v3482
        %v3549 = vmul.f32 %v3378, %v3483
        %v3550 = vmul.f32 %v3382, %v3540
        %v3551 = vmul.f32 %v3384, %v3541
        %v3552 = vmul.f32 %v3386, %v3495
        %v3553 = vmul.f32 %v3388, %v3497
        %v3554 = vmul.f32 %v3392, %v3542
        %v3555 = vmul.f32 %v3394, %v3543
        %v3556 = vmul.f32 %v3396, %v3511
        %v3557 = vmul.f32 %v3398, %v3513
        %v3558 = vmul.f32 %v3402, %v3544
        %v3559 = vmul.f32 %v3404, %v3545
        %v3560 = vmul.f32 %v3406, %v3527
        %v3561 = vmul.f32 %v3408, %v3529
        %v3562 = vmul.f32 %v3412, %v3531
        %v3563 = vmul.f32 %v3414, %v3533
        %3564 = vmatprep.subr.mxu0 %v3547
        %3565 = vmatpush1.msra.mxu0 %v3546
        %3566 = vmatprep.subr.mxu0 %v3549
        %3567 = vmatpush1.msra.mxu0 %v3548
        %3568 = vmatprep.subr.mxu0 %v3551
        %3569 = vmatpush1.msra.mxu0 %v3550
        %3570 = vmatprep.subr.mxu0 %v3553
        %3571 = vmatpush1.msra.mxu0 %v3552
        %3572 = vmatprep.subr.mxu0 %v3555
        %3573 = vmatpush1.msra.mxu0 %v3554
        %3574 = vmatprep.subr.mxu0 %v3557
        %3575 = vmatpush1.msra.mxu0 %v3556
        %3576 = vmatprep.subr.mxu0 %v3559
        %3577 = vmatpush1.msra.mxu0 %v3558
        %3578 = vmatprep.subr.mxu0 %v3561
        %3579 = vmatpush1.msra.mxu0 %v3560
        %3580 = vmatprep.subr.mxu0 %v3563
        %3581 = vmatpush1.msra.mxu0 %v3562
        %3582 = vmatprep.subr.mxu0 0.0
        %3583 = vmatpush1.msra.mxu0 0.0
        %3584 = vmatprep.subr.mxu0 0.0
        %3585 = vmatpush1.msra.mxu0 0.0
        %3586 = vmatprep.subr.mxu0 0.0
        %3587 = vmatpush1.msra.mxu0 0.0
        %3588 = vmatprep.subr.mxu0 0.0
        %3589 = vmatpush1.msra.mxu0 0.0
        %3590 = vmatprep.subr.mxu0 0.0
        %3591 = vmatpush1.msra.mxu0 0.0
        %3592 = vmatprep.subr.mxu0 0.0
        %3593 = vmatpush1.msra.mxu0 0.0
        %3594 = vmatprep.subr.mxu0 0.0
        %3595 = vmatpush1.msra.mxu0 0.0
        %3596 = vmatprep.subr.mxu0 0.0
        %3597 = vmatpush1.msra.mxu0 0.0
        %3598 = vmatprep.subr.mxu0 0.0
        %3599 = vmatpush1.msra.mxu0 0.0
        %3600 = vmatprep.subr.mxu0 0.0
        %3601 = vmatpush1.msra.mxu0 0.0
        %3602 = vmatprep.subr.mxu0 0.0
        %3603 = vmatpush1.msra.mxu0 0.0
        %3604 = vmatprep.subr.mxu0 0.0
        %3605 = vmatpush1.msra.mxu0 0.0
        %3606 = vmatprep.subr.mxu0 0.0
        %3607 = vmatpush1.msra.mxu0 0.0
        %3608 = vmatprep.subr.mxu0 0.0
        %3609 = vmatpush1.msra.mxu0 0.0
        %3610 = vmatprep.subr.mxu0 0.0
        %3611 = vmatpush1.msra.mxu0 0.0
        %3612 = vmatprep.subr.mxu0 0.0
        %3613 = vmatpush1.msra.mxu0 0.0
        %3614 = vmatprep.subr.mxu0 0.0
        %3615 = vmatpush1.msra.mxu0 0.0
        %3616 = vmatprep.subr.mxu0 0.0
        %3617 = vmatpush1.msra.mxu0 0.0
        %3618 = vmatprep.subr.mxu0 0.0
        %3619 = vmatpush1.msra.mxu0 0.0
        %3620 = vmatprep.subr.mxu0 0.0
        %3621 = vmatpush1.msra.mxu0 0.0
        %3622 = vmatprep.subr.mxu0 0.0
        %3623 = vmatpush1.msra.mxu0 0.0
        %3624 = vmatprep.subr.mxu0 0.0
        %3625 = vmatpush1.msra.mxu0 0.0
        %3626 = vmatprep.subr.mxu0 0.0
        %3627 = vmatpush1.msra.mxu0 0.0
        %3628 = vmatprep.mubr.f32.mxu0 0.0
        %3629 = vmatmul.mubr.f32.gmra.mrb[0].mxu0 %v643
        %v3630 = vpop.f32.mrb[0].mxu0
        %v3631 = vadd.f32 0.0, %v3630
        %v3632 = vpop.f32.mrb[0].mxu0
        %v3633 = vadd.f32 0.0, %v3632
        %3634 = vdwg.mxu0
        %v3635 = vpack.c.bf16 %v3631, %v3631
        %v3636 = vpack.c.bf16 %v3633, %v3633
        %v3639 = vunpack.c.l.b16 %v3635
        %v3640 = vunpack.c.l.b16 %v3636
        %v3641 = vpack.c.b16 %v3640, %v3639
        %3643 = vst [vmem:[#allocation2 + $0x38] sm:$0xff] %v3641
        %s3644 = scalar_lea.vmem %s244, 16
        %v3645 = vld [vmem:[%s3644] ss:$8 sm:$0x3]
        %s3646 = scalar_lea.vmem %s244, 33
        %v3647 = vld [vmem:[%s3646] ss:$8 sm:$0x3]
        %v3648 = vfloor.f32 %v3645
        %v3649 = vfloor.f32 %v3647
        %v3650 = vmax.f32 %v3648, 0.0
        %v3651 = vmin.f32 %v3650, 17.0
        %v3652 = vadd.f32 %v3648, 1.0
        %v3653 = vmax.f32 %v3652, 0.0
        %v3654 = vmin.f32 %v3653, 17.0
        %v3655 = vmax.f32 %v3649, 0.0
        %v3656 = vmin.f32 %v3655, 17.0
        %v3657 = vadd.f32 %v3649, 1.0
        %v3658 = vmax.f32 %v3657, 0.0
        %v3659 = vmin.f32 %v3658, 17.0
        %v3660 = vmax.f32 %v3645, 0.0
        %v3661 = vmin.f32 %v3660, 17.0
        %v3662 = vmax.f32 %v3647, 0.0
        %v3663 = vmin.f32 %v3662, 17.0
        %v3664 = vsub.f32 %v3651, %v3661
        %v3665 = vadd.f32 %v3664, 1.0
        %v3666 = vsub.f32 %v3654, %v3661
        %v3667 = vsub.f32 1.0, %v3666
        %v3668 = vsub.f32 %v3656, %v3663
        %v3669 = vadd.f32 %v3668, 1.0
        %v3670 = vsub.f32 %v3659, %v3663
        %v3671 = vsub.f32 1.0, %v3670
        %v3672 = vcvt.f32.s32.to.zero.pseudo %v3651
        %v3673 = vcvt.f32.s32.to.zero.pseudo %v3654
        %v3674 = vcvt.f32.s32.to.zero.pseudo %v3656
        %v3675 = vcvt.f32.s32.to.zero.pseudo %v3659
        %v3676 = vlaneseq
        %v3677 = vshrl.u32 %v3676, 7
        %v3678 = vsub.s32 0, %v3677
        %v3679 = vrot.slane %v3672, %v3678
        %v3680 = vlaneseq
        %v3681 = vshrl.u32 %v3680, 7
        %v3682 = vsub.s32 1, %v3681
        %v3683 = vrot.slane %v3672, %v3682
        %vm3684 = vcmp.eq.s32.totalorder %v259, %v3679
        %vm3685 = vcmp.eq.s32.totalorder %v259, %v3683
        %vm3686 = vcmp.eq.s32.totalorder %v260, %v3679
        %vm3687 = vcmp.eq.s32.totalorder %v260, %v3683
        %vm3688 = vcmp.eq.s32.totalorder %v261, %v3679
        %vm3689 = vcmp.eq.s32.totalorder %v261, %v3683
        %v3691 = vlaneseq
        %v3692 = vshrl.u32 %v3691, 7
        %v3693 = vsub.s32 0, %v3692
        %v3694 = vrot.slane %v3665, %v3693
        %v3695 = vlaneseq
        %v3696 = vshrl.u32 %v3695, 7
        %v3697 = vsub.s32 1, %v3696
        %v3698 = vrot.slane %v3665, %v3697
        %v3701 = vsel %vm3684, %v3694, 0.0
        %v3702 = vsel %vm3685, %v3698, 0.0
        %v3703 = vsel %vm3686, %v3694, 0.0
        %v3704 = vsel %vm3687, %v3698, 0.0
        %v3705 = vsel %vm3688, %v3694, 0.0
        %v3706 = vsel %vm3689, %v3698, 0.0
        %v3707 = vlaneseq
        %v3708 = vshrl.u32 %v3707, 7
        %v3709 = vsub.s32 0, %v3708
        %v3710 = vrot.slane %v3673, %v3709
        %v3711 = vlaneseq
        %v3712 = vshrl.u32 %v3711, 7
        %v3713 = vsub.s32 1, %v3712
        %v3714 = vrot.slane %v3673, %v3713
        %vm3715 = vcmp.eq.s32.totalorder %v259, %v3710
        %vm3716 = vcmp.eq.s32.totalorder %v259, %v3714
        %vm3717 = vcmp.eq.s32.totalorder %v260, %v3710
        %vm3718 = vcmp.eq.s32.totalorder %v260, %v3714
        %vm3719 = vcmp.eq.s32.totalorder %v261, %v3710
        %vm3720 = vcmp.eq.s32.totalorder %v261, %v3714
        %v3722 = vlaneseq
        %v3723 = vshrl.u32 %v3722, 7
        %v3724 = vsub.s32 0, %v3723
        %v3725 = vrot.slane %v3667, %v3724
        %v3726 = vlaneseq
        %v3727 = vshrl.u32 %v3726, 7
        %v3728 = vsub.s32 1, %v3727
        %v3729 = vrot.slane %v3667, %v3728
        %v3732 = vsel %vm3715, %v3725, 0.0
        %v3733 = vsel %vm3716, %v3729, 0.0
        %v3734 = vsel %vm3717, %v3725, 0.0
        %v3735 = vsel %vm3718, %v3729, 0.0
        %v3736 = vsel %vm3719, %v3725, 0.0
        %v3737 = vsel %vm3720, %v3729, 0.0
        %v3738 = vadd.f32 %v3701, %v3732
        %v3739 = vadd.f32 %v3702, %v3733
        %v3740 = vadd.f32 %v3703, %v3734
        %v3741 = vadd.f32 %v3704, %v3735
        %v3742 = vadd.f32 %v3705, %v3736
        %v3743 = vadd.f32 %v3706, %v3737
        %v3744 = vpack.c.bf16 %v3740, %v3738
        %v3745 = vpack.c.bf16 %v3741, %v3739
        %v3746 = vpack.c.bf16 %v3742, %v3742
        %v3747 = vpack.c.bf16 %v3743, %v3743
        %v3749 = vsel %vm404, %v3746, 0
        %v3752 = vsel %vm404, %v3747, 0
        %3754 = vmatprep.subr.bf16.mxu0 %v3745
        %3755 = vmatpush1.bf16.msra.mxu0 %v3744
        %3756 = vmatprep.subr.bf16.mxu0 %v3752
        %3757 = vmatpush1.bf16.msra.mxu0 %v3749
        %3758 = vmatprep.subr.bf16.mxu0 0
        %3759 = vmatpush1.bf16.msra.mxu0 0
        %3760 = vmatprep.subr.bf16.mxu0 0
        %3761 = vmatpush1.bf16.msra.mxu0 0
        %3762 = vmatprep.subr.bf16.mxu0 0
        %3763 = vmatpush1.bf16.msra.mxu0 0
        %3764 = vmatprep.subr.bf16.mxu0 0
        %3765 = vmatpush1.bf16.msra.mxu0 0
        %3766 = vmatprep.subr.bf16.mxu0 0
        %3767 = vmatpush1.bf16.msra.mxu0 0
        %3768 = vmatprep.subr.bf16.mxu0 0
        %3769 = vmatpush1.bf16.msra.mxu0 0
        %3770 = vmatprep.subr.bf16.mxu0 0
        %3771 = vmatpush1.bf16.msra.mxu0 0
        %3772 = vmatprep.subr.bf16.mxu0 0
        %3773 = vmatpush1.bf16.msra.mxu0 0
        %3774 = vmatprep.subr.bf16.mxu0 0
        %3775 = vmatpush1.bf16.msra.mxu0 0
        %3776 = vmatprep.subr.bf16.mxu0 0
        %3777 = vmatpush1.bf16.msra.mxu0 0
        %3778 = vmatprep.subr.bf16.mxu0 0
        %3779 = vmatpush1.bf16.msra.mxu0 0
        %3780 = vmatprep.subr.bf16.mxu0 0
        %3781 = vmatpush1.bf16.msra.mxu0 0
        %3782 = vmatprep.subr.bf16.mxu0 0
        %3783 = vmatpush1.bf16.msra.mxu0 0
        %3784 = vmatprep.subr.bf16.mxu0 0
        %3785 = vmatpush1.bf16.msra.mxu0 0
        %3786 = vmatprep.mubr.bf16.mxu0 0
        %3787 = vmatmul.mubr.bf16.gmra.mrb[0].mxu0 %v390
        %v3788 = vpop.f32.mrb[0].mxu0
        %v3789 = vadd.f32 0.0, %v3788
        %v3790 = vpop.f32.mrb[0].mxu0
        %v3791 = vadd.f32 0.0, %v3790
        %v3792 = vpop.f32.mrb[0].mxu0
        %v3793 = vadd.f32 0.0, %v3792
        %v3794 = vpop.f32.mrb[0].mxu0
        %v3795 = vadd.f32 0.0, %v3794
        %3796 = vmatprep.mubr.bf16.mxu0 0
        %3797 = vmatmul.mubr.bf16.gmra.mrb[0].mxu0 %v393
        %v3798 = vpop.f32.mrb[0].mxu0
        %v3799 = vadd.f32 0.0, %v3798
        %v3800 = vpop.f32.mrb[0].mxu0
        %v3801 = vadd.f32 0.0, %v3800
        %v3802 = vpop.f32.mrb[0].mxu0
        %v3803 = vadd.f32 0.0, %v3802
        %v3804 = vpop.f32.mrb[0].mxu0
        %v3805 = vadd.f32 0.0, %v3804
        %3806 = vmatprep.mubr.bf16.mxu0 0
        %3807 = vmatmul.mubr.bf16.gmra.mrb[0].mxu0 %v396
        %v3808 = vpop.f32.mrb[0].mxu0
        %v3809 = vadd.f32 0.0, %v3808
        %v3810 = vpop.f32.mrb[0].mxu0
        %v3811 = vadd.f32 0.0, %v3810
        %v3812 = vpop.f32.mrb[0].mxu0
        %v3813 = vadd.f32 0.0, %v3812
        %v3814 = vpop.f32.mrb[0].mxu0
        %v3815 = vadd.f32 0.0, %v3814
        %3816 = vmatprep.mubr.bf16.mxu0 0
        %3817 = vmatmul.mubr.bf16.gmra.mrb[0].mxu0 %v399
        %v3818 = vpop.f32.mrb[0].mxu0
        %v3819 = vadd.f32 0.0, %v3818
        %v3820 = vpop.f32.mrb[0].mxu0
        %v3821 = vadd.f32 0.0, %v3820
        %v3822 = vpop.f32.mrb[0].mxu0
        %v3823 = vadd.f32 0.0, %v3822
        %v3824 = vpop.f32.mrb[0].mxu0
        %v3825 = vadd.f32 0.0, %v3824
        %3826 = vmatprep.mubr.bf16.mxu0 0
        %3827 = vmatmul.mubr.bf16.gmra.mrb[0].mxu0 %v402
        %v3828 = vpop.f32.mrb[0].mxu0
        %v3829 = vadd.f32 0.0, %v3828
        %v3830 = vpop.f32.mrb[0].mxu0
        %v3831 = vadd.f32 0.0, %v3830
        %v3832 = vpop.f32.mrb[0].mxu0
        %v3833 = vpop.f32.mrb[0].mxu0
        %3834 = vdwg.mxu0
        %v3835 = vlaneseq
        %v3836 = vshrl.u32 %v3835, 7
        %v3837 = vsub.s32 0, %v3836
        %v3838 = vrot.slane %v3674, %v3837
        %v3839 = vlaneseq
        %v3840 = vshrl.u32 %v3839, 7
        %v3841 = vsub.s32 1, %v3840
        %v3842 = vrot.slane %v3674, %v3841
        %vm3843 = vcmp.eq.s32.totalorder %v259, %v3838
        %vm3844 = vcmp.eq.s32.totalorder %v259, %v3842
        %vm3845 = vcmp.eq.s32.totalorder %v260, %v3838
        %vm3846 = vcmp.eq.s32.totalorder %v260, %v3842
        %vm3847 = vcmp.eq.s32.totalorder %v261, %v3838
        %vm3848 = vcmp.eq.s32.totalorder %v261, %v3842
        %v3850 = vlaneseq
        %v3851 = vshrl.u32 %v3850, 7
        %v3852 = vsub.s32 0, %v3851
        %v3853 = vrot.slane %v3669, %v3852
        %v3854 = vlaneseq
        %v3855 = vshrl.u32 %v3854, 7
        %v3856 = vsub.s32 1, %v3855
        %v3857 = vrot.slane %v3669, %v3856
        %v3860 = vsel %vm3843, %v3853, 0.0
        %v3861 = vsel %vm3844, %v3857, 0.0
        %v3862 = vsel %vm3845, %v3853, 0.0
        %v3863 = vsel %vm3846, %v3857, 0.0
        %v3864 = vsel %vm3847, %v3853, 0.0
        %v3865 = vsel %vm3848, %v3857, 0.0
        %v3866 = vlaneseq
        %v3867 = vshrl.u32 %v3866, 7
        %v3868 = vsub.s32 0, %v3867
        %v3869 = vrot.slane %v3675, %v3868
        %v3870 = vlaneseq
        %v3871 = vshrl.u32 %v3870, 7
        %v3872 = vsub.s32 1, %v3871
        %v3873 = vrot.slane %v3675, %v3872
        %vm3874 = vcmp.eq.s32.totalorder %v259, %v3869
        %vm3875 = vcmp.eq.s32.totalorder %v259, %v3873
        %vm3876 = vcmp.eq.s32.totalorder %v260, %v3869
        %vm3877 = vcmp.eq.s32.totalorder %v260, %v3873
        %vm3878 = vcmp.eq.s32.totalorder %v261, %v3869
        %vm3879 = vcmp.eq.s32.totalorder %v261, %v3873
        %v3881 = vlaneseq
        %v3882 = vshrl.u32 %v3881, 7
        %v3883 = vsub.s32 0, %v3882
        %v3884 = vrot.slane %v3671, %v3883
        %v3885 = vlaneseq
        %v3886 = vshrl.u32 %v3885, 7
        %v3887 = vsub.s32 1, %v3886
        %v3888 = vrot.slane %v3671, %v3887
        %v3891 = vsel %vm3874, %v3884, 0.0
        %v3892 = vsel %vm3875, %v3888, 0.0
        %v3893 = vsel %vm3876, %v3884, 0.0
        %v3894 = vsel %vm3877, %v3888, 0.0
        %v3895 = vsel %vm3878, %v3884, 0.0
        %v3896 = vsel %vm3879, %v3888, 0.0
        %v3897 = vadd.f32 %v3860, %v3891
        %v3898 = vadd.f32 %v3861, %v3892
        %v3899 = vadd.f32 %v3862, %v3893
        %v3900 = vadd.f32 %v3863, %v3894
        %v3901 = vadd.f32 %v3864, %v3895
        %v3902 = vadd.f32 %v3865, %v3896
        %v3909 = vrot.slane %v3897, 6
        %v3910 = vrot.slane %v3898, 6
        %v3911 = vrot.slane %v3899, 6
        %v3912 = vsel %vm566, %v3909, %v3911
        %v3913 = vrot.slane %v3900, 6
        %v3914 = vsel %vm566, %v3910, %v3913
        %v3915 = vrot.slane %v3901, 6
        %v3916 = vsel %vm566, %v3911, %v3915
        %v3917 = vrot.slane %v3902, 6
        %v3918 = vsel %vm566, %v3913, %v3917
        %v3925 = vrot.slane %v3897, 4
        %v3926 = vrot.slane %v3898, 4
        %v3927 = vrot.slane %v3899, 4
        %v3928 = vsel %vm583, %v3925, %v3927
        %v3929 = vrot.slane %v3900, 4
        %v3930 = vsel %vm583, %v3926, %v3929
        %v3931 = vrot.slane %v3901, 4
        %v3932 = vsel %vm583, %v3927, %v3931
        %v3933 = vrot.slane %v3902, 4
        %v3934 = vsel %vm583, %v3929, %v3933
        %v3941 = vrot.slane %v3897, 2
        %v3942 = vrot.slane %v3898, 2
        %v3943 = vrot.slane %v3899, 2
        %v3944 = vsel %vm600, %v3941, %v3943
        %v3945 = vrot.slane %v3900, 2
        %v3946 = vsel %vm600, %v3942, %v3945
        %v3947 = vrot.slane %v3901, 2
        %v3948 = vsel %vm600, %v3943, %v3947
        %v3949 = vrot.slane %v3902, 2
        %v3950 = vsel %vm600, %v3945, %v3949
        %v3957 = vsel %vm566, %v3901, %v3909
        %v3958 = vsel %vm566, %v3902, %v3910
        %v3959 = vsel %vm583, %v3916, %v3925
        %v3960 = vsel %vm583, %v3918, %v3926
        %v3961 = vsel %vm600, %v3932, %v3941
        %v3962 = vsel %vm600, %v3934, %v3942
        %v3963 = vmul.f32 %v3789, %v3897
        %v3964 = vmul.f32 %v3791, %v3898
        %v3965 = vmul.f32 %v3793, %v3899
        %v3966 = vmul.f32 %v3795, %v3900
        %v3967 = vmul.f32 %v3799, %v3957
        %v3968 = vmul.f32 %v3801, %v3958
        %v3969 = vmul.f32 %v3803, %v3912
        %v3970 = vmul.f32 %v3805, %v3914
        %v3971 = vmul.f32 %v3809, %v3959
        %v3972 = vmul.f32 %v3811, %v3960
        %v3973 = vmul.f32 %v3813, %v3928
        %v3974 = vmul.f32 %v3815, %v3930
        %v3975 = vmul.f32 %v3819, %v3961
        %v3976 = vmul.f32 %v3821, %v3962
        %v3977 = vmul.f32 %v3823, %v3944
        %v3978 = vmul.f32 %v3825, %v3946
        %v3979 = vmul.f32 %v3829, %v3948
        %v3980 = vmul.f32 %v3831, %v3950
        %3981 = vmatprep.subr.mxu0 %v3964
        %3982 = vmatpush1.msra.mxu0 %v3963
        %3983 = vmatprep.subr.mxu0 %v3966
        %3984 = vmatpush1.msra.mxu0 %v3965
        %3985 = vmatprep.subr.mxu0 %v3968
        %3986 = vmatpush1.msra.mxu0 %v3967
        %3987 = vmatprep.subr.mxu0 %v3970
        %3988 = vmatpush1.msra.mxu0 %v3969
        %3989 = vmatprep.subr.mxu0 %v3972
        %3990 = vmatpush1.msra.mxu0 %v3971
        %3991 = vmatprep.subr.mxu0 %v3974
        %3992 = vmatpush1.msra.mxu0 %v3973
        %3993 = vmatprep.subr.mxu0 %v3976
        %3994 = vmatpush1.msra.mxu0 %v3975
        %3995 = vmatprep.subr.mxu0 %v3978
        %3996 = vmatpush1.msra.mxu0 %v3977
        %3997 = vmatprep.subr.mxu0 %v3980
        %3998 = vmatpush1.msra.mxu0 %v3979
        %3999 = vmatprep.subr.mxu0 0.0
        %4000 = vmatpush1.msra.mxu0 0.0
        %4001 = vmatprep.subr.mxu0 0.0
        %4002 = vmatpush1.msra.mxu0 0.0
        %4003 = vmatprep.subr.mxu0 0.0
        %4004 = vmatpush1.msra.mxu0 0.0
        %4005 = vmatprep.subr.mxu0 0.0
        %4006 = vmatpush1.msra.mxu0 0.0
        %4007 = vmatprep.subr.mxu0 0.0
        %4008 = vmatpush1.msra.mxu0 0.0
        %4009 = vmatprep.subr.mxu0 0.0
        %4010 = vmatpush1.msra.mxu0 0.0
        %4011 = vmatprep.subr.mxu0 0.0
        %4012 = vmatpush1.msra.mxu0 0.0
        %4013 = vmatprep.subr.mxu0 0.0
        %4014 = vmatpush1.msra.mxu0 0.0
        %4015 = vmatprep.subr.mxu0 0.0
        %4016 = vmatpush1.msra.mxu0 0.0
        %4017 = vmatprep.subr.mxu0 0.0
        %4018 = vmatpush1.msra.mxu0 0.0
        %4019 = vmatprep.subr.mxu0 0.0
        %4020 = vmatpush1.msra.mxu0 0.0
        %4021 = vmatprep.subr.mxu0 0.0
        %4022 = vmatpush1.msra.mxu0 0.0
        %4023 = vmatprep.subr.mxu0 0.0
        %4024 = vmatpush1.msra.mxu0 0.0
        %4025 = vmatprep.subr.mxu0 0.0
        %4026 = vmatpush1.msra.mxu0 0.0
        %4027 = vmatprep.subr.mxu0 0.0
        %4028 = vmatpush1.msra.mxu0 0.0
        %4029 = vmatprep.subr.mxu0 0.0
        %4030 = vmatpush1.msra.mxu0 0.0
        %4031 = vmatprep.subr.mxu0 0.0
        %4032 = vmatpush1.msra.mxu0 0.0
        %4033 = vmatprep.subr.mxu0 0.0
        %4034 = vmatpush1.msra.mxu0 0.0
        %4035 = vmatprep.subr.mxu0 0.0
        %4036 = vmatpush1.msra.mxu0 0.0
        %4037 = vmatprep.subr.mxu0 0.0
        %4038 = vmatpush1.msra.mxu0 0.0
        %4039 = vmatprep.subr.mxu0 0.0
        %4040 = vmatpush1.msra.mxu0 0.0
        %4041 = vmatprep.subr.mxu0 0.0
        %4042 = vmatpush1.msra.mxu0 0.0
        %4043 = vmatprep.subr.mxu0 0.0
        %4044 = vmatpush1.msra.mxu0 0.0
        %4045 = vmatprep.mubr.f32.mxu0 0.0
        %4046 = vmatmul.mubr.f32.gmra.mrb[0].mxu0 %v643
        %v4047 = vpop.f32.mrb[0].mxu0
        %v4048 = vadd.f32 0.0, %v4047
        %v4049 = vpop.f32.mrb[0].mxu0
        %v4050 = vadd.f32 0.0, %v4049
        %4051 = vdwg.mxu0
        %v4052 = vpack.c.bf16 %v4048, %v4048
        %v4053 = vpack.c.bf16 %v4050, %v4050
        %v4056 = vunpack.c.l.b16 %v4052
        %v4057 = vunpack.c.l.b16 %v4053
        %v4058 = vpack.c.b16 %v4057, %v4056
        %4060 = vst [vmem:[#allocation2 + $0x40] sm:$0xff] %v4058
        %v4061 = vld [vmem:[%s2] sm:$0xf]
        %v4062 = vld [vmem:[#allocation2] sm:$0xff]
        %v4063 = vld [vmem:[#allocation2 + $0x8] sm:$0xff]
        %v4064 = vld [vmem:[#allocation2 + $0x10] sm:$0xff]
        %v4065 = vld [vmem:[#allocation2 + $0x18] sm:$0xff]
        %v4066 = vld [vmem:[#allocation2 + $0x20] sm:$0xff]
        %v4067 = vld [vmem:[#allocation2 + $0x28] sm:$0xff]
        %v4068 = vld [vmem:[#allocation2 + $0x30] sm:$0xff]
        %v4069 = vld [vmem:[#allocation2 + $0x38] sm:$0xff]
        %v4070 = vld [vmem:[#allocation2 + $0x40] sm:$0xff]
        %v4080 = vunpack.c.l.b16 %v4062
        %v4081 = vunpack.c.h.b16 %v4062
        %v4082 = vunpack.c.l.b16 %v4063
        %v4083 = vunpack.c.h.b16 %v4063
        %v4084 = vunpack.c.l.b16 %v4064
        %v4085 = vunpack.c.h.b16 %v4064
        %v4086 = vunpack.c.l.b16 %v4065
        %v4087 = vunpack.c.h.b16 %v4065
        %v4088 = vunpack.c.l.b16 %v4066
        %v4089 = vunpack.c.h.b16 %v4066
        %v4090 = vunpack.c.l.b16 %v4067
        %v4091 = vunpack.c.h.b16 %v4067
        %v4092 = vunpack.c.l.b16 %v4068
        %v4093 = vunpack.c.h.b16 %v4068
        %v4094 = vunpack.c.l.b16 %v4069
        %v4095 = vunpack.c.h.b16 %v4069
        %v4096 = vunpack.c.l.b16 %v4070
        %v4097 = vunpack.c.h.b16 %v4070
        %v4098 = vpack.c.b16 %v4082, %v4080
        %v4099 = vpack.c.b16 %v4083, %v4081
        %v4100 = vpack.c.b16 %v4086, %v4084
        %v4101 = vpack.c.b16 %v4087, %v4085
        %v4102 = vpack.c.b16 %v4090, %v4088
        %v4103 = vpack.c.b16 %v4091, %v4089
        %v4104 = vpack.c.b16 %v4094, %v4092
        %v4105 = vpack.c.b16 %v4095, %v4093
        %v4106 = vpack.c.b16 %v4096, %v4096
        %v4107 = vpack.c.b16 %v4097, %v4097
        %v4117 = vsel %vm641, %v4061, 0
        %v4120 = vsel %vm583, %v4106, 0
        %v4123 = vsel %vm583, %v4107, 0
        %4125 = vmatprep.subr.bf16.mxu0 %v4099
        %4126 = vmatpush1.bf16.msra.mxu0 %v4098
        %4127 = vmatprep.subr.bf16.mxu0 %v4101
        %4128 = vmatpush1.bf16.msra.mxu0 %v4100
        %4129 = vmatprep.subr.bf16.mxu0 %v4103
        %4130 = vmatpush1.bf16.msra.mxu0 %v4102
        %4131 = vmatprep.subr.bf16.mxu0 %v4105
        %4132 = vmatpush1.bf16.msra.mxu0 %v4104
        %4133 = vmatprep.subr.bf16.mxu0 %v4123
        %4134 = vmatpush1.bf16.msra.mxu0 %v4120
        %4135 = vmatprep.subr.bf16.mxu0 0
        %4136 = vmatpush1.bf16.msra.mxu0 0
        %4137 = vmatprep.subr.bf16.mxu0 0
        %4138 = vmatpush1.bf16.msra.mxu0 0
        %4139 = vmatprep.subr.bf16.mxu0 0
        %4140 = vmatpush1.bf16.msra.mxu0 0
        %4141 = vmatprep.subr.bf16.mxu0 0
        %4142 = vmatpush1.bf16.msra.mxu0 0
        %4143 = vmatprep.subr.bf16.mxu0 0
        %4144 = vmatpush1.bf16.msra.mxu0 0
        %4145 = vmatprep.subr.bf16.mxu0 0
        %4146 = vmatpush1.bf16.msra.mxu0 0
        %4147 = vmatprep.subr.bf16.mxu0 0
        %4148 = vmatpush1.bf16.msra.mxu0 0
        %4149 = vmatprep.subr.bf16.mxu0 0
        %4150 = vmatpush1.bf16.msra.mxu0 0
        %4151 = vmatprep.subr.bf16.mxu0 0
        %4152 = vmatpush1.bf16.msra.mxu0 0
        %4153 = vmatprep.subr.bf16.mxu0 0
        %4154 = vmatpush1.bf16.msra.mxu0 0
        %4155 = vmatprep.subr.bf16.mxu0 0
        %4156 = vmatpush1.bf16.msra.mxu0 0
        %4157 = vmatprep.mubr.bf16.mxu0 0
        %4158 = vmatmul.mubr.bf16.gmra.mrb[0].mxu0 %v4117
        %v4159 = vpop.f32.mrb[0].mxu0
        %v4160 = vadd.f32 0.0, %v4159
        %v4161 = vpop.f32.mrb[0].mxu0
        %v4162 = vadd.f32 0.0, %v4161
        %v4163 = vpop.f32.mrb[0].mxu0
        %v4164 = vpop.f32.mrb[0].mxu0
        %4165 = vdwg.mxu0
        %4166 = vst [vmem:[%s230] sm:$0xff] %v4160
        %4167 = vst [vmem:[%s230 + $0x8] sm:$0xff] %v4162
        %s4168 = sand.u32 %s136, 1
        %s4169 = scalar_lea.sflag [#allocation4], %s4168
        %s4170 = sand.u32 %s136, 1
        %s4171 = smul.addr %s4170, 16
        %s4172 = scalar_lea.vmem [#allocation3], %s4171
        // Predicated region
        $region37: #{tpu_custom_call.1} parent=35 // pred_check
          %p4173 = pneg %p146
        $region38: #{tpu_custom_call.1} parent=35 // pred_check_branch
          %4175 = sbr.rel (%p4173) target = $region40
        $region39: #{tpu_custom_call.1} parent=35 // pred_region
          %s4176 = smul.u32 2, %s23
          %s4178 = ssub.s32 256, 256
          %4179 = vsyncadd %s4169, %s4178
          %s4180 = smul.addr %s22, 2
          %s4181 = sadd.s32 %s4176, %s4180
          %s4182 = smul.addr %s4181, 128
          %s4183 = scalar_lea.hbm %s4, %s4182
          %s4185 = sshll.u32 %s4172, 4
          %s4186 = int_to_ptr.vmem [resolvable:$true] %s4185
          %4188 = dma.vmem_to_hbm [thread:$0]  %s4186, 256, %s4183, %s4169
        $region40: #{tpu_custom_call.1} parent=35 // pred_fallthru
          _
      $region36: #{tpu_custom_call.1} parent=5 // pred_fallthru
        _
      %p4189 = scmp.le.s32.totalorder 2, %s13
      // Predicated region
      $region41: #{tpu_custom_call.1} parent=5 // pred_check
        %p4190 = pneg %p4189
      $region42: #{tpu_custom_call.1} parent=5 // pred_check_branch
        %4192 = sbr.rel (%p4190) target = $region44
      $region43: #{tpu_custom_call.1} parent=5 // pred_region
        %s4193 = ssub.s32 %s13, 2
        // Predicated region
        $region45: #{tpu_custom_call.1} parent=43 // pred_check
          %p4194 = pneg %p152
        $region46: #{tpu_custom_call.1} parent=43 // pred_check_branch
          %4196 = sbr.rel (%p4194) target = $region48
        $region47: #{tpu_custom_call.1} parent=43 // pred_region
          %s4197 = sand.u32 %s137, 1
          %s4198 = scalar_lea.sflag [#allocation4], %s4197
          %s4199 = sand.u32 %s137, 1
          %s4200 = smul.addr %s4199, 16
          %s4201 = scalar_lea.vmem [#allocation3], %s4200
          %4202 = dma.done %s4198, 256
        $region48: #{tpu_custom_call.1} parent=43 // pred_fallthru
          _
      $region44: #{tpu_custom_call.1} parent=5 // pred_fallthru
        _
    $region6: #{tpu_custom_call.1} parent=1 // loop_footer
      %s17 = sadd.s32 1, %s13
    $region7: #{tpu_custom_call.1} parent=1 // loop_footer_branch
      %12 = sbr.rel target = $region3
    $region8: #{tpu_custom_call.1} parent=1 // loop_exit
      _
    %4203 = vsyncpa [#allocation4], 1
    %s4204 = scalar_lea.sflag [#allocation4], 1
    %4205 = vsyncpa %s4204, 1

</llo_original>
